<compile_context>
chip_gen: v7x
topology: tpu7x:2x2x1
jax: 0.10.0
libtpu: 0.0.40
codegen_flags: <defaults>
</compile_context>

<pallas_src>
import functools
import math

import jax
import jax.numpy as jnp
from jax import lax
from jax.experimental import pallas as pl
from jax.experimental.pallas import tpu as pltpu

N_HEAD = 4                         # input channels (n_head)
C1, C2 = 4, 8                      # channels = [4, 8] (module default)
H = W = 36                         # minimal spatial size surviving two AvgPool2d(8, 4)
P1 = (H - 8) // 4 + 1              # = 8, spatial size after the first pool
KH = 3                             # 3x3 convs, padding 1
LANES = 128
FLAT = N_HEAD * H * W              # 5184
FLAT_PAD = ((FLAT + LANES - 1) // LANES) * LANES   # 5248 (lane-aligned)
POOLED = C1 * P1 * P1              # 256


# ----------------------------- in-kernel math helpers -----------------------------

def _erf(z):
    # Abramowitz & Stegun 7.1.26 rational approximation (|err| <= 1.5e-7).
    a1, a2, a3, a4, a5 = (0.254829592, -0.284496736, 1.421413741,
                          -1.453152027, 1.061405429)
    p = 0.3275911
    s = jnp.where(z >= 0.0, 1.0, -1.0)
    az = jnp.abs(z)
    # Divide moved to the (otherwise idle) EUP slot.
    t = pl.reciprocal(1.0 + p * az, approx=True)
    poly = t * (a1 + t * (a2 + t * (a3 + t * (a4 + t * a5))))
    return s * (1.0 - poly * jnp.exp(-az * az))


def _gelu_exact(x):
    # matches nn.GELU() default (erf-based)
    return 0.5 * x * (1.0 + _erf(x * 0.7071067811865476))


# ----------------------------------- the kernel -----------------------------------

def _kernel(x_ref, m1_ref, b1_ref, w2_ref, beff_ref, out_ref, *, apply_gelu):
    x = x_ref[...]                                   # (BB, FLAT_PAD), lane-dense
    if apply_gelu:                                   # reference: `if not has_act: gelu`
        x = _gelu_exact(x)
    # Dropout(p=0.1): identity at inference.

    # Conv2d(n_head->C1, 3x3, pad 1) + bias + AvgPool2d(8, 4), all samples at once,
    # as a single MXU matmul with the folded (FLAT_PAD x 256) operator.
    pooled1 = jnp.dot(x, m1_ref[...], preferred_element_type=jnp.float32) + b1_ref[...]

    # Conv2d(C1->C2, 3x3, pad 1) + bias + AvgPool2d(8,4) (-> 1x1) + AdaptiveAvgPool2d(1)
    # + Linear(C2->1), folded into a single 256-dot, broadcast over 128 lanes so the
    # output block is a dense (BB, 128) store.
    logit = jnp.dot(pooled1, w2_ref[...], preferred_element_type=jnp.float32) + beff_ref[...]

    out_ref[...] = 1.0 / (1.0 + jnp.exp(-logit))     # sigmoid


# ----------------------------- parameter folding (host) ----------------------------

def _fold_params(params):
    """Fold all linear stages into small dense operands. Parameter-only work: this
    depends on the weights, never on x (no per-sample compute is hoisted here)."""
    w1, b1, w2, b2, wt, bt = [jnp.asarray(p, jnp.float32) for p in params]

    # AvgPool2d(kernel=8, stride=4) as a matrix: P[i, y] = 1/8 for 4i <= y < 4i+8.
    rows = jnp.arange(P1)[:, None]
    cols = jnp.arange(H)[None, :]
    P = (((cols >= 4 * rows) & (cols < 4 * rows + 8)).astype(jnp.float32) / 8.0)  # (P1,H)

    def shifted(pool_mat, size):
        # shifted(pool)[d, i, h] = pool[i, h - d + 1], zeroed where the 3x3 tap at
        # offset d would read the zero padding: pooling fused with the conv shift.
        idx = jnp.arange(size)
        outs = []
        for d in range(KH):
            src = idx - d + 1
            valid = ((src >= 0) & (src < size)).astype(jnp.float32)
            outs.append(pool_mat[:, jnp.clip(src, 0, size - 1)] * valid[None, :])
        return jnp.stack(outs)                       # (3, n_out, size)

    # Stage 1: x[c,h,w] -> pooled1[o,i,j]  (conv1 + bias + pool1).
    A = shifted(P, H)                                # (3, P1, H)
    m1 = jnp.einsum('ocuv,uih,vjw->chwoij', w1, A, A).reshape(FLAT, POOLED)
    b1_vec = jnp.broadcast_to(b1[:, None, None], (C1, P1, P1)).reshape(1, POOLED)

    # Stage 2: pooled1[c,h,w] -> logit  (conv2 + bias + pool2(->1x1) + mean + Linear).
    Q = shifted(jnp.full((1, P1), 1.0 / P1, jnp.float32), P1)[:, 0, :]   # (3, P1)
    w2_eff = jnp.einsum('o,ocuv,uh,vw->chw', wt[0], w2, Q, Q).reshape(POOLED)
    b_eff = bt[0] + jnp.dot(wt[0], b2)

    # Lane-align the flattened-sample axis (zero rows contribute nothing).
    m1 = jnp.pad(m1, ((0, FLAT_PAD - FLAT), (0, 0)))                      # (5248, 256)
    # Broadcast the 256->1 head over 128 lanes -> lane-dense (BB, 128) output matmul.
    w2_cols = jnp.tile(w2_eff[:, None], (1, LANES))                       # (256, 128)
    beff_row = jnp.reshape(b_eff, (1, 1)) * jnp.ones((1, LANES), jnp.float32)
    return m1, b1_vec, w2_cols, beff_row


# ------------------------------------- wrapper -------------------------------------

def conv_global_similarity(x, params, has_act=False):
    B = x.shape[0]
    assert x.shape[1:] == (N_HEAD, H, W), x.shape
    m1, b1_vec, w2_cols, beff_row = _fold_params(params)

    # Flatten each sample to one lane-dense row (layout plumbing only).
    x2d = jnp.asarray(x, jnp.float32).reshape(B, FLAT)
    x2d = jnp.pad(x2d, ((0, 0), (0, FLAT_PAD - FLAT)))

    # Block-batch: up to 128 samples per grid step (~2.7 MB/block; comfortably inside
    # VMEM even double-buffered on v5e/v6e/v7x).  Round the block up to a multiple of
    # 8 so the batch (sublane) axis is always aligned.
    BB = 128 if B >= 128 else max(8, -(-B // 8) * 8)
    Bp = pl.cdiv(B, BB) * BB
    if Bp != B:
        x2d = jnp.pad(x2d, ((0, Bp - B), (0, 0)))

    kernel = functools.partial(_kernel, apply_gelu=not has_act)
    out = pl.pallas_call(
        kernel,
        out_shape=jax.ShapeDtypeStruct((Bp, LANES), jnp.float32),
        grid=(Bp // BB,),
        in_specs=[
            pl.BlockSpec((BB, FLAT_PAD), lambda b: (b, 0)),       # x block
            pl.BlockSpec((FLAT_PAD, POOLED), lambda b: (0, 0)),   # folded conv1+pool1
            pl.BlockSpec((1, POOLED), lambda b: (0, 0)),          # conv1 bias
            pl.BlockSpec((POOLED, LANES), lambda b: (0, 0)),      # folded conv2..linear
            pl.BlockSpec((1, LANES), lambda b: (0, 0)),           # folded bias
        ],
        out_specs=pl.BlockSpec((BB, LANES), lambda b: (b, 0)),
        compiler_params=pltpu.CompilerParams(
            dimension_semantics=("parallel",),                    # megacore on v7x
            vmem_limit_bytes=40 << 20),                           # headroom incl. v5e
    )(x2d, m1, b1_vec, w2_cols, beff_row)
    return out[:B, :1]                                            # (B, 1)


# ------------------------------------ reference ------------------------------------

def _reference(x, params, has_act=False):
    """Pure-JAX reference matching the PyTorch forward (inference mode)."""
    w1, b1, w2, b2, wt, bt = params
    if not has_act:
        x = jax.nn.gelu(x, approximate=False)
    dn = ('NCHW', 'OIHW', 'NCHW')
    y = lax.conv_general_dilated(x, w1, (1, 1), ((1, 1), (1, 1)), dimension_numbers=dn)
    y = y + b1[None, :, None, None]
    y = lax.reduce_window(y, 0.0, lax.add, (1, 1, 8, 8), (1, 1, 4, 4), 'VALID') / 64.0
    y = lax.conv_general_dilated(y, w2, (1, 1), ((1, 1), (1, 1)), dimension_numbers=dn)
    y = y + b2[None, :, None, None]
    y = lax.reduce_window(y, 0.0, lax.add, (1, 1, 8, 8), (1, 1, 4, 4), 'VALID') / 64.0
    feat = y[:, :, 0, 0]              # AdaptiveAvgPool2d(1) on a 1x1 map is identity
    out = feat @ wt.T + bt
    return jax.nn.sigmoid(out)


if __name__ == "__main__":
    key = jax.random.PRNGKey(0)
    kx, k1, k2, k3, k4, k5, k6 = jax.random.split(key, 7)
    B = 2
    x = jax.random.normal(kx, (B, N_HEAD, H, W), dtype=jnp.float32)

    def _uniform(k, shape, fan_in):
        bound = 1.0 / math.sqrt(fan_in)
        return jax.random.uniform(k, shape, jnp.float32, -bound, bound)

    # Deterministic synthetic parameters (PyTorch-default-style uniform init).
    w1 = _uniform(k1, (C1, N_HEAD, 3, 3), N_HEAD * 9)
    b1 = _uniform(k2, (C1,), N_HEAD * 9)
    w2 = _uniform(k3, (C2, C1, 3, 3), C1 * 9)
    b2 = _uniform(k4, (C2,), C1 * 9)
    wt = _uniform(k5, (1, C2), C2)            # nn.Linear(8, 1) weight
    bt = _uniform(k6, (1,), C2)               # nn.Linear(8, 1) bias
    params = (w1, b1, w2, b2, wt, bt)

    out = jax.block_until_ready(conv_global_similarity(x, params, has_act=False))
    ref = _reference(x, params, has_act=False)
    assert out.shape == (B, 1)
    assert jnp.allclose(out, ref, rtol=2e-3, atol=2e-3), (out, ref)

    out2 = jax.block_until_ready(conv_global_similarity(x, params, has_act=True))
    ref2 = _reference(x, params, has_act=True)
    assert jnp.allclose(out2, ref2, rtol=2e-3, atol=2e-3), (out2, ref2)

    print("KERNEL_OK")
</pallas_src>

<mosaic_0001>
module attributes {stable_mosaic.version = 11 : i64} {
  func.func @_kernel(%arg0: i32, %arg1: memref<8x5248xf32, #tpu.memory_space<vmem>>, %arg2: memref<5248x256xf32, #tpu.memory_space<vmem>>, %arg3: memref<1x256xf32, #tpu.memory_space<vmem>>, %arg4: memref<256x128xf32, #tpu.memory_space<vmem>>, %arg5: memref<1x128xf32, #tpu.memory_space<vmem>>, %arg6: memref<8x128xf32, #tpu.memory_space<vmem>>) attributes {dimension_semantics = [#tpu.dimension_semantics<parallel>], iteration_bounds = array<i64: 1>, scalar_prefetch = 0 : i64, scratch_operands = 0 : i64, tpu.core_type = #tpu.core_type<tc>, window_params = [{transform_indices = @transform_0, window_bounds = array<i64: 8, 5248>}, {pipeline_mode = #tpu.pipeline_mode<synchronous>, transform_indices = @transform_1, window_bounds = array<i64: 5248, 256>}, {pipeline_mode = #tpu.pipeline_mode<synchronous>, transform_indices = @transform_2, window_bounds = array<i64: 1, 256>}, {pipeline_mode = #tpu.pipeline_mode<synchronous>, transform_indices = @transform_3, window_bounds = array<i64: 256, 128>}, {pipeline_mode = #tpu.pipeline_mode<synchronous>, transform_indices = @transform_4, window_bounds = array<i64: 1, 128>}, {transform_indices = @transform_5, window_bounds = array<i64: 8, 128>}]} {
    %c0 = arith.constant 0 : index
    %c0_0 = arith.constant 0 : index
    %0 = vector.load %arg1[%c0, %c0_0] : memref<8x5248xf32, #tpu.memory_space<vmem>>, vector<8x5248xf32>
    %cst = arith.constant 5.000000e-01 : f32
    %1 = vector.broadcast %cst : f32 to vector<8x5248xf32>
    %2 = arith.mulf %1, %0 : vector<8x5248xf32>
    %cst_1 = arith.constant 0.707106769 : f32
    %3 = vector.broadcast %cst_1 : f32 to vector<8x5248xf32>
    %4 = arith.mulf %0, %3 : vector<8x5248xf32>
    %cst_2 = arith.constant 0.000000e+00 : f32
    %5 = vector.broadcast %cst_2 : f32 to vector<8x5248xf32>
    %6 = arith.cmpf oge, %4, %5 : vector<8x5248xf32>
    %cst_3 = arith.constant 1.000000e+00 : f32
    %cst_4 = arith.constant -1.000000e+00 : f32
    %7 = vector.broadcast %cst_3 : f32 to vector<8x5248xf32>
    %8 = vector.broadcast %cst_4 : f32 to vector<8x5248xf32>
    %9 = arith.select %6, %7, %8 : vector<8x5248xi1>, vector<8x5248xf32>
    %10 = math.absf %4 : vector<8x5248xf32>
    %cst_5 = arith.constant 0.327591091 : f32
    %11 = vector.broadcast %cst_5 : f32 to vector<8x5248xf32>
    %12 = arith.mulf %11, %10 : vector<8x5248xf32>
    %cst_6 = arith.constant 1.000000e+00 : f32
    %13 = vector.broadcast %cst_6 : f32 to vector<8x5248xf32>
    %14 = arith.addf %13, %12 : vector<8x5248xf32>
    %15 = tpu.reciprocal %14 {approx = true} : vector<8x5248xf32> -> vector<8x5248xf32>
    %cst_7 = arith.constant 1.06140542 : f32
    %16 = vector.broadcast %cst_7 : f32 to vector<8x5248xf32>
    %17 = arith.mulf %15, %16 : vector<8x5248xf32>
    %cst_8 = arith.constant -1.45315206 : f32
    %18 = vector.broadcast %cst_8 : f32 to vector<8x5248xf32>
    %19 = arith.addf %18, %17 : vector<8x5248xf32>
    %20 = arith.mulf %15, %19 : vector<8x5248xf32>
    %cst_9 = arith.constant 1.42141378 : f32
    %21 = vector.broadcast %cst_9 : f32 to vector<8x5248xf32>
    %22 = arith.addf %21, %20 : vector<8x5248xf32>
    %23 = arith.mulf %15, %22 : vector<8x5248xf32>
    %cst_10 = arith.constant -0.284496725 : f32
    %24 = vector.broadcast %cst_10 : f32 to vector<8x5248xf32>
    %25 = arith.addf %24, %23 : vector<8x5248xf32>
    %26 = arith.mulf %15, %25 : vector<8x5248xf32>
    %cst_11 = arith.constant 0.254829586 : f32
    %27 = vector.broadcast %cst_11 : f32 to vector<8x5248xf32>
    %28 = arith.addf %27, %26 : vector<8x5248xf32>
    %29 = arith.mulf %15, %28 : vector<8x5248xf32>
    %cst_12 = arith.constant 0.000000e+00 : f32
    %30 = vector.broadcast %cst_12 : f32 to vector<8x5248xf32>
    %31 = arith.subf %30, %10 : vector<8x5248xf32>
    %32 = arith.mulf %31, %10 : vector<8x5248xf32>
    %33 = math.exp %32 : vector<8x5248xf32>
    %34 = arith.mulf %29, %33 : vector<8x5248xf32>
    %cst_13 = arith.constant 1.000000e+00 : f32
    %35 = vector.broadcast %cst_13 : f32 to vector<8x5248xf32>
    %36 = arith.subf %35, %34 : vector<8x5248xf32>
    %37 = arith.mulf %9, %36 : vector<8x5248xf32>
    %cst_14 = arith.constant 1.000000e+00 : f32
    %38 = vector.broadcast %cst_14 : f32 to vector<8x5248xf32>
    %39 = arith.addf %38, %37 : vector<8x5248xf32>
    %40 = arith.mulf %2, %39 : vector<8x5248xf32>
    %c0_15 = arith.constant 0 : index
    %c0_16 = arith.constant 0 : index
    %41 = vector.load %arg2[%c0_15, %c0_16] : memref<5248x256xf32, #tpu.memory_space<vmem>>, vector<5248x256xf32>
    %cst_17 = arith.constant dense<0.000000e+00> : vector<8x256xf32>
    %42 = tpu.matmul %40, %41, %cst_17 {dimension_numbers = #tpu.dot_dimension_numbers<[1], [0], [0], [1], [0, 0, 1, 1], [], []>} : vector<8x5248xf32>, vector<5248x256xf32>, vector<8x256xf32> -> vector<8x256xf32>
    %c0_18 = arith.constant 0 : index
    %c0_19 = arith.constant 0 : index
    %43 = vector.load %arg3[%c0_18, %c0_19] : memref<1x256xf32, #tpu.memory_space<vmem>>, vector<1x256xf32>
    %44 = vector.broadcast %43 : vector<1x256xf32> to vector<8x256xf32>
    %45 = arith.addf %42, %44 : vector<8x256xf32>
    %c0_20 = arith.constant 0 : index
    %c0_21 = arith.constant 0 : index
    %46 = vector.load %arg4[%c0_20, %c0_21] : memref<256x128xf32, #tpu.memory_space<vmem>>, vector<256x128xf32>
    %cst_22 = arith.constant dense<0.000000e+00> : vector<8x128xf32>
    %47 = tpu.matmul %45, %46, %cst_22 {dimension_numbers = #tpu.dot_dimension_numbers<[1], [0], [0], [1], [0, 0, 1, 1], [], []>} : vector<8x256xf32>, vector<256x128xf32>, vector<8x128xf32> -> vector<8x128xf32>
    %c0_23 = arith.constant 0 : index
    %c0_24 = arith.constant 0 : index
    %48 = vector.load %arg5[%c0_23, %c0_24] : memref<1x128xf32, #tpu.memory_space<vmem>>, vector<1x128xf32>
    %49 = vector.broadcast %48 : vector<1x128xf32> to vector<8x128xf32>
    %50 = arith.addf %47, %49 : vector<8x128xf32>
    %cst_25 = arith.constant 0.000000e+00 : f32
    %51 = vector.broadcast %cst_25 : f32 to vector<8x128xf32>
    %52 = arith.subf %51, %50 : vector<8x128xf32>
    %53 = math.exp %52 : vector<8x128xf32>
    %cst_26 = arith.constant 1.000000e+00 : f32
    %54 = vector.broadcast %cst_26 : f32 to vector<8x128xf32>
    %55 = arith.addf %54, %53 : vector<8x128xf32>
    %cst_27 = arith.constant 1.000000e+00 : f32
    %56 = vector.broadcast %cst_27 : f32 to vector<8x128xf32>
    %57 = arith.divf %56, %55 : vector<8x128xf32>
    %c0_28 = arith.constant 0 : index
    %c0_29 = arith.constant 0 : index
    %58 = vector.load %arg6[%c0_28, %c0_29] : memref<8x128xf32, #tpu.memory_space<vmem>>, vector<8x128xf32>
    tpu.vector_store %arg6[%c0_28, %c0_29], %57 {strides = array<i32>} : memref<8x128xf32, #tpu.memory_space<vmem>>, vector<8x128xf32>,
    return
  }
  func.func @transform_0(%arg0: i32) -> (i32, i32) {
    %c0_i32 = arith.constant 0 : i32
    %c0_i32_0 = arith.constant 0 : i32
    return %arg0, %c0_i32 : i32, i32
  }
  func.func @transform_1(%arg0: i32) -> (i32, i32) {
    %c0_i32 = arith.constant 0 : i32
    %c0_i32_0 = arith.constant 0 : i32
    %c0_i32_1 = arith.constant 0 : i32
    return %c0_i32, %c0_i32_0 : i32, i32
  }
  func.func @transform_2(%arg0: i32) -> (i32, i32) {
    %c0_i32 = arith.constant 0 : i32
    %c0_i32_0 = arith.constant 0 : i32
    %c0_i32_1 = arith.constant 0 : i32
    return %c0_i32, %c0_i32_0 : i32, i32
  }
  func.func @transform_3(%arg0: i32) -> (i32, i32) {
    %c0_i32 = arith.constant 0 : i32
    %c0_i32_0 = arith.constant 0 : i32
    %c0_i32_1 = arith.constant 0 : i32
    return %c0_i32, %c0_i32_0 : i32, i32
  }
  func.func @transform_4(%arg0: i32) -> (i32, i32) {
    %c0_i32 = arith.constant 0 : i32
    %c0_i32_0 = arith.constant 0 : i32
    %c0_i32_1 = arith.constant 0 : i32
    return %c0_i32, %c0_i32_0 : i32, i32
  }
  func.func @transform_5(%arg0: i32) -> (i32, i32) {
    %c0_i32 = arith.constant 0 : i32
    %c0_i32_0 = arith.constant 0 : i32
    return %arg0, %c0_i32 : i32, i32
  }
}

</mosaic_0001>

<llo_original>
// kernel: tpu_custom_call.1
$region0: #{tpu_custom_call.1}
  #allocation0 [shape = 'u32[]', space=smem, size = 0x4, offset = 0x4, fixed_abs, tag = 'smem constant byte address 0x4 - core index']
  #allocation1 [shape = 'u32[144,128]{1,0:T(1,128)}', space=vmem, size = 0x12000, scoped, tag = 'internal scratch']
  %s0 = inlined_call_operand.hbm [shape: f32[8,5248], index: 0, kind: input, shape index: {}]
  %s1 = inlined_call_operand.hbm [shape: f32[5248,256], index: 1, kind: input, shape index: {}]
  %s2 = inlined_call_operand.hbm [shape: f32[1,256], index: 2, kind: input, shape index: {}]
  %s3 = inlined_call_operand.hbm [shape: f32[256,128], index: 3, kind: input, shape index: {}]
  %s4 = inlined_call_operand.hbm [shape: f32[1,128], index: 4, kind: input, shape index: {}]
  %s5 = inlined_call_operand.hbm [shape: f32[8,128], index: 5, kind: output, shape index: {}]
  %s6 = sld [smem:[#allocation0]]
  $region50: #{tpu_custom_call.1} parent=0
    _
  %s8 = ssub.s32 1, %s6
  %s9 = scalar_select 0, %s8, %s6
  $region1: #{tpu_custom_call.1} parent=0
    #allocation2 [shape = 'u8[167936]{0}', space=vmem, size = 0x29000, scoped, tag = 'input window, operand 0, single buffered']
    #allocation3 [shape = 's32[1]{0}', space=sflag, size = 0x4, scoped, tag = 'scoped memory for tpu_custom_call.1']
    #allocation4 [shape = 's32[1]{0}', space=sflag, size = 0x4, scoped, tag = 'scoped memory for tpu_custom_call.1']
    #allocation5 [shape = 'u8[5373952]{0}', space=vmem, size = 0x520000, scoped, tag = 'input window, operand 1, single buffered']
    #allocation6 [shape = 's32[1]{0}', space=sflag, size = 0x4, scoped, tag = 'scoped memory for tpu_custom_call.1']
    #allocation7 [shape = 'u8[1024]{0}', space=vmem, size = 0x400, scoped, tag = 'input window, operand 2, single buffered']
    #allocation8 [shape = 'u8[131072]{0}', space=vmem, size = 0x20000, scoped, tag = 'input window, operand 3, single buffered']
    #allocation9 [shape = 's32[1]{0}', space=sflag, size = 0x4, scoped, tag = 'scoped memory for tpu_custom_call.1']
    #allocation10 [shape = 'u8[512]{0}', space=vmem, size = 0x400, scoped, tag = 'input window, operand 4, single buffered']
    #allocation11 [shape = 'u8[4096]{0}', space=vmem, size = 0x1000, scoped, tag = 'output window, operand 0, single buffered']
    %10 = vsyncpa [#allocation3], 0
    %11 = vsyncpa [#allocation6], 0
    %12 = vsyncpa [#allocation9], 0
    %13 = vsyncpa [#allocation4], 0
    // Predicated region
    $region2: #{tpu_custom_call.1} parent=1 // pred_check
      _
    $region3: #{tpu_custom_call.1} parent=1 // pred_check_branch
      %15 = sbr.rel (0) target = $region5
    $region4: #{tpu_custom_call.1} parent=1 // pred_region
      %s17 = ssub.s32 5248, 5248
      %18 = vsyncadd [#allocation3], %s17
      %s20 = sshll.u32 [#allocation2], 4
      %s21 = int_to_ptr.vmem [resolvable:$true] %s20
      %23 = dma.hbm_to_vmem [thread:$0]  %s0, 5248, %s21, [#allocation3]
    $region5: #{tpu_custom_call.1} parent=1 // pred_fallthru
      _
    // Predicated region
    $region6: #{tpu_custom_call.1} parent=1 // pred_check
      _
    $region7: #{tpu_custom_call.1} parent=1 // pred_check_branch
      %25 = sbr.rel (0) target = $region9
    $region8: #{tpu_custom_call.1} parent=1 // pred_region
      %s27 = ssub.s32 167936, 167936
      %28 = vsyncadd [#allocation6], %s27
      %s29 = sshll.u32 [#allocation5], 4
      %s30 = int_to_ptr.vmem [resolvable:$true] %s29
      %35 = dma.hbm_to_vmem [thread:$0]  %s1, 167936, %s30, [#allocation6], 256, 256, 16
    $region9: #{tpu_custom_call.1} parent=1 // pred_fallthru
      _
    // Predicated region
    $region10: #{tpu_custom_call.1} parent=1 // pred_check
      _
    $region11: #{tpu_custom_call.1} parent=1 // pred_check_branch
      %37 = sbr.rel (0) target = $region13
    $region12: #{tpu_custom_call.1} parent=1 // pred_region
      %s39 = ssub.s32 32, 32
      %40 = vsyncadd [#allocation6], %s39
      %s42 = sshll.u32 [#allocation7], 4
      %s43 = int_to_ptr.vmem [resolvable:$true] %s42
      %45 = dma.hbm_to_vmem [thread:$0]  %s2, 32, %s43, [#allocation6]
    $region13: #{tpu_custom_call.1} parent=1 // pred_fallthru
      _
    // Predicated region
    $region14: #{tpu_custom_call.1} parent=1 // pred_check
      _
    $region15: #{tpu_custom_call.1} parent=1 // pred_check_branch
      %47 = sbr.rel (0) target = $region17
    $region16: #{tpu_custom_call.1} parent=1 // pred_region
      %s49 = ssub.s32 4096, 4096
      %50 = vsyncadd [#allocation9], %s49
      %s51 = sshll.u32 [#allocation8], 4
      %s52 = int_to_ptr.vmem [resolvable:$true] %s51
      %57 = dma.hbm_to_vmem [thread:$0]  %s3, 4096, %s52, [#allocation9], 128, 128, 8
    $region17: #{tpu_custom_call.1} parent=1 // pred_fallthru
      _
    // Predicated region
    $region18: #{tpu_custom_call.1} parent=1 // pred_check
      _
    $region19: #{tpu_custom_call.1} parent=1 // pred_check_branch
      %59 = sbr.rel (0) target = $region21
    $region20: #{tpu_custom_call.1} parent=1 // pred_region
      %s61 = ssub.s32 16, 16
      %62 = vsyncadd [#allocation9], %s61
      %s64 = sshll.u32 [#allocation10], 4
      %s65 = int_to_ptr.vmem [resolvable:$true] %s64
      %67 = dma.hbm_to_vmem [thread:$0]  %s4, 16, %s65, [#allocation9]
    $region21: #{tpu_custom_call.1} parent=1 // pred_fallthru
      _
    // Predicated region
    $region22: #{tpu_custom_call.1} parent=1 // pred_check
      _
    $region23: #{tpu_custom_call.1} parent=1 // pred_check_branch
      %69 = sbr.rel (0) target = $region25
    $region24: #{tpu_custom_call.1} parent=1 // pred_region
      %70 = dma.done [#allocation3], 5248
    $region25: #{tpu_custom_call.1} parent=1 // pred_fallthru
      _
    // Predicated region
    $region26: #{tpu_custom_call.1} parent=1 // pred_check
      _
    $region27: #{tpu_custom_call.1} parent=1 // pred_check_branch
      %72 = sbr.rel (0) target = $region29
    $region28: #{tpu_custom_call.1} parent=1 // pred_region
      %73 = dma.done [#allocation6], 167936
    $region29: #{tpu_custom_call.1} parent=1 // pred_fallthru
      _
    // Predicated region
    $region30: #{tpu_custom_call.1} parent=1 // pred_check
      _
    $region31: #{tpu_custom_call.1} parent=1 // pred_check_branch
      %75 = sbr.rel (0) target = $region33
    $region32: #{tpu_custom_call.1} parent=1 // pred_region
      %76 = dma.done [#allocation6], 32
    $region33: #{tpu_custom_call.1} parent=1 // pred_fallthru
      _
    // Predicated region
    $region34: #{tpu_custom_call.1} parent=1 // pred_check
      _
    $region35: #{tpu_custom_call.1} parent=1 // pred_check_branch
      %78 = sbr.rel (0) target = $region37
    $region36: #{tpu_custom_call.1} parent=1 // pred_region
      %79 = dma.done [#allocation9], 4096
    $region37: #{tpu_custom_call.1} parent=1 // pred_fallthru
      _
    // Predicated region
    $region38: #{tpu_custom_call.1} parent=1 // pred_check
      _
    $region39: #{tpu_custom_call.1} parent=1 // pred_check_branch
      %81 = sbr.rel (0) target = $region41
    $region40: #{tpu_custom_call.1} parent=1 // pred_region
      %82 = dma.done [#allocation9], 16
    $region41: #{tpu_custom_call.1} parent=1 // pred_fallthru
      _
    %v83 = vld [vmem:[#allocation2] sm:$0xff]
    %v84 = vld [vmem:[#allocation2 + $0x8] sm:$0xff]
    %v85 = vld [vmem:[#allocation2 + $0x10] sm:$0xff]
    %v86 = vld [vmem:[#allocation2 + $0x18] sm:$0xff]
    %v87 = vld [vmem:[#allocation2 + $0x20] sm:$0xff]
    %v88 = vld [vmem:[#allocation2 + $0x28] sm:$0xff]
    %v89 = vld [vmem:[#allocation2 + $0x30] sm:$0xff]
    %v90 = vld [vmem:[#allocation2 + $0x38] sm:$0xff]
    %v91 = vld [vmem:[#allocation2 + $0x40] sm:$0xff]
    %v92 = vld [vmem:[#allocation2 + $0x48] sm:$0xff]
    %v93 = vld [vmem:[#allocation2 + $0x50] sm:$0xff]
    %v94 = vld [vmem:[#allocation2 + $0x58] sm:$0xff]
    %v95 = vld [vmem:[#allocation2 + $0x60] sm:$0xff]
    %v96 = vld [vmem:[#allocation2 + $0x68] sm:$0xff]
    %v97 = vld [vmem:[#allocation2 + $0x70] sm:$0xff]
    %v98 = vld [vmem:[#allocation2 + $0x78] sm:$0xff]
    %v99 = vld [vmem:[#allocation2 + $0x80] sm:$0xff]
    %v100 = vld [vmem:[#allocation2 + $0x88] sm:$0xff]
    %v101 = vld [vmem:[#allocation2 + $0x90] sm:$0xff]
    %v102 = vld [vmem:[#allocation2 + $0x98] sm:$0xff]
    %v103 = vld [vmem:[#allocation2 + $0xa0] sm:$0xff]
    %v104 = vld [vmem:[#allocation2 + $0xa8] sm:$0xff]
    %v105 = vld [vmem:[#allocation2 + $0xb0] sm:$0xff]
    %v106 = vld [vmem:[#allocation2 + $0xb8] sm:$0xff]
    %v107 = vld [vmem:[#allocation2 + $0xc0] sm:$0xff]
    %v108 = vld [vmem:[#allocation2 + $0xc8] sm:$0xff]
    %v109 = vld [vmem:[#allocation2 + $0xd0] sm:$0xff]
    %v110 = vld [vmem:[#allocation2 + $0xd8] sm:$0xff]
    %v111 = vld [vmem:[#allocation2 + $0xe0] sm:$0xff]
    %v112 = vld [vmem:[#allocation2 + $0xe8] sm:$0xff]
    %v113 = vld [vmem:[#allocation2 + $0xf0] sm:$0xff]
    %v114 = vld [vmem:[#allocation2 + $0xf8] sm:$0xff]
    %v115 = vld [vmem:[#allocation2 + $0x100] sm:$0xff]
    %v116 = vld [vmem:[#allocation2 + $0x108] sm:$0xff]
    %v117 = vld [vmem:[#allocation2 + $0x110] sm:$0xff]
    %v118 = vld [vmem:[#allocation2 + $0x118] sm:$0xff]
    %v119 = vld [vmem:[#allocation2 + $0x120] sm:$0xff]
    %v120 = vld [vmem:[#allocation2 + $0x128] sm:$0xff]
    %v121 = vld [vmem:[#allocation2 + $0x130] sm:$0xff]
    %v122 = vld [vmem:[#allocation2 + $0x138] sm:$0xff]
    %v123 = vld [vmem:[#allocation2 + $0x140] sm:$0xff]
    %v124 = vmul.f32 %v83, 0.5
    %v125 = vmul.f32 %v84, 0.5
    %v126 = vmul.f32 %v85, 0.5
    %v127 = vmul.f32 %v86, 0.5
    %v128 = vmul.f32 %v87, 0.5
    %v129 = vmul.f32 %v88, 0.5
    %v130 = vmul.f32 %v89, 0.5
    %v131 = vmul.f32 %v90, 0.5
    %v132 = vmul.f32 %v91, 0.5
    %v133 = vmul.f32 %v92, 0.5
    %v134 = vmul.f32 %v93, 0.5
    %v135 = vmul.f32 %v94, 0.5
    %v136 = vmul.f32 %v95, 0.5
    %v137 = vmul.f32 %v96, 0.5
    %v138 = vmul.f32 %v97, 0.5
    %v139 = vmul.f32 %v98, 0.5
    %v140 = vmul.f32 %v99, 0.5
    %v141 = vmul.f32 %v100, 0.5
    %v142 = vmul.f32 %v101, 0.5
    %v143 = vmul.f32 %v102, 0.5
    %v144 = vmul.f32 %v103, 0.5
    %v145 = vmul.f32 %v104, 0.5
    %v146 = vmul.f32 %v105, 0.5
    %v147 = vmul.f32 %v106, 0.5
    %v148 = vmul.f32 %v107, 0.5
    %v149 = vmul.f32 %v108, 0.5
    %v150 = vmul.f32 %v109, 0.5
    %v151 = vmul.f32 %v110, 0.5
    %v152 = vmul.f32 %v111, 0.5
    %v153 = vmul.f32 %v112, 0.5
    %v154 = vmul.f32 %v113, 0.5
    %v155 = vmul.f32 %v114, 0.5
    %v156 = vmul.f32 %v115, 0.5
    %v157 = vmul.f32 %v116, 0.5
    %v158 = vmul.f32 %v117, 0.5
    %v159 = vmul.f32 %v118, 0.5
    %v160 = vmul.f32 %v119, 0.5
    %v161 = vmul.f32 %v120, 0.5
    %v162 = vmul.f32 %v121, 0.5
    %v163 = vmul.f32 %v122, 0.5
    %v164 = vmul.f32 %v123, 0.5
    %v165 = vmul.f32 %v83, 0.70710677
    %v166 = vmul.f32 %v84, 0.70710677
    %v167 = vmul.f32 %v85, 0.70710677
    %v168 = vmul.f32 %v86, 0.70710677
    %v169 = vmul.f32 %v87, 0.70710677
    %v170 = vmul.f32 %v88, 0.70710677
    %v171 = vmul.f32 %v89, 0.70710677
    %v172 = vmul.f32 %v90, 0.70710677
    %v173 = vmul.f32 %v91, 0.70710677
    %v174 = vmul.f32 %v92, 0.70710677
    %v175 = vmul.f32 %v93, 0.70710677
    %v176 = vmul.f32 %v94, 0.70710677
    %v177 = vmul.f32 %v95, 0.70710677
    %v178 = vmul.f32 %v96, 0.70710677
    %v179 = vmul.f32 %v97, 0.70710677
    %v180 = vmul.f32 %v98, 0.70710677
    %v181 = vmul.f32 %v99, 0.70710677
    %v182 = vmul.f32 %v100, 0.70710677
    %v183 = vmul.f32 %v101, 0.70710677
    %v184 = vmul.f32 %v102, 0.70710677
    %v185 = vmul.f32 %v103, 0.70710677
    %v186 = vmul.f32 %v104, 0.70710677
    %v187 = vmul.f32 %v105, 0.70710677
    %v188 = vmul.f32 %v106, 0.70710677
    %v189 = vmul.f32 %v107, 0.70710677
    %v190 = vmul.f32 %v108, 0.70710677
    %v191 = vmul.f32 %v109, 0.70710677
    %v192 = vmul.f32 %v110, 0.70710677
    %v193 = vmul.f32 %v111, 0.70710677
    %v194 = vmul.f32 %v112, 0.70710677
    %v195 = vmul.f32 %v113, 0.70710677
    %v196 = vmul.f32 %v114, 0.70710677
    %v197 = vmul.f32 %v115, 0.70710677
    %v198 = vmul.f32 %v116, 0.70710677
    %v199 = vmul.f32 %v117, 0.70710677
    %v200 = vmul.f32 %v118, 0.70710677
    %v201 = vmul.f32 %v119, 0.70710677
    %v202 = vmul.f32 %v120, 0.70710677
    %v203 = vmul.f32 %v121, 0.70710677
    %v204 = vmul.f32 %v122, 0.70710677
    %v205 = vmul.f32 %v123, 0.70710677
    %vm206 = vcmp.ge.f32.partialorder %v165, 0.0
    %vm207 = vcmp.ge.f32.partialorder %v166, 0.0
    %vm208 = vcmp.ge.f32.partialorder %v167, 0.0
    %vm209 = vcmp.ge.f32.partialorder %v168, 0.0
    %vm210 = vcmp.ge.f32.partialorder %v169, 0.0
    %vm211 = vcmp.ge.f32.partialorder %v170, 0.0
    %vm212 = vcmp.ge.f32.partialorder %v171, 0.0
    %vm213 = vcmp.ge.f32.partialorder %v172, 0.0
    %vm214 = vcmp.ge.f32.partialorder %v173, 0.0
    %vm215 = vcmp.ge.f32.partialorder %v174, 0.0
    %vm216 = vcmp.ge.f32.partialorder %v175, 0.0
    %vm217 = vcmp.ge.f32.partialorder %v176, 0.0
    %vm218 = vcmp.ge.f32.partialorder %v177, 0.0
    %vm219 = vcmp.ge.f32.partialorder %v178, 0.0
    %vm220 = vcmp.ge.f32.partialorder %v179, 0.0
    %vm221 = vcmp.ge.f32.partialorder %v180, 0.0
    %vm222 = vcmp.ge.f32.partialorder %v181, 0.0
    %vm223 = vcmp.ge.f32.partialorder %v182, 0.0
    %vm224 = vcmp.ge.f32.partialorder %v183, 0.0
    %vm225 = vcmp.ge.f32.partialorder %v184, 0.0
    %vm226 = vcmp.ge.f32.partialorder %v185, 0.0
    %vm227 = vcmp.ge.f32.partialorder %v186, 0.0
    %vm228 = vcmp.ge.f32.partialorder %v187, 0.0
    %vm229 = vcmp.ge.f32.partialorder %v188, 0.0
    %vm230 = vcmp.ge.f32.partialorder %v189, 0.0
    %vm231 = vcmp.ge.f32.partialorder %v190, 0.0
    %vm232 = vcmp.ge.f32.partialorder %v191, 0.0
    %vm233 = vcmp.ge.f32.partialorder %v192, 0.0
    %vm234 = vcmp.ge.f32.partialorder %v193, 0.0
    %vm235 = vcmp.ge.f32.partialorder %v194, 0.0
    %vm236 = vcmp.ge.f32.partialorder %v195, 0.0
    %vm237 = vcmp.ge.f32.partialorder %v196, 0.0
    %vm238 = vcmp.ge.f32.partialorder %v197, 0.0
    %vm239 = vcmp.ge.f32.partialorder %v198, 0.0
    %vm240 = vcmp.ge.f32.partialorder %v199, 0.0
    %vm241 = vcmp.ge.f32.partialorder %v200, 0.0
    %vm242 = vcmp.ge.f32.partialorder %v201, 0.0
    %vm243 = vcmp.ge.f32.partialorder %v202, 0.0
    %vm244 = vcmp.ge.f32.partialorder %v203, 0.0
    %vm245 = vcmp.ge.f32.partialorder %v204, 0.0
    %vm246 = vcmp.ge.f32.partialorder %v205, 0.0
    %v247 = vsel %vm206, 1.0, -1.0
    %v248 = vsel %vm207, 1.0, -1.0
    %v249 = vsel %vm208, 1.0, -1.0
    %v250 = vsel %vm209, 1.0, -1.0
    %v251 = vsel %vm210, 1.0, -1.0
    %v252 = vsel %vm211, 1.0, -1.0
    %v253 = vsel %vm212, 1.0, -1.0
    %v254 = vsel %vm213, 1.0, -1.0
    %v255 = vsel %vm214, 1.0, -1.0
    %v256 = vsel %vm215, 1.0, -1.0
    %v257 = vsel %vm216, 1.0, -1.0
    %v258 = vsel %vm217, 1.0, -1.0
    %v259 = vsel %vm218, 1.0, -1.0
    %v260 = vsel %vm219, 1.0, -1.0
    %v261 = vsel %vm220, 1.0, -1.0
    %v262 = vsel %vm221, 1.0, -1.0
    %v263 = vsel %vm222, 1.0, -1.0
    %v264 = vsel %vm223, 1.0, -1.0
    %v265 = vsel %vm224, 1.0, -1.0
    %v266 = vsel %vm225, 1.0, -1.0
    %v267 = vsel %vm226, 1.0, -1.0
    %v268 = vsel %vm227, 1.0, -1.0
    %v269 = vsel %vm228, 1.0, -1.0
    %v270 = vsel %vm229, 1.0, -1.0
    %v271 = vsel %vm230, 1.0, -1.0
    %v272 = vsel %vm231, 1.0, -1.0
    %v273 = vsel %vm232, 1.0, -1.0
    %v274 = vsel %vm233, 1.0, -1.0
    %v275 = vsel %vm234, 1.0, -1.0
    %v276 = vsel %vm235, 1.0, -1.0
    %v277 = vsel %vm236, 1.0, -1.0
    %v278 = vsel %vm237, 1.0, -1.0
    %v279 = vsel %vm238, 1.0, -1.0
    %v280 = vsel %vm239, 1.0, -1.0
    %v281 = vsel %vm240, 1.0, -1.0
    %v282 = vsel %vm241, 1.0, -1.0
    %v283 = vsel %vm242, 1.0, -1.0
    %v284 = vsel %vm243, 1.0, -1.0
    %v285 = vsel %vm244, 1.0, -1.0
    %v286 = vsel %vm245, 1.0, -1.0
    %v287 = vsel %vm246, 1.0, -1.0
    %v288 = vand.u32 2147483647, %v165
    %v289 = vand.u32 2147483647, %v166
    %v290 = vand.u32 2147483647, %v167
    %v291 = vand.u32 2147483647, %v168
    %v292 = vand.u32 2147483647, %v169
    %v293 = vand.u32 2147483647, %v170
    %v294 = vand.u32 2147483647, %v171
    %v295 = vand.u32 2147483647, %v172
    %v296 = vand.u32 2147483647, %v173
    %v297 = vand.u32 2147483647, %v174
    %v298 = vand.u32 2147483647, %v175
    %v299 = vand.u32 2147483647, %v176
    %v300 = vand.u32 2147483647, %v177
    %v301 = vand.u32 2147483647, %v178
    %v302 = vand.u32 2147483647, %v179
    %v303 = vand.u32 2147483647, %v180
    %v304 = vand.u32 2147483647, %v181
    %v305 = vand.u32 2147483647, %v182
    %v306 = vand.u32 2147483647, %v183
    %v307 = vand.u32 2147483647, %v184
    %v308 = vand.u32 2147483647, %v185
    %v309 = vand.u32 2147483647, %v186
    %v310 = vand.u32 2147483647, %v187
    %v311 = vand.u32 2147483647, %v188
    %v312 = vand.u32 2147483647, %v189
    %v313 = vand.u32 2147483647, %v190
    %v314 = vand.u32 2147483647, %v191
    %v315 = vand.u32 2147483647, %v192
    %v316 = vand.u32 2147483647, %v193
    %v317 = vand.u32 2147483647, %v194
    %v318 = vand.u32 2147483647, %v195
    %v319 = vand.u32 2147483647, %v196
    %v320 = vand.u32 2147483647, %v197
    %v321 = vand.u32 2147483647, %v198
    %v322 = vand.u32 2147483647, %v199
    %v323 = vand.u32 2147483647, %v200
    %v324 = vand.u32 2147483647, %v201
    %v325 = vand.u32 2147483647, %v202
    %v326 = vand.u32 2147483647, %v203
    %v327 = vand.u32 2147483647, %v204
    %v328 = vand.u32 2147483647, %v205
    %v329 = vmul.f32 %v288, 0.3275911
    %v330 = vmul.f32 %v289, 0.3275911
    %v331 = vmul.f32 %v290, 0.3275911
    %v332 = vmul.f32 %v291, 0.3275911
    %v333 = vmul.f32 %v292, 0.3275911
    %v334 = vmul.f32 %v293, 0.3275911
    %v335 = vmul.f32 %v294, 0.3275911
    %v336 = vmul.f32 %v295, 0.3275911
    %v337 = vmul.f32 %v296, 0.3275911
    %v338 = vmul.f32 %v297, 0.3275911
    %v339 = vmul.f32 %v298, 0.3275911
    %v340 = vmul.f32 %v299, 0.3275911
    %v341 = vmul.f32 %v300, 0.3275911
    %v342 = vmul.f32 %v301, 0.3275911
    %v343 = vmul.f32 %v302, 0.3275911
    %v344 = vmul.f32 %v303, 0.3275911
    %v345 = vmul.f32 %v304, 0.3275911
    %v346 = vmul.f32 %v305, 0.3275911
    %v347 = vmul.f32 %v306, 0.3275911
    %v348 = vmul.f32 %v307, 0.3275911
    %v349 = vmul.f32 %v308, 0.3275911
    %v350 = vmul.f32 %v309, 0.3275911
    %v351 = vmul.f32 %v310, 0.3275911
    %v352 = vmul.f32 %v311, 0.3275911
    %v353 = vmul.f32 %v312, 0.3275911
    %v354 = vmul.f32 %v313, 0.3275911
    %v355 = vmul.f32 %v314, 0.3275911
    %v356 = vmul.f32 %v315, 0.3275911
    %v357 = vmul.f32 %v316, 0.3275911
    %v358 = vmul.f32 %v317, 0.3275911
    %v359 = vmul.f32 %v318, 0.3275911
    %v360 = vmul.f32 %v319, 0.3275911
    %v361 = vmul.f32 %v320, 0.3275911
    %v362 = vmul.f32 %v321, 0.3275911
    %v363 = vmul.f32 %v322, 0.3275911
    %v364 = vmul.f32 %v323, 0.3275911
    %v365 = vmul.f32 %v324, 0.3275911
    %v366 = vmul.f32 %v325, 0.3275911
    %v367 = vmul.f32 %v326, 0.3275911
    %v368 = vmul.f32 %v327, 0.3275911
    %v369 = vmul.f32 %v328, 0.3275911
    %v370 = vadd.f32 %v329, 1.0
    %v371 = vadd.f32 %v330, 1.0
    %v372 = vadd.f32 %v331, 1.0
    %v373 = vadd.f32 %v332, 1.0
    %v374 = vadd.f32 %v333, 1.0
    %v375 = vadd.f32 %v334, 1.0
    %v376 = vadd.f32 %v335, 1.0
    %v377 = vadd.f32 %v336, 1.0
    %v378 = vadd.f32 %v337, 1.0
    %v379 = vadd.f32 %v338, 1.0
    %v380 = vadd.f32 %v339, 1.0
    %v381 = vadd.f32 %v340, 1.0
    %v382 = vadd.f32 %v341, 1.0
    %v383 = vadd.f32 %v342, 1.0
    %v384 = vadd.f32 %v343, 1.0
    %v385 = vadd.f32 %v344, 1.0
    %v386 = vadd.f32 %v345, 1.0
    %v387 = vadd.f32 %v346, 1.0
    %v388 = vadd.f32 %v347, 1.0
    %v389 = vadd.f32 %v348, 1.0
    %v390 = vadd.f32 %v349, 1.0
    %v391 = vadd.f32 %v350, 1.0
    %v392 = vadd.f32 %v351, 1.0
    %v393 = vadd.f32 %v352, 1.0
    %v394 = vadd.f32 %v353, 1.0
    %v395 = vadd.f32 %v354, 1.0
    %v396 = vadd.f32 %v355, 1.0
    %v397 = vadd.f32 %v356, 1.0
    %v398 = vadd.f32 %v357, 1.0
    %v399 = vadd.f32 %v358, 1.0
    %v400 = vadd.f32 %v359, 1.0
    %v401 = vadd.f32 %v360, 1.0
    %v402 = vadd.f32 %v361, 1.0
    %v403 = vadd.f32 %v362, 1.0
    %v404 = vadd.f32 %v363, 1.0
    %v405 = vadd.f32 %v364, 1.0
    %v406 = vadd.f32 %v365, 1.0
    %v407 = vadd.f32 %v366, 1.0
    %v408 = vadd.f32 %v367, 1.0
    %v409 = vadd.f32 %v368, 1.0
    %v410 = vadd.f32 %v369, 1.0
    %v411 = vrcp.pop %v370
    %v412 = vrcp.pop %v371
    %v413 = vrcp.pop %v372
    %v414 = vrcp.pop %v373
    %v415 = vrcp.pop %v374
    %v416 = vrcp.pop %v375
    %v417 = vrcp.pop %v376
    %v418 = vrcp.pop %v377
    %v419 = vrcp.pop %v378
    %v420 = vrcp.pop %v379
    %v421 = vrcp.pop %v380
    %v422 = vrcp.pop %v381
    %v423 = vrcp.pop %v382
    %v424 = vrcp.pop %v383
    %v425 = vrcp.pop %v384
    %v426 = vrcp.pop %v385
    %v427 = vrcp.pop %v386
    %v428 = vrcp.pop %v387
    %v429 = vrcp.pop %v388
    %v430 = vrcp.pop %v389
    %v431 = vrcp.pop %v390
    %v432 = vrcp.pop %v391
    %v433 = vrcp.pop %v392
    %v434 = vrcp.pop %v393
    %v435 = vrcp.pop %v394
    %v436 = vrcp.pop %v395
    %v437 = vrcp.pop %v396
    %v438 = vrcp.pop %v397
    %v439 = vrcp.pop %v398
    %v440 = vrcp.pop %v399
    %v441 = vrcp.pop %v400
    %v442 = vrcp.pop %v401
    %v443 = vrcp.pop %v402
    %v444 = vrcp.pop %v403
    %v445 = vrcp.pop %v404
    %v446 = vrcp.pop %v405
    %v447 = vrcp.pop %v406
    %v448 = vrcp.pop %v407
    %v449 = vrcp.pop %v408
    %v450 = vrcp.pop %v409
    %v451 = vrcp.pop %v410
    %v452 = vmul.f32 %v411, 1.0614054
    %v453 = vmul.f32 %v412, 1.0614054
    %v454 = vmul.f32 %v413, 1.0614054
    %v455 = vmul.f32 %v414, 1.0614054
    %v456 = vmul.f32 %v415, 1.0614054
    %v457 = vmul.f32 %v416, 1.0614054
    %v458 = vmul.f32 %v417, 1.0614054
    %v459 = vmul.f32 %v418, 1.0614054
    %v460 = vmul.f32 %v419, 1.0614054
    %v461 = vmul.f32 %v420, 1.0614054
    %v462 = vmul.f32 %v421, 1.0614054
    %v463 = vmul.f32 %v422, 1.0614054
    %v464 = vmul.f32 %v423, 1.0614054
    %v465 = vmul.f32 %v424, 1.0614054
    %v466 = vmul.f32 %v425, 1.0614054
    %v467 = vmul.f32 %v426, 1.0614054
    %v468 = vmul.f32 %v427, 1.0614054
    %v469 = vmul.f32 %v428, 1.0614054
    %v470 = vmul.f32 %v429, 1.0614054
    %v471 = vmul.f32 %v430, 1.0614054
    %v472 = vmul.f32 %v431, 1.0614054
    %v473 = vmul.f32 %v432, 1.0614054
    %v474 = vmul.f32 %v433, 1.0614054
    %v475 = vmul.f32 %v434, 1.0614054
    %v476 = vmul.f32 %v435, 1.0614054
    %v477 = vmul.f32 %v436, 1.0614054
    %v478 = vmul.f32 %v437, 1.0614054
    %v479 = vmul.f32 %v438, 1.0614054
    %v480 = vmul.f32 %v439, 1.0614054
    %v481 = vmul.f32 %v440, 1.0614054
    %v482 = vmul.f32 %v441, 1.0614054
    %v483 = vmul.f32 %v442, 1.0614054
    %v484 = vmul.f32 %v443, 1.0614054
    %v485 = vmul.f32 %v444, 1.0614054
    %v486 = vmul.f32 %v445, 1.0614054
    %v487 = vmul.f32 %v446, 1.0614054
    %v488 = vmul.f32 %v447, 1.0614054
    %v489 = vmul.f32 %v448, 1.0614054
    %v490 = vmul.f32 %v449, 1.0614054
    %v491 = vmul.f32 %v450, 1.0614054
    %v492 = vmul.f32 %v451, 1.0614054
    %v493 = vadd.f32 %v452, -1.4531521
    %v494 = vadd.f32 %v453, -1.4531521
    %v495 = vadd.f32 %v454, -1.4531521
    %v496 = vadd.f32 %v455, -1.4531521
    %v497 = vadd.f32 %v456, -1.4531521
    %v498 = vadd.f32 %v457, -1.4531521
    %v499 = vadd.f32 %v458, -1.4531521
    %v500 = vadd.f32 %v459, -1.4531521
    %v501 = vadd.f32 %v460, -1.4531521
    %v502 = vadd.f32 %v461, -1.4531521
    %v503 = vadd.f32 %v462, -1.4531521
    %v504 = vadd.f32 %v463, -1.4531521
    %v505 = vadd.f32 %v464, -1.4531521
    %v506 = vadd.f32 %v465, -1.4531521
    %v507 = vadd.f32 %v466, -1.4531521
    %v508 = vadd.f32 %v467, -1.4531521
    %v509 = vadd.f32 %v468, -1.4531521
    %v510 = vadd.f32 %v469, -1.4531521
    %v511 = vadd.f32 %v470, -1.4531521
    %v512 = vadd.f32 %v471, -1.4531521
    %v513 = vadd.f32 %v472, -1.4531521
    %v514 = vadd.f32 %v473, -1.4531521
    %v515 = vadd.f32 %v474, -1.4531521
    %v516 = vadd.f32 %v475, -1.4531521
    %v517 = vadd.f32 %v476, -1.4531521
    %v518 = vadd.f32 %v477, -1.4531521
    %v519 = vadd.f32 %v478, -1.4531521
    %v520 = vadd.f32 %v479, -1.4531521
    %v521 = vadd.f32 %v480, -1.4531521
    %v522 = vadd.f32 %v481, -1.4531521
    %v523 = vadd.f32 %v482, -1.4531521
    %v524 = vadd.f32 %v483, -1.4531521
    %v525 = vadd.f32 %v484, -1.4531521
    %v526 = vadd.f32 %v485, -1.4531521
    %v527 = vadd.f32 %v486, -1.4531521
    %v528 = vadd.f32 %v487, -1.4531521
    %v529 = vadd.f32 %v488, -1.4531521
    %v530 = vadd.f32 %v489, -1.4531521
    %v531 = vadd.f32 %v490, -1.4531521
    %v532 = vadd.f32 %v491, -1.4531521
    %v533 = vadd.f32 %v492, -1.4531521
    %v534 = vmul.f32 %v411, %v493
    %v535 = vmul.f32 %v412, %v494
    %v536 = vmul.f32 %v413, %v495
    %v537 = vmul.f32 %v414, %v496
    %v538 = vmul.f32 %v415, %v497
    %v539 = vmul.f32 %v416, %v498
    %v540 = vmul.f32 %v417, %v499
    %v541 = vmul.f32 %v418, %v500
    %v542 = vmul.f32 %v419, %v501
    %v543 = vmul.f32 %v420, %v502
    %v544 = vmul.f32 %v421, %v503
    %v545 = vmul.f32 %v422, %v504
    %v546 = vmul.f32 %v423, %v505
    %v547 = vmul.f32 %v424, %v506
    %v548 = vmul.f32 %v425, %v507
    %v549 = vmul.f32 %v426, %v508
    %v550 = vmul.f32 %v427, %v509
    %v551 = vmul.f32 %v428, %v510
    %v552 = vmul.f32 %v429, %v511
    %v553 = vmul.f32 %v430, %v512
    %v554 = vmul.f32 %v431, %v513
    %v555 = vmul.f32 %v432, %v514
    %v556 = vmul.f32 %v433, %v515
    %v557 = vmul.f32 %v434, %v516
    %v558 = vmul.f32 %v435, %v517
    %v559 = vmul.f32 %v436, %v518
    %v560 = vmul.f32 %v437, %v519
    %v561 = vmul.f32 %v438, %v520
    %v562 = vmul.f32 %v439, %v521
    %v563 = vmul.f32 %v440, %v522
    %v564 = vmul.f32 %v441, %v523
    %v565 = vmul.f32 %v442, %v524
    %v566 = vmul.f32 %v443, %v525
    %v567 = vmul.f32 %v444, %v526
    %v568 = vmul.f32 %v445, %v527
    %v569 = vmul.f32 %v446, %v528
    %v570 = vmul.f32 %v447, %v529
    %v571 = vmul.f32 %v448, %v530
    %v572 = vmul.f32 %v449, %v531
    %v573 = vmul.f32 %v450, %v532
    %v574 = vmul.f32 %v451, %v533
    %v575 = vadd.f32 %v534, 1.4214138
    %v576 = vadd.f32 %v535, 1.4214138
    %v577 = vadd.f32 %v536, 1.4214138
    %v578 = vadd.f32 %v537, 1.4214138
    %v579 = vadd.f32 %v538, 1.4214138
    %v580 = vadd.f32 %v539, 1.4214138
    %v581 = vadd.f32 %v540, 1.4214138
    %v582 = vadd.f32 %v541, 1.4214138
    %v583 = vadd.f32 %v542, 1.4214138
    %v584 = vadd.f32 %v543, 1.4214138
    %v585 = vadd.f32 %v544, 1.4214138
    %v586 = vadd.f32 %v545, 1.4214138
    %v587 = vadd.f32 %v546, 1.4214138
    %v588 = vadd.f32 %v547, 1.4214138
    %v589 = vadd.f32 %v548, 1.4214138
    %v590 = vadd.f32 %v549, 1.4214138
    %v591 = vadd.f32 %v550, 1.4214138
    %v592 = vadd.f32 %v551, 1.4214138
    %v593 = vadd.f32 %v552, 1.4214138
    %v594 = vadd.f32 %v553, 1.4214138
    %v595 = vadd.f32 %v554, 1.4214138
    %v596 = vadd.f32 %v555, 1.4214138
    %v597 = vadd.f32 %v556, 1.4214138
    %v598 = vadd.f32 %v557, 1.4214138
    %v599 = vadd.f32 %v558, 1.4214138
    %v600 = vadd.f32 %v559, 1.4214138
    %v601 = vadd.f32 %v560, 1.4214138
    %v602 = vadd.f32 %v561, 1.4214138
    %v603 = vadd.f32 %v562, 1.4214138
    %v604 = vadd.f32 %v563, 1.4214138
    %v605 = vadd.f32 %v564, 1.4214138
    %v606 = vadd.f32 %v565, 1.4214138
    %v607 = vadd.f32 %v566, 1.4214138
    %v608 = vadd.f32 %v567, 1.4214138
    %v609 = vadd.f32 %v568, 1.4214138
    %v610 = vadd.f32 %v569, 1.4214138
    %v611 = vadd.f32 %v570, 1.4214138
    %v612 = vadd.f32 %v571, 1.4214138
    %v613 = vadd.f32 %v572, 1.4214138
    %v614 = vadd.f32 %v573, 1.4214138
    %v615 = vadd.f32 %v574, 1.4214138
    %v616 = vmul.f32 %v411, %v575
    %v617 = vmul.f32 %v412, %v576
    %v618 = vmul.f32 %v413, %v577
    %v619 = vmul.f32 %v414, %v578
    %v620 = vmul.f32 %v415, %v579
    %v621 = vmul.f32 %v416, %v580
    %v622 = vmul.f32 %v417, %v581
    %v623 = vmul.f32 %v418, %v582
    %v624 = vmul.f32 %v419, %v583
    %v625 = vmul.f32 %v420, %v584
    %v626 = vmul.f32 %v421, %v585
    %v627 = vmul.f32 %v422, %v586
    %v628 = vmul.f32 %v423, %v587
    %v629 = vmul.f32 %v424, %v588
    %v630 = vmul.f32 %v425, %v589
    %v631 = vmul.f32 %v426, %v590
    %v632 = vmul.f32 %v427, %v591
    %v633 = vmul.f32 %v428, %v592
    %v634 = vmul.f32 %v429, %v593
    %v635 = vmul.f32 %v430, %v594
    %v636 = vmul.f32 %v431, %v595
    %v637 = vmul.f32 %v432, %v596
    %v638 = vmul.f32 %v433, %v597
    %v639 = vmul.f32 %v434, %v598
    %v640 = vmul.f32 %v435, %v599
    %v641 = vmul.f32 %v436, %v600
    %v642 = vmul.f32 %v437, %v601
    %v643 = vmul.f32 %v438, %v602
    %v644 = vmul.f32 %v439, %v603
    %v645 = vmul.f32 %v440, %v604
    %v646 = vmul.f32 %v441, %v605
    %v647 = vmul.f32 %v442, %v606
    %v648 = vmul.f32 %v443, %v607
    %v649 = vmul.f32 %v444, %v608
    %v650 = vmul.f32 %v445, %v609
    %v651 = vmul.f32 %v446, %v610
    %v652 = vmul.f32 %v447, %v611
    %v653 = vmul.f32 %v448, %v612
    %v654 = vmul.f32 %v449, %v613
    %v655 = vmul.f32 %v450, %v614
    %v656 = vmul.f32 %v451, %v615
    %v657 = vadd.f32 %v616, -0.28449672
    %v658 = vadd.f32 %v617, -0.28449672
    %v659 = vadd.f32 %v618, -0.28449672
    %v660 = vadd.f32 %v619, -0.28449672
    %v661 = vadd.f32 %v620, -0.28449672
    %v662 = vadd.f32 %v621, -0.28449672
    %v663 = vadd.f32 %v622, -0.28449672
    %v664 = vadd.f32 %v623, -0.28449672
    %v665 = vadd.f32 %v624, -0.28449672
    %v666 = vadd.f32 %v625, -0.28449672
    %v667 = vadd.f32 %v626, -0.28449672
    %v668 = vadd.f32 %v627, -0.28449672
    %v669 = vadd.f32 %v628, -0.28449672
    %v670 = vadd.f32 %v629, -0.28449672
    %v671 = vadd.f32 %v630, -0.28449672
    %v672 = vadd.f32 %v631, -0.28449672
    %v673 = vadd.f32 %v632, -0.28449672
    %v674 = vadd.f32 %v633, -0.28449672
    %v675 = vadd.f32 %v634, -0.28449672
    %v676 = vadd.f32 %v635, -0.28449672
    %v677 = vadd.f32 %v636, -0.28449672
    %v678 = vadd.f32 %v637, -0.28449672
    %v679 = vadd.f32 %v638, -0.28449672
    %v680 = vadd.f32 %v639, -0.28449672
    %v681 = vadd.f32 %v640, -0.28449672
    %v682 = vadd.f32 %v641, -0.28449672
    %v683 = vadd.f32 %v642, -0.28449672
    %v684 = vadd.f32 %v643, -0.28449672
    %v685 = vadd.f32 %v644, -0.28449672
    %v686 = vadd.f32 %v645, -0.28449672
    %v687 = vadd.f32 %v646, -0.28449672
    %v688 = vadd.f32 %v647, -0.28449672
    %v689 = vadd.f32 %v648, -0.28449672
    %v690 = vadd.f32 %v649, -0.28449672
    %v691 = vadd.f32 %v650, -0.28449672
    %v692 = vadd.f32 %v651, -0.28449672
    %v693 = vadd.f32 %v652, -0.28449672
    %v694 = vadd.f32 %v653, -0.28449672
    %v695 = vadd.f32 %v654, -0.28449672
    %v696 = vadd.f32 %v655, -0.28449672
    %v697 = vadd.f32 %v656, -0.28449672
    %v698 = vmul.f32 %v411, %v657
    %v699 = vmul.f32 %v412, %v658
    %v700 = vmul.f32 %v413, %v659
    %v701 = vmul.f32 %v414, %v660
    %v702 = vmul.f32 %v415, %v661
    %v703 = vmul.f32 %v416, %v662
    %v704 = vmul.f32 %v417, %v663
    %v705 = vmul.f32 %v418, %v664
    %v706 = vmul.f32 %v419, %v665
    %v707 = vmul.f32 %v420, %v666
    %v708 = vmul.f32 %v421, %v667
    %v709 = vmul.f32 %v422, %v668
    %v710 = vmul.f32 %v423, %v669
    %v711 = vmul.f32 %v424, %v670
    %v712 = vmul.f32 %v425, %v671
    %v713 = vmul.f32 %v426, %v672
    %v714 = vmul.f32 %v427, %v673
    %v715 = vmul.f32 %v428, %v674
    %v716 = vmul.f32 %v429, %v675
    %v717 = vmul.f32 %v430, %v676
    %v718 = vmul.f32 %v431, %v677
    %v719 = vmul.f32 %v432, %v678
    %v720 = vmul.f32 %v433, %v679
    %v721 = vmul.f32 %v434, %v680
    %v722 = vmul.f32 %v435, %v681
    %v723 = vmul.f32 %v436, %v682
    %v724 = vmul.f32 %v437, %v683
    %v725 = vmul.f32 %v438, %v684
    %v726 = vmul.f32 %v439, %v685
    %v727 = vmul.f32 %v440, %v686
    %v728 = vmul.f32 %v441, %v687
    %v729 = vmul.f32 %v442, %v688
    %v730 = vmul.f32 %v443, %v689
    %v731 = vmul.f32 %v444, %v690
    %v732 = vmul.f32 %v445, %v691
    %v733 = vmul.f32 %v446, %v692
    %v734 = vmul.f32 %v447, %v693
    %v735 = vmul.f32 %v448, %v694
    %v736 = vmul.f32 %v449, %v695
    %v737 = vmul.f32 %v450, %v696
    %v738 = vmul.f32 %v451, %v697
    %v739 = vadd.f32 %v698, 0.2548296
    %v740 = vadd.f32 %v699, 0.2548296
    %v741 = vadd.f32 %v700, 0.2548296
    %v742 = vadd.f32 %v701, 0.2548296
    %v743 = vadd.f32 %v702, 0.2548296
    %v744 = vadd.f32 %v703, 0.2548296
    %v745 = vadd.f32 %v704, 0.2548296
    %v746 = vadd.f32 %v705, 0.2548296
    %v747 = vadd.f32 %v706, 0.2548296
    %v748 = vadd.f32 %v707, 0.2548296
    %v749 = vadd.f32 %v708, 0.2548296
    %v750 = vadd.f32 %v709, 0.2548296
    %v751 = vadd.f32 %v710, 0.2548296
    %v752 = vadd.f32 %v711, 0.2548296
    %v753 = vadd.f32 %v712, 0.2548296
    %v754 = vadd.f32 %v713, 0.2548296
    %v755 = vadd.f32 %v714, 0.2548296
    %v756 = vadd.f32 %v715, 0.2548296
    %v757 = vadd.f32 %v716, 0.2548296
    %v758 = vadd.f32 %v717, 0.2548296
    %v759 = vadd.f32 %v718, 0.2548296
    %v760 = vadd.f32 %v719, 0.2548296
    %v761 = vadd.f32 %v720, 0.2548296
    %v762 = vadd.f32 %v721, 0.2548296
    %v763 = vadd.f32 %v722, 0.2548296
    %v764 = vadd.f32 %v723, 0.2548296
    %v765 = vadd.f32 %v724, 0.2548296
    %v766 = vadd.f32 %v725, 0.2548296
    %v767 = vadd.f32 %v726, 0.2548296
    %v768 = vadd.f32 %v727, 0.2548296
    %v769 = vadd.f32 %v728, 0.2548296
    %v770 = vadd.f32 %v729, 0.2548296
    %v771 = vadd.f32 %v730, 0.2548296
    %v772 = vadd.f32 %v731, 0.2548296
    %v773 = vadd.f32 %v732, 0.2548296
    %v774 = vadd.f32 %v733, 0.2548296
    %v775 = vadd.f32 %v734, 0.2548296
    %v776 = vadd.f32 %v735, 0.2548296
    %v777 = vadd.f32 %v736, 0.2548296
    %v778 = vadd.f32 %v737, 0.2548296
    %v779 = vadd.f32 %v738, 0.2548296
    %v780 = vmul.f32 %v411, %v739
    %v781 = vmul.f32 %v412, %v740
    %v782 = vmul.f32 %v413, %v741
    %v783 = vmul.f32 %v414, %v742
    %v784 = vmul.f32 %v415, %v743
    %v785 = vmul.f32 %v416, %v744
    %v786 = vmul.f32 %v417, %v745
    %v787 = vmul.f32 %v418, %v746
    %v788 = vmul.f32 %v419, %v747
    %v789 = vmul.f32 %v420, %v748
    %v790 = vmul.f32 %v421, %v749
    %v791 = vmul.f32 %v422, %v750
    %v792 = vmul.f32 %v423, %v751
    %v793 = vmul.f32 %v424, %v752
    %v794 = vmul.f32 %v425, %v753
    %v795 = vmul.f32 %v426, %v754
    %v796 = vmul.f32 %v427, %v755
    %v797 = vmul.f32 %v428, %v756
    %v798 = vmul.f32 %v429, %v757
    %v799 = vmul.f32 %v430, %v758
    %v800 = vmul.f32 %v431, %v759
    %v801 = vmul.f32 %v432, %v760
    %v802 = vmul.f32 %v433, %v761
    %v803 = vmul.f32 %v434, %v762
    %v804 = vmul.f32 %v435, %v763
    %v805 = vmul.f32 %v436, %v764
    %v806 = vmul.f32 %v437, %v765
    %v807 = vmul.f32 %v438, %v766
    %v808 = vmul.f32 %v439, %v767
    %v809 = vmul.f32 %v440, %v768
    %v810 = vmul.f32 %v441, %v769
    %v811 = vmul.f32 %v442, %v770
    %v812 = vmul.f32 %v443, %v771
    %v813 = vmul.f32 %v444, %v772
    %v814 = vmul.f32 %v445, %v773
    %v815 = vmul.f32 %v446, %v774
    %v816 = vmul.f32 %v447, %v775
    %v817 = vmul.f32 %v448, %v776
    %v818 = vmul.f32 %v449, %v777
    %v819 = vmul.f32 %v450, %v778
    %v820 = vmul.f32 %v451, %v779
    %v821 = vsub.f32 0.0, %v288
    %v822 = vsub.f32 0.0, %v289
    %v823 = vsub.f32 0.0, %v290
    %v824 = vsub.f32 0.0, %v291
    %v825 = vsub.f32 0.0, %v292
    %v826 = vsub.f32 0.0, %v293
    %v827 = vsub.f32 0.0, %v294
    %v828 = vsub.f32 0.0, %v295
    %v829 = vsub.f32 0.0, %v296
    %v830 = vsub.f32 0.0, %v297
    %v831 = vsub.f32 0.0, %v298
    %v832 = vsub.f32 0.0, %v299
    %v833 = vsub.f32 0.0, %v300
    %v834 = vsub.f32 0.0, %v301
    %v835 = vsub.f32 0.0, %v302
    %v836 = vsub.f32 0.0, %v303
    %v837 = vsub.f32 0.0, %v304
    %v838 = vsub.f32 0.0, %v305
    %v839 = vsub.f32 0.0, %v306
    %v840 = vsub.f32 0.0, %v307
    %v841 = vsub.f32 0.0, %v308
    %v842 = vsub.f32 0.0, %v309
    %v843 = vsub.f32 0.0, %v310
    %v844 = vsub.f32 0.0, %v311
    %v845 = vsub.f32 0.0, %v312
    %v846 = vsub.f32 0.0, %v313
    %v847 = vsub.f32 0.0, %v314
    %v848 = vsub.f32 0.0, %v315
    %v849 = vsub.f32 0.0, %v316
    %v850 = vsub.f32 0.0, %v317
    %v851 = vsub.f32 0.0, %v318
    %v852 = vsub.f32 0.0, %v319
    %v853 = vsub.f32 0.0, %v320
    %v854 = vsub.f32 0.0, %v321
    %v855 = vsub.f32 0.0, %v322
    %v856 = vsub.f32 0.0, %v323
    %v857 = vsub.f32 0.0, %v324
    %v858 = vsub.f32 0.0, %v325
    %v859 = vsub.f32 0.0, %v326
    %v860 = vsub.f32 0.0, %v327
    %v861 = vsub.f32 0.0, %v328
    %v862 = vmul.f32 %v821, %v288
    %v863 = vmul.f32 %v822, %v289
    %v864 = vmul.f32 %v823, %v290
    %v865 = vmul.f32 %v824, %v291
    %v866 = vmul.f32 %v825, %v292
    %v867 = vmul.f32 %v826, %v293
    %v868 = vmul.f32 %v827, %v294
    %v869 = vmul.f32 %v828, %v295
    %v870 = vmul.f32 %v829, %v296
    %v871 = vmul.f32 %v830, %v297
    %v872 = vmul.f32 %v831, %v298
    %v873 = vmul.f32 %v832, %v299
    %v874 = vmul.f32 %v833, %v300
    %v875 = vmul.f32 %v834, %v301
    %v876 = vmul.f32 %v835, %v302
    %v877 = vmul.f32 %v836, %v303
    %v878 = vmul.f32 %v837, %v304
    %v879 = vmul.f32 %v838, %v305
    %v880 = vmul.f32 %v839, %v306
    %v881 = vmul.f32 %v840, %v307
    %v882 = vmul.f32 %v841, %v308
    %v883 = vmul.f32 %v842, %v309
    %v884 = vmul.f32 %v843, %v310
    %v885 = vmul.f32 %v844, %v311
    %v886 = vmul.f32 %v845, %v312
    %v887 = vmul.f32 %v846, %v313
    %v888 = vmul.f32 %v847, %v314
    %v889 = vmul.f32 %v848, %v315
    %v890 = vmul.f32 %v849, %v316
    %v891 = vmul.f32 %v850, %v317
    %v892 = vmul.f32 %v851, %v318
    %v893 = vmul.f32 %v852, %v319
    %v894 = vmul.f32 %v853, %v320
    %v895 = vmul.f32 %v854, %v321
    %v896 = vmul.f32 %v855, %v322
    %v897 = vmul.f32 %v856, %v323
    %v898 = vmul.f32 %v857, %v324
    %v899 = vmul.f32 %v858, %v325
    %v900 = vmul.f32 %v859, %v326
    %v901 = vmul.f32 %v860, %v327
    %v902 = vmul.f32 %v861, %v328
    %v903 = vmul.f32 %v862, 1.442695
    %v904 = vpow.pop %v903
    %v905 = vmul.f32 %v863, 1.442695
    %v906 = vpow.pop %v905
    %v907 = vmul.f32 %v864, 1.442695
    %v908 = vpow.pop %v907
    %v909 = vmul.f32 %v865, 1.442695
    %v910 = vpow.pop %v909
    %v911 = vmul.f32 %v866, 1.442695
    %v912 = vpow.pop %v911
    %v913 = vmul.f32 %v867, 1.442695
    %v914 = vpow.pop %v913
    %v915 = vmul.f32 %v868, 1.442695
    %v916 = vpow.pop %v915
    %v917 = vmul.f32 %v869, 1.442695
    %v918 = vpow.pop %v917
    %v919 = vmul.f32 %v870, 1.442695
    %v920 = vpow.pop %v919
    %v921 = vmul.f32 %v871, 1.442695
    %v922 = vpow.pop %v921
    %v923 = vmul.f32 %v872, 1.442695
    %v924 = vpow.pop %v923
    %v925 = vmul.f32 %v873, 1.442695
    %v926 = vpow.pop %v925
    %v927 = vmul.f32 %v874, 1.442695
    %v928 = vpow.pop %v927
    %v929 = vmul.f32 %v875, 1.442695
    %v930 = vpow.pop %v929
    %v931 = vmul.f32 %v876, 1.442695
    %v932 = vpow.pop %v931
    %v933 = vmul.f32 %v877, 1.442695
    %v934 = vpow.pop %v933
    %v935 = vmul.f32 %v878, 1.442695
    %v936 = vpow.pop %v935
    %v937 = vmul.f32 %v879, 1.442695
    %v938 = vpow.pop %v937
    %v939 = vmul.f32 %v880, 1.442695
    %v940 = vpow.pop %v939
    %v941 = vmul.f32 %v881, 1.442695
    %v942 = vpow.pop %v941
    %v943 = vmul.f32 %v882, 1.442695
    %v944 = vpow.pop %v943
    %v945 = vmul.f32 %v883, 1.442695
    %v946 = vpow.pop %v945
    %v947 = vmul.f32 %v884, 1.442695
    %v948 = vpow.pop %v947
    %v949 = vmul.f32 %v885, 1.442695
    %v950 = vpow.pop %v949
    %v951 = vmul.f32 %v886, 1.442695
    %v952 = vpow.pop %v951
    %v953 = vmul.f32 %v887, 1.442695
    %v954 = vpow.pop %v953
    %v955 = vmul.f32 %v888, 1.442695
    %v956 = vpow.pop %v955
    %v957 = vmul.f32 %v889, 1.442695
    %v958 = vpow.pop %v957
    %v959 = vmul.f32 %v890, 1.442695
    %v960 = vpow.pop %v959
    %v961 = vmul.f32 %v891, 1.442695
    %v962 = vpow.pop %v961
    %v963 = vmul.f32 %v892, 1.442695
    %v964 = vpow.pop %v963
    %v965 = vmul.f32 %v893, 1.442695
    %v966 = vpow.pop %v965
    %v967 = vmul.f32 %v894, 1.442695
    %v968 = vpow.pop %v967
    %v969 = vmul.f32 %v895, 1.442695
    %v970 = vpow.pop %v969
    %v971 = vmul.f32 %v896, 1.442695
    %v972 = vpow.pop %v971
    %v973 = vmul.f32 %v897, 1.442695
    %v974 = vpow.pop %v973
    %v975 = vmul.f32 %v898, 1.442695
    %v976 = vpow.pop %v975
    %v977 = vmul.f32 %v899, 1.442695
    %v978 = vpow.pop %v977
    %v979 = vmul.f32 %v900, 1.442695
    %v980 = vpow.pop %v979
    %v981 = vmul.f32 %v901, 1.442695
    %v982 = vpow.pop %v981
    %v983 = vmul.f32 %v902, 1.442695
    %v984 = vpow.pop %v983
    %v985 = vmul.f32 %v780, %v904
    %v986 = vmul.f32 %v781, %v906
    %v987 = vmul.f32 %v782, %v908
    %v988 = vmul.f32 %v783, %v910
    %v989 = vmul.f32 %v784, %v912
    %v990 = vmul.f32 %v785, %v914
    %v991 = vmul.f32 %v786, %v916
    %v992 = vmul.f32 %v787, %v918
    %v993 = vmul.f32 %v788, %v920
    %v994 = vmul.f32 %v789, %v922
    %v995 = vmul.f32 %v790, %v924
    %v996 = vmul.f32 %v791, %v926
    %v997 = vmul.f32 %v792, %v928
    %v998 = vmul.f32 %v793, %v930
    %v999 = vmul.f32 %v794, %v932
    %v1000 = vmul.f32 %v795, %v934
    %v1001 = vmul.f32 %v796, %v936
    %v1002 = vmul.f32 %v797, %v938
    %v1003 = vmul.f32 %v798, %v940
    %v1004 = vmul.f32 %v799, %v942
    %v1005 = vmul.f32 %v800, %v944
    %v1006 = vmul.f32 %v801, %v946
    %v1007 = vmul.f32 %v802, %v948
    %v1008 = vmul.f32 %v803, %v950
    %v1009 = vmul.f32 %v804, %v952
    %v1010 = vmul.f32 %v805, %v954
    %v1011 = vmul.f32 %v806, %v956
    %v1012 = vmul.f32 %v807, %v958
    %v1013 = vmul.f32 %v808, %v960
    %v1014 = vmul.f32 %v809, %v962
    %v1015 = vmul.f32 %v810, %v964
    %v1016 = vmul.f32 %v811, %v966
    %v1017 = vmul.f32 %v812, %v968
    %v1018 = vmul.f32 %v813, %v970
    %v1019 = vmul.f32 %v814, %v972
    %v1020 = vmul.f32 %v815, %v974
    %v1021 = vmul.f32 %v816, %v976
    %v1022 = vmul.f32 %v817, %v978
    %v1023 = vmul.f32 %v818, %v980
    %v1024 = vmul.f32 %v819, %v982
    %v1025 = vmul.f32 %v820, %v984
    %v1026 = vsub.f32 1.0, %v985
    %v1027 = vsub.f32 1.0, %v986
    %v1028 = vsub.f32 1.0, %v987
    %v1029 = vsub.f32 1.0, %v988
    %v1030 = vsub.f32 1.0, %v989
    %v1031 = vsub.f32 1.0, %v990
    %v1032 = vsub.f32 1.0, %v991
    %v1033 = vsub.f32 1.0, %v992
    %v1034 = vsub.f32 1.0, %v993
    %v1035 = vsub.f32 1.0, %v994
    %v1036 = vsub.f32 1.0, %v995
    %v1037 = vsub.f32 1.0, %v996
    %v1038 = vsub.f32 1.0, %v997
    %v1039 = vsub.f32 1.0, %v998
    %v1040 = vsub.f32 1.0, %v999
    %v1041 = vsub.f32 1.0, %v1000
    %v1042 = vsub.f32 1.0, %v1001
    %v1043 = vsub.f32 1.0, %v1002
    %v1044 = vsub.f32 1.0, %v1003
    %v1045 = vsub.f32 1.0, %v1004
    %v1046 = vsub.f32 1.0, %v1005
    %v1047 = vsub.f32 1.0, %v1006
    %v1048 = vsub.f32 1.0, %v1007
    %v1049 = vsub.f32 1.0, %v1008
    %v1050 = vsub.f32 1.0, %v1009
    %v1051 = vsub.f32 1.0, %v1010
    %v1052 = vsub.f32 1.0, %v1011
    %v1053 = vsub.f32 1.0, %v1012
    %v1054 = vsub.f32 1.0, %v1013
    %v1055 = vsub.f32 1.0, %v1014
    %v1056 = vsub.f32 1.0, %v1015
    %v1057 = vsub.f32 1.0, %v1016
    %v1058 = vsub.f32 1.0, %v1017
    %v1059 = vsub.f32 1.0, %v1018
    %v1060 = vsub.f32 1.0, %v1019
    %v1061 = vsub.f32 1.0, %v1020
    %v1062 = vsub.f32 1.0, %v1021
    %v1063 = vsub.f32 1.0, %v1022
    %v1064 = vsub.f32 1.0, %v1023
    %v1065 = vsub.f32 1.0, %v1024
    %v1066 = vsub.f32 1.0, %v1025
    %v1067 = vmul.f32 %v247, %v1026
    %v1068 = vmul.f32 %v248, %v1027
    %v1069 = vmul.f32 %v249, %v1028
    %v1070 = vmul.f32 %v250, %v1029
    %v1071 = vmul.f32 %v251, %v1030
    %v1072 = vmul.f32 %v252, %v1031
    %v1073 = vmul.f32 %v253, %v1032
    %v1074 = vmul.f32 %v254, %v1033
    %v1075 = vmul.f32 %v255, %v1034
    %v1076 = vmul.f32 %v256, %v1035
    %v1077 = vmul.f32 %v257, %v1036
    %v1078 = vmul.f32 %v258, %v1037
    %v1079 = vmul.f32 %v259, %v1038
    %v1080 = vmul.f32 %v260, %v1039
    %v1081 = vmul.f32 %v261, %v1040
    %v1082 = vmul.f32 %v262, %v1041
    %v1083 = vmul.f32 %v263, %v1042
    %v1084 = vmul.f32 %v264, %v1043
    %v1085 = vmul.f32 %v265, %v1044
    %v1086 = vmul.f32 %v266, %v1045
    %v1087 = vmul.f32 %v267, %v1046
    %v1088 = vmul.f32 %v268, %v1047
    %v1089 = vmul.f32 %v269, %v1048
    %v1090 = vmul.f32 %v270, %v1049
    %v1091 = vmul.f32 %v271, %v1050
    %v1092 = vmul.f32 %v272, %v1051
    %v1093 = vmul.f32 %v273, %v1052
    %v1094 = vmul.f32 %v274, %v1053
    %v1095 = vmul.f32 %v275, %v1054
    %v1096 = vmul.f32 %v276, %v1055
    %v1097 = vmul.f32 %v277, %v1056
    %v1098 = vmul.f32 %v278, %v1057
    %v1099 = vmul.f32 %v279, %v1058
    %v1100 = vmul.f32 %v280, %v1059
    %v1101 = vmul.f32 %v281, %v1060
    %v1102 = vmul.f32 %v282, %v1061
    %v1103 = vmul.f32 %v283, %v1062
    %v1104 = vmul.f32 %v284, %v1063
    %v1105 = vmul.f32 %v285, %v1064
    %v1106 = vmul.f32 %v286, %v1065
    %v1107 = vmul.f32 %v287, %v1066
    %v1108 = vadd.f32 %v1067, 1.0
    %v1109 = vadd.f32 %v1068, 1.0
    %v1110 = vadd.f32 %v1069, 1.0
    %v1111 = vadd.f32 %v1070, 1.0
    %v1112 = vadd.f32 %v1071, 1.0
    %v1113 = vadd.f32 %v1072, 1.0
    %v1114 = vadd.f32 %v1073, 1.0
    %v1115 = vadd.f32 %v1074, 1.0
    %v1116 = vadd.f32 %v1075, 1.0
    %v1117 = vadd.f32 %v1076, 1.0
    %v1118 = vadd.f32 %v1077, 1.0
    %v1119 = vadd.f32 %v1078, 1.0
    %v1120 = vadd.f32 %v1079, 1.0
    %v1121 = vadd.f32 %v1080, 1.0
    %v1122 = vadd.f32 %v1081, 1.0
    %v1123 = vadd.f32 %v1082, 1.0
    %v1124 = vadd.f32 %v1083, 1.0
    %v1125 = vadd.f32 %v1084, 1.0
    %v1126 = vadd.f32 %v1085, 1.0
    %v1127 = vadd.f32 %v1086, 1.0
    %v1128 = vadd.f32 %v1087, 1.0
    %v1129 = vadd.f32 %v1088, 1.0
    %v1130 = vadd.f32 %v1089, 1.0
    %v1131 = vadd.f32 %v1090, 1.0
    %v1132 = vadd.f32 %v1091, 1.0
    %v1133 = vadd.f32 %v1092, 1.0
    %v1134 = vadd.f32 %v1093, 1.0
    %v1135 = vadd.f32 %v1094, 1.0
    %v1136 = vadd.f32 %v1095, 1.0
    %v1137 = vadd.f32 %v1096, 1.0
    %v1138 = vadd.f32 %v1097, 1.0
    %v1139 = vadd.f32 %v1098, 1.0
    %v1140 = vadd.f32 %v1099, 1.0
    %v1141 = vadd.f32 %v1100, 1.0
    %v1142 = vadd.f32 %v1101, 1.0
    %v1143 = vadd.f32 %v1102, 1.0
    %v1144 = vadd.f32 %v1103, 1.0
    %v1145 = vadd.f32 %v1104, 1.0
    %v1146 = vadd.f32 %v1105, 1.0
    %v1147 = vadd.f32 %v1106, 1.0
    %v1148 = vadd.f32 %v1107, 1.0
    %v1149 = vmul.f32 %v124, %v1108
    %v1150 = vmul.f32 %v125, %v1109
    %v1151 = vmul.f32 %v126, %v1110
    %v1152 = vmul.f32 %v127, %v1111
    %v1153 = vmul.f32 %v128, %v1112
    %v1154 = vmul.f32 %v129, %v1113
    %v1155 = vmul.f32 %v130, %v1114
    %v1156 = vmul.f32 %v131, %v1115
    %v1157 = vmul.f32 %v132, %v1116
    %v1158 = vmul.f32 %v133, %v1117
    %v1159 = vmul.f32 %v134, %v1118
    %v1160 = vmul.f32 %v135, %v1119
    %v1161 = vmul.f32 %v136, %v1120
    %v1162 = vmul.f32 %v137, %v1121
    %v1163 = vmul.f32 %v138, %v1122
    %v1164 = vmul.f32 %v139, %v1123
    %v1165 = vmul.f32 %v140, %v1124
    %v1166 = vmul.f32 %v141, %v1125
    %v1167 = vmul.f32 %v142, %v1126
    %v1168 = vmul.f32 %v143, %v1127
    %v1169 = vmul.f32 %v144, %v1128
    %v1170 = vmul.f32 %v145, %v1129
    %v1171 = vmul.f32 %v146, %v1130
    %v1172 = vmul.f32 %v147, %v1131
    %v1173 = vmul.f32 %v148, %v1132
    %v1174 = vmul.f32 %v149, %v1133
    %v1175 = vmul.f32 %v150, %v1134
    %v1176 = vmul.f32 %v151, %v1135
    %v1177 = vmul.f32 %v152, %v1136
    %v1178 = vmul.f32 %v153, %v1137
    %v1179 = vmul.f32 %v154, %v1138
    %v1180 = vmul.f32 %v155, %v1139
    %v1181 = vmul.f32 %v156, %v1140
    %v1182 = vmul.f32 %v157, %v1141
    %v1183 = vmul.f32 %v158, %v1142
    %v1184 = vmul.f32 %v159, %v1143
    %v1185 = vmul.f32 %v160, %v1144
    %v1186 = vmul.f32 %v161, %v1145
    %v1187 = vmul.f32 %v162, %v1146
    %v1188 = vmul.f32 %v163, %v1147
    %v1189 = vmul.f32 %v164, %v1148
    %v1190 = vld [vmem:[#allocation5] sm:$0xff]
    %v1191 = vld [vmem:[#allocation5 + $0x8] sm:$0xff]
    %v1192 = vld [vmem:[#allocation5 + $0x10] sm:$0xff]
    %v1193 = vld [vmem:[#allocation5 + $0x18] sm:$0xff]
    %v1194 = vld [vmem:[#allocation5 + $0x20] sm:$0xff]
    %v1195 = vld [vmem:[#allocation5 + $0x28] sm:$0xff]
    %v1196 = vld [vmem:[#allocation5 + $0x30] sm:$0xff]
    %v1197 = vld [vmem:[#allocation5 + $0x38] sm:$0xff]
    %v1198 = vld [vmem:[#allocation5 + $0x40] sm:$0xff]
    %v1199 = vld [vmem:[#allocation5 + $0x48] sm:$0xff]
    %v1200 = vld [vmem:[#allocation5 + $0x50] sm:$0xff]
    %v1201 = vld [vmem:[#allocation5 + $0x58] sm:$0xff]
    %v1202 = vld [vmem:[#allocation5 + $0x60] sm:$0xff]
    %v1203 = vld [vmem:[#allocation5 + $0x68] sm:$0xff]
    %v1204 = vld [vmem:[#allocation5 + $0x70] sm:$0xff]
    %v1205 = vld [vmem:[#allocation5 + $0x78] sm:$0xff]
    %v1206 = vld [vmem:[#allocation5 + $0x80] sm:$0xff]
    %v1207 = vld [vmem:[#allocation5 + $0x88] sm:$0xff]
    %v1208 = vld [vmem:[#allocation5 + $0x90] sm:$0xff]
    %v1209 = vld [vmem:[#allocation5 + $0x98] sm:$0xff]
    %v1210 = vld [vmem:[#allocation5 + $0xa0] sm:$0xff]
    %v1211 = vld [vmem:[#allocation5 + $0xa8] sm:$0xff]
    %v1212 = vld [vmem:[#allocation5 + $0xb0] sm:$0xff]
    %v1213 = vld [vmem:[#allocation5 + $0xb8] sm:$0xff]
    %v1214 = vld [vmem:[#allocation5 + $0xc0] sm:$0xff]
    %v1215 = vld [vmem:[#allocation5 + $0xc8] sm:$0xff]
    %v1216 = vld [vmem:[#allocation5 + $0xd0] sm:$0xff]
    %v1217 = vld [vmem:[#allocation5 + $0xd8] sm:$0xff]
    %v1218 = vld [vmem:[#allocation5 + $0xe0] sm:$0xff]
    %v1219 = vld [vmem:[#allocation5 + $0xe8] sm:$0xff]
    %v1220 = vld [vmem:[#allocation5 + $0xf0] sm:$0xff]
    %v1221 = vld [vmem:[#allocation5 + $0xf8] sm:$0xff]
    %v1222 = vld [vmem:[#allocation5 + $0x100] sm:$0xff]
    %v1223 = vld [vmem:[#allocation5 + $0x108] sm:$0xff]
    %v1224 = vld [vmem:[#allocation5 + $0x110] sm:$0xff]
    %v1225 = vld [vmem:[#allocation5 + $0x118] sm:$0xff]
    %v1226 = vld [vmem:[#allocation5 + $0x120] sm:$0xff]
    %v1227 = vld [vmem:[#allocation5 + $0x128] sm:$0xff]
    %v1228 = vld [vmem:[#allocation5 + $0x130] sm:$0xff]
    %v1229 = vld [vmem:[#allocation5 + $0x138] sm:$0xff]
    %v1230 = vld [vmem:[#allocation5 + $0x140] sm:$0xff]
    %v1231 = vld [vmem:[#allocation5 + $0x148] sm:$0xff]
    %v1232 = vld [vmem:[#allocation5 + $0x150] sm:$0xff]
    %v1233 = vld [vmem:[#allocation5 + $0x158] sm:$0xff]
    %v1234 = vld [vmem:[#allocation5 + $0x160] sm:$0xff]
    %v1235 = vld [vmem:[#allocation5 + $0x168] sm:$0xff]
    %v1236 = vld [vmem:[#allocation5 + $0x170] sm:$0xff]
    %v1237 = vld [vmem:[#allocation5 + $0x178] sm:$0xff]
    %v1238 = vld [vmem:[#allocation5 + $0x180] sm:$0xff]
    %v1239 = vld [vmem:[#allocation5 + $0x188] sm:$0xff]
    %v1240 = vld [vmem:[#allocation5 + $0x190] sm:$0xff]
    %v1241 = vld [vmem:[#allocation5 + $0x198] sm:$0xff]
    %v1242 = vld [vmem:[#allocation5 + $0x1a0] sm:$0xff]
    %v1243 = vld [vmem:[#allocation5 + $0x1a8] sm:$0xff]
    %v1244 = vld [vmem:[#allocation5 + $0x1b0] sm:$0xff]
    %v1245 = vld [vmem:[#allocation5 + $0x1b8] sm:$0xff]
    %v1246 = vld [vmem:[#allocation5 + $0x1c0] sm:$0xff]
    %v1247 = vld [vmem:[#allocation5 + $0x1c8] sm:$0xff]
    %v1248 = vld [vmem:[#allocation5 + $0x1d0] sm:$0xff]
    %v1249 = vld [vmem:[#allocation5 + $0x1d8] sm:$0xff]
    %v1250 = vld [vmem:[#allocation5 + $0x1e0] sm:$0xff]
    %v1251 = vld [vmem:[#allocation5 + $0x1e8] sm:$0xff]
    %v1252 = vld [vmem:[#allocation5 + $0x1f0] sm:$0xff]
    %v1253 = vld [vmem:[#allocation5 + $0x1f8] sm:$0xff]
    %v1254 = vld [vmem:[#allocation5 + $0x200] sm:$0xff]
    %v1255 = vld [vmem:[#allocation5 + $0x208] sm:$0xff]
    %v1256 = vld [vmem:[#allocation5 + $0x210] sm:$0xff]
    %v1257 = vld [vmem:[#allocation5 + $0x218] sm:$0xff]
    %v1258 = vld [vmem:[#allocation5 + $0x220] sm:$0xff]
    %v1259 = vld [vmem:[#allocation5 + $0x228] sm:$0xff]
    %v1260 = vld [vmem:[#allocation5 + $0x230] sm:$0xff]
    %v1261 = vld [vmem:[#allocation5 + $0x238] sm:$0xff]
    %v1262 = vld [vmem:[#allocation5 + $0x240] sm:$0xff]
    %v1263 = vld [vmem:[#allocation5 + $0x248] sm:$0xff]
    %v1264 = vld [vmem:[#allocation5 + $0x250] sm:$0xff]
    %v1265 = vld [vmem:[#allocation5 + $0x258] sm:$0xff]
    %v1266 = vld [vmem:[#allocation5 + $0x260] sm:$0xff]
    %v1267 = vld [vmem:[#allocation5 + $0x268] sm:$0xff]
    %v1268 = vld [vmem:[#allocation5 + $0x270] sm:$0xff]
    %v1269 = vld [vmem:[#allocation5 + $0x278] sm:$0xff]
    %v1270 = vld [vmem:[#allocation5 + $0x280] sm:$0xff]
    %v1271 = vld [vmem:[#allocation5 + $0x288] sm:$0xff]
    %v1272 = vld [vmem:[#allocation5 + $0x290] sm:$0xff]
    %v1273 = vld [vmem:[#allocation5 + $0x298] sm:$0xff]
    %v1274 = vld [vmem:[#allocation5 + $0x2a0] sm:$0xff]
    %v1275 = vld [vmem:[#allocation5 + $0x2a8] sm:$0xff]
    %v1276 = vld [vmem:[#allocation5 + $0x2b0] sm:$0xff]
    %v1277 = vld [vmem:[#allocation5 + $0x2b8] sm:$0xff]
    %v1278 = vld [vmem:[#allocation5 + $0x2c0] sm:$0xff]
    %v1279 = vld [vmem:[#allocation5 + $0x2c8] sm:$0xff]
    %v1280 = vld [vmem:[#allocation5 + $0x2d0] sm:$0xff]
    %v1281 = vld [vmem:[#allocation5 + $0x2d8] sm:$0xff]
    %v1282 = vld [vmem:[#allocation5 + $0x2e0] sm:$0xff]
    %v1283 = vld [vmem:[#allocation5 + $0x2e8] sm:$0xff]
    %v1284 = vld [vmem:[#allocation5 + $0x2f0] sm:$0xff]
    %v1285 = vld [vmem:[#allocation5 + $0x2f8] sm:$0xff]
    %v1286 = vld [vmem:[#allocation5 + $0x300] sm:$0xff]
    %v1287 = vld [vmem:[#allocation5 + $0x308] sm:$0xff]
    %v1288 = vld [vmem:[#allocation5 + $0x310] sm:$0xff]
    %v1289 = vld [vmem:[#allocation5 + $0x318] sm:$0xff]
    %v1290 = vld [vmem:[#allocation5 + $0x320] sm:$0xff]
    %v1291 = vld [vmem:[#allocation5 + $0x328] sm:$0xff]
    %v1292 = vld [vmem:[#allocation5 + $0x330] sm:$0xff]
    %v1293 = vld [vmem:[#allocation5 + $0x338] sm:$0xff]
    %v1294 = vld [vmem:[#allocation5 + $0x340] sm:$0xff]
    %v1295 = vld [vmem:[#allocation5 + $0x348] sm:$0xff]
    %v1296 = vld [vmem:[#allocation5 + $0x350] sm:$0xff]
    %v1297 = vld [vmem:[#allocation5 + $0x358] sm:$0xff]
    %v1298 = vld [vmem:[#allocation5 + $0x360] sm:$0xff]
    %v1299 = vld [vmem:[#allocation5 + $0x368] sm:$0xff]
    %v1300 = vld [vmem:[#allocation5 + $0x370] sm:$0xff]
    %v1301 = vld [vmem:[#allocation5 + $0x378] sm:$0xff]
    %v1302 = vld [vmem:[#allocation5 + $0x380] sm:$0xff]
    %v1303 = vld [vmem:[#allocation5 + $0x388] sm:$0xff]
    %v1304 = vld [vmem:[#allocation5 + $0x390] sm:$0xff]
    %v1305 = vld [vmem:[#allocation5 + $0x398] sm:$0xff]
    %v1306 = vld [vmem:[#allocation5 + $0x3a0] sm:$0xff]
    %v1307 = vld [vmem:[#allocation5 + $0x3a8] sm:$0xff]
    %v1308 = vld [vmem:[#allocation5 + $0x3b0] sm:$0xff]
    %v1309 = vld [vmem:[#allocation5 + $0x3b8] sm:$0xff]
    %v1310 = vld [vmem:[#allocation5 + $0x3c0] sm:$0xff]
    %v1311 = vld [vmem:[#allocation5 + $0x3c8] sm:$0xff]
    %v1312 = vld [vmem:[#allocation5 + $0x3d0] sm:$0xff]
    %v1313 = vld [vmem:[#allocation5 + $0x3d8] sm:$0xff]
    %v1314 = vld [vmem:[#allocation5 + $0x3e0] sm:$0xff]
    %v1315 = vld [vmem:[#allocation5 + $0x3e8] sm:$0xff]
    %v1316 = vld [vmem:[#allocation5 + $0x3f0] sm:$0xff]
    %v1317 = vld [vmem:[#allocation5 + $0x3f8] sm:$0xff]
    %v1318 = vld [vmem:[#allocation5 + $0x400] sm:$0xff]
    %v1319 = vld [vmem:[#allocation5 + $0x408] sm:$0xff]
    %v1320 = vld [vmem:[#allocation5 + $0x410] sm:$0xff]
    %v1321 = vld [vmem:[#allocation5 + $0x418] sm:$0xff]
    %v1322 = vld [vmem:[#allocation5 + $0x420] sm:$0xff]
    %v1323 = vld [vmem:[#allocation5 + $0x428] sm:$0xff]
    %v1324 = vld [vmem:[#allocation5 + $0x430] sm:$0xff]
    %v1325 = vld [vmem:[#allocation5 + $0x438] sm:$0xff]
    %v1326 = vld [vmem:[#allocation5 + $0x440] sm:$0xff]
    %v1327 = vld [vmem:[#allocation5 + $0x448] sm:$0xff]
    %v1328 = vld [vmem:[#allocation5 + $0x450] sm:$0xff]
    %v1329 = vld [vmem:[#allocation5 + $0x458] sm:$0xff]
    %v1330 = vld [vmem:[#allocation5 + $0x460] sm:$0xff]
    %v1331 = vld [vmem:[#allocation5 + $0x468] sm:$0xff]
    %v1332 = vld [vmem:[#allocation5 + $0x470] sm:$0xff]
    %v1333 = vld [vmem:[#allocation5 + $0x478] sm:$0xff]
    %v1334 = vld [vmem:[#allocation5 + $0x480] sm:$0xff]
    %v1335 = vld [vmem:[#allocation5 + $0x488] sm:$0xff]
    %v1336 = vld [vmem:[#allocation5 + $0x490] sm:$0xff]
    %v1337 = vld [vmem:[#allocation5 + $0x498] sm:$0xff]
    %v1338 = vld [vmem:[#allocation5 + $0x4a0] sm:$0xff]
    %v1339 = vld [vmem:[#allocation5 + $0x4a8] sm:$0xff]
    %v1340 = vld [vmem:[#allocation5 + $0x4b0] sm:$0xff]
    %v1341 = vld [vmem:[#allocation5 + $0x4b8] sm:$0xff]
    %v1342 = vld [vmem:[#allocation5 + $0x4c0] sm:$0xff]
    %v1343 = vld [vmem:[#allocation5 + $0x4c8] sm:$0xff]
    %v1344 = vld [vmem:[#allocation5 + $0x4d0] sm:$0xff]
    %v1345 = vld [vmem:[#allocation5 + $0x4d8] sm:$0xff]
    %v1346 = vld [vmem:[#allocation5 + $0x4e0] sm:$0xff]
    %v1347 = vld [vmem:[#allocation5 + $0x4e8] sm:$0xff]
    %v1348 = vld [vmem:[#allocation5 + $0x4f0] sm:$0xff]
    %v1349 = vld [vmem:[#allocation5 + $0x4f8] sm:$0xff]
    %v1350 = vld [vmem:[#allocation5 + $0x500] sm:$0xff]
    %v1351 = vld [vmem:[#allocation5 + $0x508] sm:$0xff]
    %v1352 = vld [vmem:[#allocation5 + $0x510] sm:$0xff]
    %v1353 = vld [vmem:[#allocation5 + $0x518] sm:$0xff]
    %v1354 = vld [vmem:[#allocation5 + $0x520] sm:$0xff]
    %v1355 = vld [vmem:[#allocation5 + $0x528] sm:$0xff]
    %v1356 = vld [vmem:[#allocation5 + $0x530] sm:$0xff]
    %v1357 = vld [vmem:[#allocation5 + $0x538] sm:$0xff]
    %v1358 = vld [vmem:[#allocation5 + $0x540] sm:$0xff]
    %v1359 = vld [vmem:[#allocation5 + $0x548] sm:$0xff]
    %v1360 = vld [vmem:[#allocation5 + $0x550] sm:$0xff]
    %v1361 = vld [vmem:[#allocation5 + $0x558] sm:$0xff]
    %v1362 = vld [vmem:[#allocation5 + $0x560] sm:$0xff]
    %v1363 = vld [vmem:[#allocation5 + $0x568] sm:$0xff]
    %v1364 = vld [vmem:[#allocation5 + $0x570] sm:$0xff]
    %v1365 = vld [vmem:[#allocation5 + $0x578] sm:$0xff]
    %v1366 = vld [vmem:[#allocation5 + $0x580] sm:$0xff]
    %v1367 = vld [vmem:[#allocation5 + $0x588] sm:$0xff]
    %v1368 = vld [vmem:[#allocation5 + $0x590] sm:$0xff]
    %v1369 = vld [vmem:[#allocation5 + $0x598] sm:$0xff]
    %v1370 = vld [vmem:[#allocation5 + $0x5a0] sm:$0xff]
    %v1371 = vld [vmem:[#allocation5 + $0x5a8] sm:$0xff]
    %v1372 = vld [vmem:[#allocation5 + $0x5b0] sm:$0xff]
    %v1373 = vld [vmem:[#allocation5 + $0x5b8] sm:$0xff]
    %v1374 = vld [vmem:[#allocation5 + $0x5c0] sm:$0xff]
    %v1375 = vld [vmem:[#allocation5 + $0x5c8] sm:$0xff]
    %v1376 = vld [vmem:[#allocation5 + $0x5d0] sm:$0xff]
    %v1377 = vld [vmem:[#allocation5 + $0x5d8] sm:$0xff]
    %v1378 = vld [vmem:[#allocation5 + $0x5e0] sm:$0xff]
    %v1379 = vld [vmem:[#allocation5 + $0x5e8] sm:$0xff]
    %v1380 = vld [vmem:[#allocation5 + $0x5f0] sm:$0xff]
    %v1381 = vld [vmem:[#allocation5 + $0x5f8] sm:$0xff]
    %v1382 = vld [vmem:[#allocation5 + $0x600] sm:$0xff]
    %v1383 = vld [vmem:[#allocation5 + $0x608] sm:$0xff]
    %v1384 = vld [vmem:[#allocation5 + $0x610] sm:$0xff]
    %v1385 = vld [vmem:[#allocation5 + $0x618] sm:$0xff]
    %v1386 = vld [vmem:[#allocation5 + $0x620] sm:$0xff]
    %v1387 = vld [vmem:[#allocation5 + $0x628] sm:$0xff]
    %v1388 = vld [vmem:[#allocation5 + $0x630] sm:$0xff]
    %v1389 = vld [vmem:[#allocation5 + $0x638] sm:$0xff]
    %v1390 = vld [vmem:[#allocation5 + $0x640] sm:$0xff]
    %v1391 = vld [vmem:[#allocation5 + $0x648] sm:$0xff]
    %v1392 = vld [vmem:[#allocation5 + $0x650] sm:$0xff]
    %v1393 = vld [vmem:[#allocation5 + $0x658] sm:$0xff]
    %v1394 = vld [vmem:[#allocation5 + $0x660] sm:$0xff]
    %v1395 = vld [vmem:[#allocation5 + $0x668] sm:$0xff]
    %v1396 = vld [vmem:[#allocation5 + $0x670] sm:$0xff]
    %v1397 = vld [vmem:[#allocation5 + $0x678] sm:$0xff]
    %v1398 = vld [vmem:[#allocation5 + $0x680] sm:$0xff]
    %v1399 = vld [vmem:[#allocation5 + $0x688] sm:$0xff]
    %v1400 = vld [vmem:[#allocation5 + $0x690] sm:$0xff]
    %v1401 = vld [vmem:[#allocation5 + $0x698] sm:$0xff]
    %v1402 = vld [vmem:[#allocation5 + $0x6a0] sm:$0xff]
    %v1403 = vld [vmem:[#allocation5 + $0x6a8] sm:$0xff]
    %v1404 = vld [vmem:[#allocation5 + $0x6b0] sm:$0xff]
    %v1405 = vld [vmem:[#allocation5 + $0x6b8] sm:$0xff]
    %v1406 = vld [vmem:[#allocation5 + $0x6c0] sm:$0xff]
    %v1407 = vld [vmem:[#allocation5 + $0x6c8] sm:$0xff]
    %v1408 = vld [vmem:[#allocation5 + $0x6d0] sm:$0xff]
    %v1409 = vld [vmem:[#allocation5 + $0x6d8] sm:$0xff]
    %v1410 = vld [vmem:[#allocation5 + $0x6e0] sm:$0xff]
    %v1411 = vld [vmem:[#allocation5 + $0x6e8] sm:$0xff]
    %v1412 = vld [vmem:[#allocation5 + $0x6f0] sm:$0xff]
    %v1413 = vld [vmem:[#allocation5 + $0x6f8] sm:$0xff]
    %v1414 = vld [vmem:[#allocation5 + $0x700] sm:$0xff]
    %v1415 = vld [vmem:[#allocation5 + $0x708] sm:$0xff]
    %v1416 = vld [vmem:[#allocation5 + $0x710] sm:$0xff]
    %v1417 = vld [vmem:[#allocation5 + $0x718] sm:$0xff]
    %v1418 = vld [vmem:[#allocation5 + $0x720] sm:$0xff]
    %v1419 = vld [vmem:[#allocation5 + $0x728] sm:$0xff]
    %v1420 = vld [vmem:[#allocation5 + $0x730] sm:$0xff]
    %v1421 = vld [vmem:[#allocation5 + $0x738] sm:$0xff]
    %v1422 = vld [vmem:[#allocation5 + $0x740] sm:$0xff]
    %v1423 = vld [vmem:[#allocation5 + $0x748] sm:$0xff]
    %v1424 = vld [vmem:[#allocation5 + $0x750] sm:$0xff]
    %v1425 = vld [vmem:[#allocation5 + $0x758] sm:$0xff]
    %v1426 = vld [vmem:[#allocation5 + $0x760] sm:$0xff]
    %v1427 = vld [vmem:[#allocation5 + $0x768] sm:$0xff]
    %v1428 = vld [vmem:[#allocation5 + $0x770] sm:$0xff]
    %v1429 = vld [vmem:[#allocation5 + $0x778] sm:$0xff]
    %v1430 = vld [vmem:[#allocation5 + $0x780] sm:$0xff]
    %v1431 = vld [vmem:[#allocation5 + $0x788] sm:$0xff]
    %v1432 = vld [vmem:[#allocation5 + $0x790] sm:$0xff]
    %v1433 = vld [vmem:[#allocation5 + $0x798] sm:$0xff]
    %v1434 = vld [vmem:[#allocation5 + $0x7a0] sm:$0xff]
    %v1435 = vld [vmem:[#allocation5 + $0x7a8] sm:$0xff]
    %v1436 = vld [vmem:[#allocation5 + $0x7b0] sm:$0xff]
    %v1437 = vld [vmem:[#allocation5 + $0x7b8] sm:$0xff]
    %v1438 = vld [vmem:[#allocation5 + $0x7c0] sm:$0xff]
    %v1439 = vld [vmem:[#allocation5 + $0x7c8] sm:$0xff]
    %v1440 = vld [vmem:[#allocation5 + $0x7d0] sm:$0xff]
    %v1441 = vld [vmem:[#allocation5 + $0x7d8] sm:$0xff]
    %v1442 = vld [vmem:[#allocation5 + $0x7e0] sm:$0xff]
    %v1443 = vld [vmem:[#allocation5 + $0x7e8] sm:$0xff]
    %v1444 = vld [vmem:[#allocation5 + $0x7f0] sm:$0xff]
    %v1445 = vld [vmem:[#allocation5 + $0x7f8] sm:$0xff]
    %v1446 = vld [vmem:[#allocation5 + $0x800] sm:$0xff]
    %v1447 = vld [vmem:[#allocation5 + $0x808] sm:$0xff]
    %v1448 = vld [vmem:[#allocation5 + $0x810] sm:$0xff]
    %v1449 = vld [vmem:[#allocation5 + $0x818] sm:$0xff]
    %v1450 = vld [vmem:[#allocation5 + $0x820] sm:$0xff]
    %v1451 = vld [vmem:[#allocation5 + $0x828] sm:$0xff]
    %v1452 = vld [vmem:[#allocation5 + $0x830] sm:$0xff]
    %v1453 = vld [vmem:[#allocation5 + $0x838] sm:$0xff]
    %v1454 = vld [vmem:[#allocation5 + $0x840] sm:$0xff]
    %v1455 = vld [vmem:[#allocation5 + $0x848] sm:$0xff]
    %v1456 = vld [vmem:[#allocation5 + $0x850] sm:$0xff]
    %v1457 = vld [vmem:[#allocation5 + $0x858] sm:$0xff]
    %v1458 = vld [vmem:[#allocation5 + $0x860] sm:$0xff]
    %v1459 = vld [vmem:[#allocation5 + $0x868] sm:$0xff]
    %v1460 = vld [vmem:[#allocation5 + $0x870] sm:$0xff]
    %v1461 = vld [vmem:[#allocation5 + $0x878] sm:$0xff]
    %v1462 = vld [vmem:[#allocation5 + $0x880] sm:$0xff]
    %v1463 = vld [vmem:[#allocation5 + $0x888] sm:$0xff]
    %v1464 = vld [vmem:[#allocation5 + $0x890] sm:$0xff]
    %v1465 = vld [vmem:[#allocation5 + $0x898] sm:$0xff]
    %v1466 = vld [vmem:[#allocation5 + $0x8a0] sm:$0xff]
    %v1467 = vld [vmem:[#allocation5 + $0x8a8] sm:$0xff]
    %v1468 = vld [vmem:[#allocation5 + $0x8b0] sm:$0xff]
    %v1469 = vld [vmem:[#allocation5 + $0x8b8] sm:$0xff]
    %v1470 = vld [vmem:[#allocation5 + $0x8c0] sm:$0xff]
    %v1471 = vld [vmem:[#allocation5 + $0x8c8] sm:$0xff]
    %v1472 = vld [vmem:[#allocation5 + $0x8d0] sm:$0xff]
    %v1473 = vld [vmem:[#allocation5 + $0x8d8] sm:$0xff]
    %v1474 = vld [vmem:[#allocation5 + $0x8e0] sm:$0xff]
    %v1475 = vld [vmem:[#allocation5 + $0x8e8] sm:$0xff]
    %v1476 = vld [vmem:[#allocation5 + $0x8f0] sm:$0xff]
    %v1477 = vld [vmem:[#allocation5 + $0x8f8] sm:$0xff]
    %v1478 = vld [vmem:[#allocation5 + $0x900] sm:$0xff]
    %v1479 = vld [vmem:[#allocation5 + $0x908] sm:$0xff]
    %v1480 = vld [vmem:[#allocation5 + $0x910] sm:$0xff]
    %v1481 = vld [vmem:[#allocation5 + $0x918] sm:$0xff]
    %v1482 = vld [vmem:[#allocation5 + $0x920] sm:$0xff]
    %v1483 = vld [vmem:[#allocation5 + $0x928] sm:$0xff]
    %v1484 = vld [vmem:[#allocation5 + $0x930] sm:$0xff]
    %v1485 = vld [vmem:[#allocation5 + $0x938] sm:$0xff]
    %v1486 = vld [vmem:[#allocation5 + $0x940] sm:$0xff]
    %v1487 = vld [vmem:[#allocation5 + $0x948] sm:$0xff]
    %v1488 = vld [vmem:[#allocation5 + $0x950] sm:$0xff]
    %v1489 = vld [vmem:[#allocation5 + $0x958] sm:$0xff]
    %v1490 = vld [vmem:[#allocation5 + $0x960] sm:$0xff]
    %v1491 = vld [vmem:[#allocation5 + $0x968] sm:$0xff]
    %v1492 = vld [vmem:[#allocation5 + $0x970] sm:$0xff]
    %v1493 = vld [vmem:[#allocation5 + $0x978] sm:$0xff]
    %v1494 = vld [vmem:[#allocation5 + $0x980] sm:$0xff]
    %v1495 = vld [vmem:[#allocation5 + $0x988] sm:$0xff]
    %v1496 = vld [vmem:[#allocation5 + $0x990] sm:$0xff]
    %v1497 = vld [vmem:[#allocation5 + $0x998] sm:$0xff]
    %v1498 = vld [vmem:[#allocation5 + $0x9a0] sm:$0xff]
    %v1499 = vld [vmem:[#allocation5 + $0x9a8] sm:$0xff]
    %v1500 = vld [vmem:[#allocation5 + $0x9b0] sm:$0xff]
    %v1501 = vld [vmem:[#allocation5 + $0x9b8] sm:$0xff]
    %v1502 = vld [vmem:[#allocation5 + $0x9c0] sm:$0xff]
    %v1503 = vld [vmem:[#allocation5 + $0x9c8] sm:$0xff]
    %v1504 = vld [vmem:[#allocation5 + $0x9d0] sm:$0xff]
    %v1505 = vld [vmem:[#allocation5 + $0x9d8] sm:$0xff]
    %v1506 = vld [vmem:[#allocation5 + $0x9e0] sm:$0xff]
    %v1507 = vld [vmem:[#allocation5 + $0x9e8] sm:$0xff]
    %v1508 = vld [vmem:[#allocation5 + $0x9f0] sm:$0xff]
    %v1509 = vld [vmem:[#allocation5 + $0x9f8] sm:$0xff]
    %v1510 = vld [vmem:[#allocation5 + $0xa00] sm:$0xff]
    %v1511 = vld [vmem:[#allocation5 + $0xa08] sm:$0xff]
    %v1512 = vld [vmem:[#allocation5 + $0xa10] sm:$0xff]
    %v1513 = vld [vmem:[#allocation5 + $0xa18] sm:$0xff]
    %v1514 = vld [vmem:[#allocation5 + $0xa20] sm:$0xff]
    %v1515 = vld [vmem:[#allocation5 + $0xa28] sm:$0xff]
    %v1516 = vld [vmem:[#allocation5 + $0xa30] sm:$0xff]
    %v1517 = vld [vmem:[#allocation5 + $0xa38] sm:$0xff]
    %v1518 = vld [vmem:[#allocation5 + $0xa40] sm:$0xff]
    %v1519 = vld [vmem:[#allocation5 + $0xa48] sm:$0xff]
    %v1520 = vld [vmem:[#allocation5 + $0xa50] sm:$0xff]
    %v1521 = vld [vmem:[#allocation5 + $0xa58] sm:$0xff]
    %v1522 = vld [vmem:[#allocation5 + $0xa60] sm:$0xff]
    %v1523 = vld [vmem:[#allocation5 + $0xa68] sm:$0xff]
    %v1524 = vld [vmem:[#allocation5 + $0xa70] sm:$0xff]
    %v1525 = vld [vmem:[#allocation5 + $0xa78] sm:$0xff]
    %v1526 = vld [vmem:[#allocation5 + $0xa80] sm:$0xff]
    %v1527 = vld [vmem:[#allocation5 + $0xa88] sm:$0xff]
    %v1528 = vld [vmem:[#allocation5 + $0xa90] sm:$0xff]
    %v1529 = vld [vmem:[#allocation5 + $0xa98] sm:$0xff]
    %v1530 = vld [vmem:[#allocation5 + $0xaa0] sm:$0xff]
    %v1531 = vld [vmem:[#allocation5 + $0xaa8] sm:$0xff]
    %v1532 = vld [vmem:[#allocation5 + $0xab0] sm:$0xff]
    %v1533 = vld [vmem:[#allocation5 + $0xab8] sm:$0xff]
    %v1534 = vld [vmem:[#allocation5 + $0xac0] sm:$0xff]
    %v1535 = vld [vmem:[#allocation5 + $0xac8] sm:$0xff]
    %v1536 = vld [vmem:[#allocation5 + $0xad0] sm:$0xff]
    %v1537 = vld [vmem:[#allocation5 + $0xad8] sm:$0xff]
    %v1538 = vld [vmem:[#allocation5 + $0xae0] sm:$0xff]
    %v1539 = vld [vmem:[#allocation5 + $0xae8] sm:$0xff]
    %v1540 = vld [vmem:[#allocation5 + $0xaf0] sm:$0xff]
    %v1541 = vld [vmem:[#allocation5 + $0xaf8] sm:$0xff]
    %v1542 = vld [vmem:[#allocation5 + $0xb00] sm:$0xff]
    %v1543 = vld [vmem:[#allocation5 + $0xb08] sm:$0xff]
    %v1544 = vld [vmem:[#allocation5 + $0xb10] sm:$0xff]
    %v1545 = vld [vmem:[#allocation5 + $0xb18] sm:$0xff]
    %v1546 = vld [vmem:[#allocation5 + $0xb20] sm:$0xff]
    %v1547 = vld [vmem:[#allocation5 + $0xb28] sm:$0xff]
    %v1548 = vld [vmem:[#allocation5 + $0xb30] sm:$0xff]
    %v1549 = vld [vmem:[#allocation5 + $0xb38] sm:$0xff]
    %v1550 = vld [vmem:[#allocation5 + $0xb40] sm:$0xff]
    %v1551 = vld [vmem:[#allocation5 + $0xb48] sm:$0xff]
    %v1552 = vld [vmem:[#allocation5 + $0xb50] sm:$0xff]
    %v1553 = vld [vmem:[#allocation5 + $0xb58] sm:$0xff]
    %v1554 = vld [vmem:[#allocation5 + $0xb60] sm:$0xff]
    %v1555 = vld [vmem:[#allocation5 + $0xb68] sm:$0xff]
    %v1556 = vld [vmem:[#allocation5 + $0xb70] sm:$0xff]
    %v1557 = vld [vmem:[#allocation5 + $0xb78] sm:$0xff]
    %v1558 = vld [vmem:[#allocation5 + $0xb80] sm:$0xff]
    %v1559 = vld [vmem:[#allocation5 + $0xb88] sm:$0xff]
    %v1560 = vld [vmem:[#allocation5 + $0xb90] sm:$0xff]
    %v1561 = vld [vmem:[#allocation5 + $0xb98] sm:$0xff]
    %v1562 = vld [vmem:[#allocation5 + $0xba0] sm:$0xff]
    %v1563 = vld [vmem:[#allocation5 + $0xba8] sm:$0xff]
    %v1564 = vld [vmem:[#allocation5 + $0xbb0] sm:$0xff]
    %v1565 = vld [vmem:[#allocation5 + $0xbb8] sm:$0xff]
    %v1566 = vld [vmem:[#allocation5 + $0xbc0] sm:$0xff]
    %v1567 = vld [vmem:[#allocation5 + $0xbc8] sm:$0xff]
    %v1568 = vld [vmem:[#allocation5 + $0xbd0] sm:$0xff]
    %v1569 = vld [vmem:[#allocation5 + $0xbd8] sm:$0xff]
    %v1570 = vld [vmem:[#allocation5 + $0xbe0] sm:$0xff]
    %v1571 = vld [vmem:[#allocation5 + $0xbe8] sm:$0xff]
    %v1572 = vld [vmem:[#allocation5 + $0xbf0] sm:$0xff]
    %v1573 = vld [vmem:[#allocation5 + $0xbf8] sm:$0xff]
    %v1574 = vld [vmem:[#allocation5 + $0xc00] sm:$0xff]
    %v1575 = vld [vmem:[#allocation5 + $0xc08] sm:$0xff]
    %v1576 = vld [vmem:[#allocation5 + $0xc10] sm:$0xff]
    %v1577 = vld [vmem:[#allocation5 + $0xc18] sm:$0xff]
    %v1578 = vld [vmem:[#allocation5 + $0xc20] sm:$0xff]
    %v1579 = vld [vmem:[#allocation5 + $0xc28] sm:$0xff]
    %v1580 = vld [vmem:[#allocation5 + $0xc30] sm:$0xff]
    %v1581 = vld [vmem:[#allocation5 + $0xc38] sm:$0xff]
    %v1582 = vld [vmem:[#allocation5 + $0xc40] sm:$0xff]
    %v1583 = vld [vmem:[#allocation5 + $0xc48] sm:$0xff]
    %v1584 = vld [vmem:[#allocation5 + $0xc50] sm:$0xff]
    %v1585 = vld [vmem:[#allocation5 + $0xc58] sm:$0xff]
    %v1586 = vld [vmem:[#allocation5 + $0xc60] sm:$0xff]
    %v1587 = vld [vmem:[#allocation5 + $0xc68] sm:$0xff]
    %v1588 = vld [vmem:[#allocation5 + $0xc70] sm:$0xff]
    %v1589 = vld [vmem:[#allocation5 + $0xc78] sm:$0xff]
    %v1590 = vld [vmem:[#allocation5 + $0xc80] sm:$0xff]
    %v1591 = vld [vmem:[#allocation5 + $0xc88] sm:$0xff]
    %v1592 = vld [vmem:[#allocation5 + $0xc90] sm:$0xff]
    %v1593 = vld [vmem:[#allocation5 + $0xc98] sm:$0xff]
    %v1594 = vld [vmem:[#allocation5 + $0xca0] sm:$0xff]
    %v1595 = vld [vmem:[#allocation5 + $0xca8] sm:$0xff]
    %v1596 = vld [vmem:[#allocation5 + $0xcb0] sm:$0xff]
    %v1597 = vld [vmem:[#allocation5 + $0xcb8] sm:$0xff]
    %v1598 = vld [vmem:[#allocation5 + $0xcc0] sm:$0xff]
    %v1599 = vld [vmem:[#allocation5 + $0xcc8] sm:$0xff]
    %v1600 = vld [vmem:[#allocation5 + $0xcd0] sm:$0xff]
    %v1601 = vld [vmem:[#allocation5 + $0xcd8] sm:$0xff]
    %v1602 = vld [vmem:[#allocation5 + $0xce0] sm:$0xff]
    %v1603 = vld [vmem:[#allocation5 + $0xce8] sm:$0xff]
    %v1604 = vld [vmem:[#allocation5 + $0xcf0] sm:$0xff]
    %v1605 = vld [vmem:[#allocation5 + $0xcf8] sm:$0xff]
    %v1606 = vld [vmem:[#allocation5 + $0xd00] sm:$0xff]
    %v1607 = vld [vmem:[#allocation5 + $0xd08] sm:$0xff]
    %v1608 = vld [vmem:[#allocation5 + $0xd10] sm:$0xff]
    %v1609 = vld [vmem:[#allocation5 + $0xd18] sm:$0xff]
    %v1610 = vld [vmem:[#allocation5 + $0xd20] sm:$0xff]
    %v1611 = vld [vmem:[#allocation5 + $0xd28] sm:$0xff]
    %v1612 = vld [vmem:[#allocation5 + $0xd30] sm:$0xff]
    %v1613 = vld [vmem:[#allocation5 + $0xd38] sm:$0xff]
    %v1614 = vld [vmem:[#allocation5 + $0xd40] sm:$0xff]
    %v1615 = vld [vmem:[#allocation5 + $0xd48] sm:$0xff]
    %v1616 = vld [vmem:[#allocation5 + $0xd50] sm:$0xff]
    %v1617 = vld [vmem:[#allocation5 + $0xd58] sm:$0xff]
    %v1618 = vld [vmem:[#allocation5 + $0xd60] sm:$0xff]
    %v1619 = vld [vmem:[#allocation5 + $0xd68] sm:$0xff]
    %v1620 = vld [vmem:[#allocation5 + $0xd70] sm:$0xff]
    %v1621 = vld [vmem:[#allocation5 + $0xd78] sm:$0xff]
    %v1622 = vld [vmem:[#allocation5 + $0xd80] sm:$0xff]
    %v1623 = vld [vmem:[#allocation5 + $0xd88] sm:$0xff]
    %v1624 = vld [vmem:[#allocation5 + $0xd90] sm:$0xff]
    %v1625 = vld [vmem:[#allocation5 + $0xd98] sm:$0xff]
    %v1626 = vld [vmem:[#allocation5 + $0xda0] sm:$0xff]
    %v1627 = vld [vmem:[#allocation5 + $0xda8] sm:$0xff]
    %v1628 = vld [vmem:[#allocation5 + $0xdb0] sm:$0xff]
    %v1629 = vld [vmem:[#allocation5 + $0xdb8] sm:$0xff]
    %v1630 = vld [vmem:[#allocation5 + $0xdc0] sm:$0xff]
    %v1631 = vld [vmem:[#allocation5 + $0xdc8] sm:$0xff]
    %v1632 = vld [vmem:[#allocation5 + $0xdd0] sm:$0xff]
    %v1633 = vld [vmem:[#allocation5 + $0xdd8] sm:$0xff]
    %v1634 = vld [vmem:[#allocation5 + $0xde0] sm:$0xff]
    %v1635 = vld [vmem:[#allocation5 + $0xde8] sm:$0xff]
    %v1636 = vld [vmem:[#allocation5 + $0xdf0] sm:$0xff]
    %v1637 = vld [vmem:[#allocation5 + $0xdf8] sm:$0xff]
    %v1638 = vld [vmem:[#allocation5 + $0xe00] sm:$0xff]
    %v1639 = vld [vmem:[#allocation5 + $0xe08] sm:$0xff]
    %v1640 = vld [vmem:[#allocation5 + $0xe10] sm:$0xff]
    %v1641 = vld [vmem:[#allocation5 + $0xe18] sm:$0xff]
    %v1642 = vld [vmem:[#allocation5 + $0xe20] sm:$0xff]
    %v1643 = vld [vmem:[#allocation5 + $0xe28] sm:$0xff]
    %v1644 = vld [vmem:[#allocation5 + $0xe30] sm:$0xff]
    %v1645 = vld [vmem:[#allocation5 + $0xe38] sm:$0xff]
    %v1646 = vld [vmem:[#allocation5 + $0xe40] sm:$0xff]
    %v1647 = vld [vmem:[#allocation5 + $0xe48] sm:$0xff]
    %v1648 = vld [vmem:[#allocation5 + $0xe50] sm:$0xff]
    %v1649 = vld [vmem:[#allocation5 + $0xe58] sm:$0xff]
    %v1650 = vld [vmem:[#allocation5 + $0xe60] sm:$0xff]
    %v1651 = vld [vmem:[#allocation5 + $0xe68] sm:$0xff]
    %v1652 = vld [vmem:[#allocation5 + $0xe70] sm:$0xff]
    %v1653 = vld [vmem:[#allocation5 + $0xe78] sm:$0xff]
    %v1654 = vld [vmem:[#allocation5 + $0xe80] sm:$0xff]
    %v1655 = vld [vmem:[#allocation5 + $0xe88] sm:$0xff]
    %v1656 = vld [vmem:[#allocation5 + $0xe90] sm:$0xff]
    %v1657 = vld [vmem:[#allocation5 + $0xe98] sm:$0xff]
    %v1658 = vld [vmem:[#allocation5 + $0xea0] sm:$0xff]
    %v1659 = vld [vmem:[#allocation5 + $0xea8] sm:$0xff]
    %v1660 = vld [vmem:[#allocation5 + $0xeb0] sm:$0xff]
    %v1661 = vld [vmem:[#allocation5 + $0xeb8] sm:$0xff]
    %v1662 = vld [vmem:[#allocation5 + $0xec0] sm:$0xff]
    %v1663 = vld [vmem:[#allocation5 + $0xec8] sm:$0xff]
    %v1664 = vld [vmem:[#allocation5 + $0xed0] sm:$0xff]
    %v1665 = vld [vmem:[#allocation5 + $0xed8] sm:$0xff]
    %v1666 = vld [vmem:[#allocation5 + $0xee0] sm:$0xff]
    %v1667 = vld [vmem:[#allocation5 + $0xee8] sm:$0xff]
    %v1668 = vld [vmem:[#allocation5 + $0xef0] sm:$0xff]
    %v1669 = vld [vmem:[#allocation5 + $0xef8] sm:$0xff]
    %v1670 = vld [vmem:[#allocation5 + $0xf00] sm:$0xff]
    %v1671 = vld [vmem:[#allocation5 + $0xf08] sm:$0xff]
    %v1672 = vld [vmem:[#allocation5 + $0xf10] sm:$0xff]
    %v1673 = vld [vmem:[#allocation5 + $0xf18] sm:$0xff]
    %v1674 = vld [vmem:[#allocation5 + $0xf20] sm:$0xff]
    %v1675 = vld [vmem:[#allocation5 + $0xf28] sm:$0xff]
    %v1676 = vld [vmem:[#allocation5 + $0xf30] sm:$0xff]
    %v1677 = vld [vmem:[#allocation5 + $0xf38] sm:$0xff]
    %v1678 = vld [vmem:[#allocation5 + $0xf40] sm:$0xff]
    %v1679 = vld [vmem:[#allocation5 + $0xf48] sm:$0xff]
    %v1680 = vld [vmem:[#allocation5 + $0xf50] sm:$0xff]
    %v1681 = vld [vmem:[#allocation5 + $0xf58] sm:$0xff]
    %v1682 = vld [vmem:[#allocation5 + $0xf60] sm:$0xff]
    %v1683 = vld [vmem:[#allocation5 + $0xf68] sm:$0xff]
    %v1684 = vld [vmem:[#allocation5 + $0xf70] sm:$0xff]
    %v1685 = vld [vmem:[#allocation5 + $0xf78] sm:$0xff]
    %v1686 = vld [vmem:[#allocation5 + $0xf80] sm:$0xff]
    %v1687 = vld [vmem:[#allocation5 + $0xf88] sm:$0xff]
    %v1688 = vld [vmem:[#allocation5 + $0xf90] sm:$0xff]
    %v1689 = vld [vmem:[#allocation5 + $0xf98] sm:$0xff]
    %v1690 = vld [vmem:[#allocation5 + $0xfa0] sm:$0xff]
    %v1691 = vld [vmem:[#allocation5 + $0xfa8] sm:$0xff]
    %v1692 = vld [vmem:[#allocation5 + $0xfb0] sm:$0xff]
    %v1693 = vld [vmem:[#allocation5 + $0xfb8] sm:$0xff]
    %v1694 = vld [vmem:[#allocation5 + $0xfc0] sm:$0xff]
    %v1695 = vld [vmem:[#allocation5 + $0xfc8] sm:$0xff]
    %v1696 = vld [vmem:[#allocation5 + $0xfd0] sm:$0xff]
    %v1697 = vld [vmem:[#allocation5 + $0xfd8] sm:$0xff]
    %v1698 = vld [vmem:[#allocation5 + $0xfe0] sm:$0xff]
    %v1699 = vld [vmem:[#allocation5 + $0xfe8] sm:$0xff]
    %v1700 = vld [vmem:[#allocation5 + $0xff0] sm:$0xff]
    %v1701 = vld [vmem:[#allocation5 + $0xff8] sm:$0xff]
    %v1702 = vld [vmem:[#allocation5 + $0x1000] sm:$0xff]
    %v1703 = vld [vmem:[#allocation5 + $0x1008] sm:$0xff]
    %v1704 = vld [vmem:[#allocation5 + $0x1010] sm:$0xff]
    %v1705 = vld [vmem:[#allocation5 + $0x1018] sm:$0xff]
    %v1706 = vld [vmem:[#allocation5 + $0x1020] sm:$0xff]
    %v1707 = vld [vmem:[#allocation5 + $0x1028] sm:$0xff]
    %v1708 = vld [vmem:[#allocation5 + $0x1030] sm:$0xff]
    %v1709 = vld [vmem:[#allocation5 + $0x1038] sm:$0xff]
    %v1710 = vld [vmem:[#allocation5 + $0x1040] sm:$0xff]
    %v1711 = vld [vmem:[#allocation5 + $0x1048] sm:$0xff]
    %v1712 = vld [vmem:[#allocation5 + $0x1050] sm:$0xff]
    %v1713 = vld [vmem:[#allocation5 + $0x1058] sm:$0xff]
    %v1714 = vld [vmem:[#allocation5 + $0x1060] sm:$0xff]
    %v1715 = vld [vmem:[#allocation5 + $0x1068] sm:$0xff]
    %v1716 = vld [vmem:[#allocation5 + $0x1070] sm:$0xff]
    %v1717 = vld [vmem:[#allocation5 + $0x1078] sm:$0xff]
    %v1718 = vld [vmem:[#allocation5 + $0x1080] sm:$0xff]
    %v1719 = vld [vmem:[#allocation5 + $0x1088] sm:$0xff]
    %v1720 = vld [vmem:[#allocation5 + $0x1090] sm:$0xff]
    %v1721 = vld [vmem:[#allocation5 + $0x1098] sm:$0xff]
    %v1722 = vld [vmem:[#allocation5 + $0x10a0] sm:$0xff]
    %v1723 = vld [vmem:[#allocation5 + $0x10a8] sm:$0xff]
    %v1724 = vld [vmem:[#allocation5 + $0x10b0] sm:$0xff]
    %v1725 = vld [vmem:[#allocation5 + $0x10b8] sm:$0xff]
    %v1726 = vld [vmem:[#allocation5 + $0x10c0] sm:$0xff]
    %v1727 = vld [vmem:[#allocation5 + $0x10c8] sm:$0xff]
    %v1728 = vld [vmem:[#allocation5 + $0x10d0] sm:$0xff]
    %v1729 = vld [vmem:[#allocation5 + $0x10d8] sm:$0xff]
    %v1730 = vld [vmem:[#allocation5 + $0x10e0] sm:$0xff]
    %v1731 = vld [vmem:[#allocation5 + $0x10e8] sm:$0xff]
    %v1732 = vld [vmem:[#allocation5 + $0x10f0] sm:$0xff]
    %v1733 = vld [vmem:[#allocation5 + $0x10f8] sm:$0xff]
    %v1734 = vld [vmem:[#allocation5 + $0x1100] sm:$0xff]
    %v1735 = vld [vmem:[#allocation5 + $0x1108] sm:$0xff]
    %v1736 = vld [vmem:[#allocation5 + $0x1110] sm:$0xff]
    %v1737 = vld [vmem:[#allocation5 + $0x1118] sm:$0xff]
    %v1738 = vld [vmem:[#allocation5 + $0x1120] sm:$0xff]
    %v1739 = vld [vmem:[#allocation5 + $0x1128] sm:$0xff]
    %v1740 = vld [vmem:[#allocation5 + $0x1130] sm:$0xff]
    %v1741 = vld [vmem:[#allocation5 + $0x1138] sm:$0xff]
    %v1742 = vld [vmem:[#allocation5 + $0x1140] sm:$0xff]
    %v1743 = vld [vmem:[#allocation5 + $0x1148] sm:$0xff]
    %v1744 = vld [vmem:[#allocation5 + $0x1150] sm:$0xff]
    %v1745 = vld [vmem:[#allocation5 + $0x1158] sm:$0xff]
    %v1746 = vld [vmem:[#allocation5 + $0x1160] sm:$0xff]
    %v1747 = vld [vmem:[#allocation5 + $0x1168] sm:$0xff]
    %v1748 = vld [vmem:[#allocation5 + $0x1170] sm:$0xff]
    %v1749 = vld [vmem:[#allocation5 + $0x1178] sm:$0xff]
    %v1750 = vld [vmem:[#allocation5 + $0x1180] sm:$0xff]
    %v1751 = vld [vmem:[#allocation5 + $0x1188] sm:$0xff]
    %v1752 = vld [vmem:[#allocation5 + $0x1190] sm:$0xff]
    %v1753 = vld [vmem:[#allocation5 + $0x1198] sm:$0xff]
    %v1754 = vld [vmem:[#allocation5 + $0x11a0] sm:$0xff]
    %v1755 = vld [vmem:[#allocation5 + $0x11a8] sm:$0xff]
    %v1756 = vld [vmem:[#allocation5 + $0x11b0] sm:$0xff]
    %v1757 = vld [vmem:[#allocation5 + $0x11b8] sm:$0xff]
    %v1758 = vld [vmem:[#allocation5 + $0x11c0] sm:$0xff]
    %v1759 = vld [vmem:[#allocation5 + $0x11c8] sm:$0xff]
    %v1760 = vld [vmem:[#allocation5 + $0x11d0] sm:$0xff]
    %v1761 = vld [vmem:[#allocation5 + $0x11d8] sm:$0xff]
    %v1762 = vld [vmem:[#allocation5 + $0x11e0] sm:$0xff]
    %v1763 = vld [vmem:[#allocation5 + $0x11e8] sm:$0xff]
    %v1764 = vld [vmem:[#allocation5 + $0x11f0] sm:$0xff]
    %v1765 = vld [vmem:[#allocation5 + $0x11f8] sm:$0xff]
    %v1766 = vld [vmem:[#allocation5 + $0x1200] sm:$0xff]
    %v1767 = vld [vmem:[#allocation5 + $0x1208] sm:$0xff]
    %v1768 = vld [vmem:[#allocation5 + $0x1210] sm:$0xff]
    %v1769 = vld [vmem:[#allocation5 + $0x1218] sm:$0xff]
    %v1770 = vld [vmem:[#allocation5 + $0x1220] sm:$0xff]
    %v1771 = vld [vmem:[#allocation5 + $0x1228] sm:$0xff]
    %v1772 = vld [vmem:[#allocation5 + $0x1230] sm:$0xff]
    %v1773 = vld [vmem:[#allocation5 + $0x1238] sm:$0xff]
    %v1774 = vld [vmem:[#allocation5 + $0x1240] sm:$0xff]
    %v1775 = vld [vmem:[#allocation5 + $0x1248] sm:$0xff]
    %v1776 = vld [vmem:[#allocation5 + $0x1250] sm:$0xff]
    %v1777 = vld [vmem:[#allocation5 + $0x1258] sm:$0xff]
    %v1778 = vld [vmem:[#allocation5 + $0x1260] sm:$0xff]
    %v1779 = vld [vmem:[#allocation5 + $0x1268] sm:$0xff]
    %v1780 = vld [vmem:[#allocation5 + $0x1270] sm:$0xff]
    %v1781 = vld [vmem:[#allocation5 + $0x1278] sm:$0xff]
    %v1782 = vld [vmem:[#allocation5 + $0x1280] sm:$0xff]
    %v1783 = vld [vmem:[#allocation5 + $0x1288] sm:$0xff]
    %v1784 = vld [vmem:[#allocation5 + $0x1290] sm:$0xff]
    %v1785 = vld [vmem:[#allocation5 + $0x1298] sm:$0xff]
    %v1786 = vld [vmem:[#allocation5 + $0x12a0] sm:$0xff]
    %v1787 = vld [vmem:[#allocation5 + $0x12a8] sm:$0xff]
    %v1788 = vld [vmem:[#allocation5 + $0x12b0] sm:$0xff]
    %v1789 = vld [vmem:[#allocation5 + $0x12b8] sm:$0xff]
    %v1790 = vld [vmem:[#allocation5 + $0x12c0] sm:$0xff]
    %v1791 = vld [vmem:[#allocation5 + $0x12c8] sm:$0xff]
    %v1792 = vld [vmem:[#allocation5 + $0x12d0] sm:$0xff]
    %v1793 = vld [vmem:[#allocation5 + $0x12d8] sm:$0xff]
    %v1794 = vld [vmem:[#allocation5 + $0x12e0] sm:$0xff]
    %v1795 = vld [vmem:[#allocation5 + $0x12e8] sm:$0xff]
    %v1796 = vld [vmem:[#allocation5 + $0x12f0] sm:$0xff]
    %v1797 = vld [vmem:[#allocation5 + $0x12f8] sm:$0xff]
    %v1798 = vld [vmem:[#allocation5 + $0x1300] sm:$0xff]
    %v1799 = vld [vmem:[#allocation5 + $0x1308] sm:$0xff]
    %v1800 = vld [vmem:[#allocation5 + $0x1310] sm:$0xff]
    %v1801 = vld [vmem:[#allocation5 + $0x1318] sm:$0xff]
    %v1802 = vld [vmem:[#allocation5 + $0x1320] sm:$0xff]
    %v1803 = vld [vmem:[#allocation5 + $0x1328] sm:$0xff]
    %v1804 = vld [vmem:[#allocation5 + $0x1330] sm:$0xff]
    %v1805 = vld [vmem:[#allocation5 + $0x1338] sm:$0xff]
    %v1806 = vld [vmem:[#allocation5 + $0x1340] sm:$0xff]
    %v1807 = vld [vmem:[#allocation5 + $0x1348] sm:$0xff]
    %v1808 = vld [vmem:[#allocation5 + $0x1350] sm:$0xff]
    %v1809 = vld [vmem:[#allocation5 + $0x1358] sm:$0xff]
    %v1810 = vld [vmem:[#allocation5 + $0x1360] sm:$0xff]
    %v1811 = vld [vmem:[#allocation5 + $0x1368] sm:$0xff]
    %v1812 = vld [vmem:[#allocation5 + $0x1370] sm:$0xff]
    %v1813 = vld [vmem:[#allocation5 + $0x1378] sm:$0xff]
    %v1814 = vld [vmem:[#allocation5 + $0x1380] sm:$0xff]
    %v1815 = vld [vmem:[#allocation5 + $0x1388] sm:$0xff]
    %v1816 = vld [vmem:[#allocation5 + $0x1390] sm:$0xff]
    %v1817 = vld [vmem:[#allocation5 + $0x1398] sm:$0xff]
    %v1818 = vld [vmem:[#allocation5 + $0x13a0] sm:$0xff]
    %v1819 = vld [vmem:[#allocation5 + $0x13a8] sm:$0xff]
    %v1820 = vld [vmem:[#allocation5 + $0x13b0] sm:$0xff]
    %v1821 = vld [vmem:[#allocation5 + $0x13b8] sm:$0xff]
    %v1822 = vld [vmem:[#allocation5 + $0x13c0] sm:$0xff]
    %v1823 = vld [vmem:[#allocation5 + $0x13c8] sm:$0xff]
    %v1824 = vld [vmem:[#allocation5 + $0x13d0] sm:$0xff]
    %v1825 = vld [vmem:[#allocation5 + $0x13d8] sm:$0xff]
    %v1826 = vld [vmem:[#allocation5 + $0x13e0] sm:$0xff]
    %v1827 = vld [vmem:[#allocation5 + $0x13e8] sm:$0xff]
    %v1828 = vld [vmem:[#allocation5 + $0x13f0] sm:$0xff]
    %v1829 = vld [vmem:[#allocation5 + $0x13f8] sm:$0xff]
    %v1830 = vld [vmem:[#allocation5 + $0x1400] sm:$0xff]
    %v1831 = vld [vmem:[#allocation5 + $0x1408] sm:$0xff]
    %v1832 = vld [vmem:[#allocation5 + $0x1410] sm:$0xff]
    %v1833 = vld [vmem:[#allocation5 + $0x1418] sm:$0xff]
    %v1834 = vld [vmem:[#allocation5 + $0x1420] sm:$0xff]
    %v1835 = vld [vmem:[#allocation5 + $0x1428] sm:$0xff]
    %v1836 = vld [vmem:[#allocation5 + $0x1430] sm:$0xff]
    %v1837 = vld [vmem:[#allocation5 + $0x1438] sm:$0xff]
    %v1838 = vld [vmem:[#allocation5 + $0x1440] sm:$0xff]
    %v1839 = vld [vmem:[#allocation5 + $0x1448] sm:$0xff]
    %v1840 = vld [vmem:[#allocation5 + $0x1450] sm:$0xff]
    %v1841 = vld [vmem:[#allocation5 + $0x1458] sm:$0xff]
    %v1842 = vld [vmem:[#allocation5 + $0x1460] sm:$0xff]
    %v1843 = vld [vmem:[#allocation5 + $0x1468] sm:$0xff]
    %v1844 = vld [vmem:[#allocation5 + $0x1470] sm:$0xff]
    %v1845 = vld [vmem:[#allocation5 + $0x1478] sm:$0xff]
    %v1846 = vld [vmem:[#allocation5 + $0x1480] sm:$0xff]
    %v1847 = vld [vmem:[#allocation5 + $0x1488] sm:$0xff]
    %v1848 = vld [vmem:[#allocation5 + $0x1490] sm:$0xff]
    %v1849 = vld [vmem:[#allocation5 + $0x1498] sm:$0xff]
    %v1850 = vld [vmem:[#allocation5 + $0x14a0] sm:$0xff]
    %v1851 = vld [vmem:[#allocation5 + $0x14a8] sm:$0xff]
    %v1852 = vld [vmem:[#allocation5 + $0x14b0] sm:$0xff]
    %v1853 = vld [vmem:[#allocation5 + $0x14b8] sm:$0xff]
    %v1854 = vld [vmem:[#allocation5 + $0x14c0] sm:$0xff]
    %v1855 = vld [vmem:[#allocation5 + $0x14c8] sm:$0xff]
    %v1856 = vld [vmem:[#allocation5 + $0x14d0] sm:$0xff]
    %v1857 = vld [vmem:[#allocation5 + $0x14d8] sm:$0xff]
    %v1858 = vld [vmem:[#allocation5 + $0x14e0] sm:$0xff]
    %v1859 = vld [vmem:[#allocation5 + $0x14e8] sm:$0xff]
    %v1860 = vld [vmem:[#allocation5 + $0x14f0] sm:$0xff]
    %v1861 = vld [vmem:[#allocation5 + $0x14f8] sm:$0xff]
    %v1862 = vld [vmem:[#allocation5 + $0x1500] sm:$0xff]
    %v1863 = vld [vmem:[#allocation5 + $0x1508] sm:$0xff]
    %v1864 = vld [vmem:[#allocation5 + $0x1510] sm:$0xff]
    %v1865 = vld [vmem:[#allocation5 + $0x1518] sm:$0xff]
    %v1866 = vld [vmem:[#allocation5 + $0x1520] sm:$0xff]
    %v1867 = vld [vmem:[#allocation5 + $0x1528] sm:$0xff]
    %v1868 = vld [vmem:[#allocation5 + $0x1530] sm:$0xff]
    %v1869 = vld [vmem:[#allocation5 + $0x1538] sm:$0xff]
    %v1870 = vld [vmem:[#allocation5 + $0x1540] sm:$0xff]
    %v1871 = vld [vmem:[#allocation5 + $0x1548] sm:$0xff]
    %v1872 = vld [vmem:[#allocation5 + $0x1550] sm:$0xff]
    %v1873 = vld [vmem:[#allocation5 + $0x1558] sm:$0xff]
    %v1874 = vld [vmem:[#allocation5 + $0x1560] sm:$0xff]
    %v1875 = vld [vmem:[#allocation5 + $0x1568] sm:$0xff]
    %v1876 = vld [vmem:[#allocation5 + $0x1570] sm:$0xff]
    %v1877 = vld [vmem:[#allocation5 + $0x1578] sm:$0xff]
    %v1878 = vld [vmem:[#allocation5 + $0x1580] sm:$0xff]
    %v1879 = vld [vmem:[#allocation5 + $0x1588] sm:$0xff]
    %v1880 = vld [vmem:[#allocation5 + $0x1590] sm:$0xff]
    %v1881 = vld [vmem:[#allocation5 + $0x1598] sm:$0xff]
    %v1882 = vld [vmem:[#allocation5 + $0x15a0] sm:$0xff]
    %v1883 = vld [vmem:[#allocation5 + $0x15a8] sm:$0xff]
    %v1884 = vld [vmem:[#allocation5 + $0x15b0] sm:$0xff]
    %v1885 = vld [vmem:[#allocation5 + $0x15b8] sm:$0xff]
    %v1886 = vld [vmem:[#allocation5 + $0x15c0] sm:$0xff]
    %v1887 = vld [vmem:[#allocation5 + $0x15c8] sm:$0xff]
    %v1888 = vld [vmem:[#allocation5 + $0x15d0] sm:$0xff]
    %v1889 = vld [vmem:[#allocation5 + $0x15d8] sm:$0xff]
    %v1890 = vld [vmem:[#allocation5 + $0x15e0] sm:$0xff]
    %v1891 = vld [vmem:[#allocation5 + $0x15e8] sm:$0xff]
    %v1892 = vld [vmem:[#allocation5 + $0x15f0] sm:$0xff]
    %v1893 = vld [vmem:[#allocation5 + $0x15f8] sm:$0xff]
    %v1894 = vld [vmem:[#allocation5 + $0x1600] sm:$0xff]
    %v1895 = vld [vmem:[#allocation5 + $0x1608] sm:$0xff]
    %v1896 = vld [vmem:[#allocation5 + $0x1610] sm:$0xff]
    %v1897 = vld [vmem:[#allocation5 + $0x1618] sm:$0xff]
    %v1898 = vld [vmem:[#allocation5 + $0x1620] sm:$0xff]
    %v1899 = vld [vmem:[#allocation5 + $0x1628] sm:$0xff]
    %v1900 = vld [vmem:[#allocation5 + $0x1630] sm:$0xff]
    %v1901 = vld [vmem:[#allocation5 + $0x1638] sm:$0xff]
    %v1902 = vld [vmem:[#allocation5 + $0x1640] sm:$0xff]
    %v1903 = vld [vmem:[#allocation5 + $0x1648] sm:$0xff]
    %v1904 = vld [vmem:[#allocation5 + $0x1650] sm:$0xff]
    %v1905 = vld [vmem:[#allocation5 + $0x1658] sm:$0xff]
    %v1906 = vld [vmem:[#allocation5 + $0x1660] sm:$0xff]
    %v1907 = vld [vmem:[#allocation5 + $0x1668] sm:$0xff]
    %v1908 = vld [vmem:[#allocation5 + $0x1670] sm:$0xff]
    %v1909 = vld [vmem:[#allocation5 + $0x1678] sm:$0xff]
    %v1910 = vld [vmem:[#allocation5 + $0x1680] sm:$0xff]
    %v1911 = vld [vmem:[#allocation5 + $0x1688] sm:$0xff]
    %v1912 = vld [vmem:[#allocation5 + $0x1690] sm:$0xff]
    %v1913 = vld [vmem:[#allocation5 + $0x1698] sm:$0xff]
    %v1914 = vld [vmem:[#allocation5 + $0x16a0] sm:$0xff]
    %v1915 = vld [vmem:[#allocation5 + $0x16a8] sm:$0xff]
    %v1916 = vld [vmem:[#allocation5 + $0x16b0] sm:$0xff]
    %v1917 = vld [vmem:[#allocation5 + $0x16b8] sm:$0xff]
    %v1918 = vld [vmem:[#allocation5 + $0x16c0] sm:$0xff]
    %v1919 = vld [vmem:[#allocation5 + $0x16c8] sm:$0xff]
    %v1920 = vld [vmem:[#allocation5 + $0x16d0] sm:$0xff]
    %v1921 = vld [vmem:[#allocation5 + $0x16d8] sm:$0xff]
    %v1922 = vld [vmem:[#allocation5 + $0x16e0] sm:$0xff]
    %v1923 = vld [vmem:[#allocation5 + $0x16e8] sm:$0xff]
    %v1924 = vld [vmem:[#allocation5 + $0x16f0] sm:$0xff]
    %v1925 = vld [vmem:[#allocation5 + $0x16f8] sm:$0xff]
    %v1926 = vld [vmem:[#allocation5 + $0x1700] sm:$0xff]
    %v1927 = vld [vmem:[#allocation5 + $0x1708] sm:$0xff]
    %v1928 = vld [vmem:[#allocation5 + $0x1710] sm:$0xff]
    %v1929 = vld [vmem:[#allocation5 + $0x1718] sm:$0xff]
    %v1930 = vld [vmem:[#allocation5 + $0x1720] sm:$0xff]
    %v1931 = vld [vmem:[#allocation5 + $0x1728] sm:$0xff]
    %v1932 = vld [vmem:[#allocation5 + $0x1730] sm:$0xff]
    %v1933 = vld [vmem:[#allocation5 + $0x1738] sm:$0xff]
    %v1934 = vld [vmem:[#allocation5 + $0x1740] sm:$0xff]
    %v1935 = vld [vmem:[#allocation5 + $0x1748] sm:$0xff]
    %v1936 = vld [vmem:[#allocation5 + $0x1750] sm:$0xff]
    %v1937 = vld [vmem:[#allocation5 + $0x1758] sm:$0xff]
    %v1938 = vld [vmem:[#allocation5 + $0x1760] sm:$0xff]
    %v1939 = vld [vmem:[#allocation5 + $0x1768] sm:$0xff]
    %v1940 = vld [vmem:[#allocation5 + $0x1770] sm:$0xff]
    %v1941 = vld [vmem:[#allocation5 + $0x1778] sm:$0xff]
    %v1942 = vld [vmem:[#allocation5 + $0x1780] sm:$0xff]
    %v1943 = vld [vmem:[#allocation5 + $0x1788] sm:$0xff]
    %v1944 = vld [vmem:[#allocation5 + $0x1790] sm:$0xff]
    %v1945 = vld [vmem:[#allocation5 + $0x1798] sm:$0xff]
    %v1946 = vld [vmem:[#allocation5 + $0x17a0] sm:$0xff]
    %v1947 = vld [vmem:[#allocation5 + $0x17a8] sm:$0xff]
    %v1948 = vld [vmem:[#allocation5 + $0x17b0] sm:$0xff]
    %v1949 = vld [vmem:[#allocation5 + $0x17b8] sm:$0xff]
    %v1950 = vld [vmem:[#allocation5 + $0x17c0] sm:$0xff]
    %v1951 = vld [vmem:[#allocation5 + $0x17c8] sm:$0xff]
    %v1952 = vld [vmem:[#allocation5 + $0x17d0] sm:$0xff]
    %v1953 = vld [vmem:[#allocation5 + $0x17d8] sm:$0xff]
    %v1954 = vld [vmem:[#allocation5 + $0x17e0] sm:$0xff]
    %v1955 = vld [vmem:[#allocation5 + $0x17e8] sm:$0xff]
    %v1956 = vld [vmem:[#allocation5 + $0x17f0] sm:$0xff]
    %v1957 = vld [vmem:[#allocation5 + $0x17f8] sm:$0xff]
    %v1958 = vld [vmem:[#allocation5 + $0x1800] sm:$0xff]
    %v1959 = vld [vmem:[#allocation5 + $0x1808] sm:$0xff]
    %v1960 = vld [vmem:[#allocation5 + $0x1810] sm:$0xff]
    %v1961 = vld [vmem:[#allocation5 + $0x1818] sm:$0xff]
    %v1962 = vld [vmem:[#allocation5 + $0x1820] sm:$0xff]
    %v1963 = vld [vmem:[#allocation5 + $0x1828] sm:$0xff]
    %v1964 = vld [vmem:[#allocation5 + $0x1830] sm:$0xff]
    %v1965 = vld [vmem:[#allocation5 + $0x1838] sm:$0xff]
    %v1966 = vld [vmem:[#allocation5 + $0x1840] sm:$0xff]
    %v1967 = vld [vmem:[#allocation5 + $0x1848] sm:$0xff]
    %v1968 = vld [vmem:[#allocation5 + $0x1850] sm:$0xff]
    %v1969 = vld [vmem:[#allocation5 + $0x1858] sm:$0xff]
    %v1970 = vld [vmem:[#allocation5 + $0x1860] sm:$0xff]
    %v1971 = vld [vmem:[#allocation5 + $0x1868] sm:$0xff]
    %v1972 = vld [vmem:[#allocation5 + $0x1870] sm:$0xff]
    %v1973 = vld [vmem:[#allocation5 + $0x1878] sm:$0xff]
    %v1974 = vld [vmem:[#allocation5 + $0x1880] sm:$0xff]
    %v1975 = vld [vmem:[#allocation5 + $0x1888] sm:$0xff]
    %v1976 = vld [vmem:[#allocation5 + $0x1890] sm:$0xff]
    %v1977 = vld [vmem:[#allocation5 + $0x1898] sm:$0xff]
    %v1978 = vld [vmem:[#allocation5 + $0x18a0] sm:$0xff]
    %v1979 = vld [vmem:[#allocation5 + $0x18a8] sm:$0xff]
    %v1980 = vld [vmem:[#allocation5 + $0x18b0] sm:$0xff]
    %v1981 = vld [vmem:[#allocation5 + $0x18b8] sm:$0xff]
    %v1982 = vld [vmem:[#allocation5 + $0x18c0] sm:$0xff]
    %v1983 = vld [vmem:[#allocation5 + $0x18c8] sm:$0xff]
    %v1984 = vld [vmem:[#allocation5 + $0x18d0] sm:$0xff]
    %v1985 = vld [vmem:[#allocation5 + $0x18d8] sm:$0xff]
    %v1986 = vld [vmem:[#allocation5 + $0x18e0] sm:$0xff]
    %v1987 = vld [vmem:[#allocation5 + $0x18e8] sm:$0xff]
    %v1988 = vld [vmem:[#allocation5 + $0x18f0] sm:$0xff]
    %v1989 = vld [vmem:[#allocation5 + $0x18f8] sm:$0xff]
    %v1990 = vld [vmem:[#allocation5 + $0x1900] sm:$0xff]
    %v1991 = vld [vmem:[#allocation5 + $0x1908] sm:$0xff]
    %v1992 = vld [vmem:[#allocation5 + $0x1910] sm:$0xff]
    %v1993 = vld [vmem:[#allocation5 + $0x1918] sm:$0xff]
    %v1994 = vld [vmem:[#allocation5 + $0x1920] sm:$0xff]
    %v1995 = vld [vmem:[#allocation5 + $0x1928] sm:$0xff]
    %v1996 = vld [vmem:[#allocation5 + $0x1930] sm:$0xff]
    %v1997 = vld [vmem:[#allocation5 + $0x1938] sm:$0xff]
    %v1998 = vld [vmem:[#allocation5 + $0x1940] sm:$0xff]
    %v1999 = vld [vmem:[#allocation5 + $0x1948] sm:$0xff]
    %v2000 = vld [vmem:[#allocation5 + $0x1950] sm:$0xff]
    %v2001 = vld [vmem:[#allocation5 + $0x1958] sm:$0xff]
    %v2002 = vld [vmem:[#allocation5 + $0x1960] sm:$0xff]
    %v2003 = vld [vmem:[#allocation5 + $0x1968] sm:$0xff]
    %v2004 = vld [vmem:[#allocation5 + $0x1970] sm:$0xff]
    %v2005 = vld [vmem:[#allocation5 + $0x1978] sm:$0xff]
    %v2006 = vld [vmem:[#allocation5 + $0x1980] sm:$0xff]
    %v2007 = vld [vmem:[#allocation5 + $0x1988] sm:$0xff]
    %v2008 = vld [vmem:[#allocation5 + $0x1990] sm:$0xff]
    %v2009 = vld [vmem:[#allocation5 + $0x1998] sm:$0xff]
    %v2010 = vld [vmem:[#allocation5 + $0x19a0] sm:$0xff]
    %v2011 = vld [vmem:[#allocation5 + $0x19a8] sm:$0xff]
    %v2012 = vld [vmem:[#allocation5 + $0x19b0] sm:$0xff]
    %v2013 = vld [vmem:[#allocation5 + $0x19b8] sm:$0xff]
    %v2014 = vld [vmem:[#allocation5 + $0x19c0] sm:$0xff]
    %v2015 = vld [vmem:[#allocation5 + $0x19c8] sm:$0xff]
    %v2016 = vld [vmem:[#allocation5 + $0x19d0] sm:$0xff]
    %v2017 = vld [vmem:[#allocation5 + $0x19d8] sm:$0xff]
    %v2018 = vld [vmem:[#allocation5 + $0x19e0] sm:$0xff]
    %v2019 = vld [vmem:[#allocation5 + $0x19e8] sm:$0xff]
    %v2020 = vld [vmem:[#allocation5 + $0x19f0] sm:$0xff]
    %v2021 = vld [vmem:[#allocation5 + $0x19f8] sm:$0xff]
    %v2022 = vld [vmem:[#allocation5 + $0x1a00] sm:$0xff]
    %v2023 = vld [vmem:[#allocation5 + $0x1a08] sm:$0xff]
    %v2024 = vld [vmem:[#allocation5 + $0x1a10] sm:$0xff]
    %v2025 = vld [vmem:[#allocation5 + $0x1a18] sm:$0xff]
    %v2026 = vld [vmem:[#allocation5 + $0x1a20] sm:$0xff]
    %v2027 = vld [vmem:[#allocation5 + $0x1a28] sm:$0xff]
    %v2028 = vld [vmem:[#allocation5 + $0x1a30] sm:$0xff]
    %v2029 = vld [vmem:[#allocation5 + $0x1a38] sm:$0xff]
    %v2030 = vld [vmem:[#allocation5 + $0x1a40] sm:$0xff]
    %v2031 = vld [vmem:[#allocation5 + $0x1a48] sm:$0xff]
    %v2032 = vld [vmem:[#allocation5 + $0x1a50] sm:$0xff]
    %v2033 = vld [vmem:[#allocation5 + $0x1a58] sm:$0xff]
    %v2034 = vld [vmem:[#allocation5 + $0x1a60] sm:$0xff]
    %v2035 = vld [vmem:[#allocation5 + $0x1a68] sm:$0xff]
    %v2036 = vld [vmem:[#allocation5 + $0x1a70] sm:$0xff]
    %v2037 = vld [vmem:[#allocation5 + $0x1a78] sm:$0xff]
    %v2038 = vld [vmem:[#allocation5 + $0x1a80] sm:$0xff]
    %v2039 = vld [vmem:[#allocation5 + $0x1a88] sm:$0xff]
    %v2040 = vld [vmem:[#allocation5 + $0x1a90] sm:$0xff]
    %v2041 = vld [vmem:[#allocation5 + $0x1a98] sm:$0xff]
    %v2042 = vld [vmem:[#allocation5 + $0x1aa0] sm:$0xff]
    %v2043 = vld [vmem:[#allocation5 + $0x1aa8] sm:$0xff]
    %v2044 = vld [vmem:[#allocation5 + $0x1ab0] sm:$0xff]
    %v2045 = vld [vmem:[#allocation5 + $0x1ab8] sm:$0xff]
    %v2046 = vld [vmem:[#allocation5 + $0x1ac0] sm:$0xff]
    %v2047 = vld [vmem:[#allocation5 + $0x1ac8] sm:$0xff]
    %v2048 = vld [vmem:[#allocation5 + $0x1ad0] sm:$0xff]
    %v2049 = vld [vmem:[#allocation5 + $0x1ad8] sm:$0xff]
    %v2050 = vld [vmem:[#allocation5 + $0x1ae0] sm:$0xff]
    %v2051 = vld [vmem:[#allocation5 + $0x1ae8] sm:$0xff]
    %v2052 = vld [vmem:[#allocation5 + $0x1af0] sm:$0xff]
    %v2053 = vld [vmem:[#allocation5 + $0x1af8] sm:$0xff]
    %v2054 = vld [vmem:[#allocation5 + $0x1b00] sm:$0xff]
    %v2055 = vld [vmem:[#allocation5 + $0x1b08] sm:$0xff]
    %v2056 = vld [vmem:[#allocation5 + $0x1b10] sm:$0xff]
    %v2057 = vld [vmem:[#allocation5 + $0x1b18] sm:$0xff]
    %v2058 = vld [vmem:[#allocation5 + $0x1b20] sm:$0xff]
    %v2059 = vld [vmem:[#allocation5 + $0x1b28] sm:$0xff]
    %v2060 = vld [vmem:[#allocation5 + $0x1b30] sm:$0xff]
    %v2061 = vld [vmem:[#allocation5 + $0x1b38] sm:$0xff]
    %v2062 = vld [vmem:[#allocation5 + $0x1b40] sm:$0xff]
    %v2063 = vld [vmem:[#allocation5 + $0x1b48] sm:$0xff]
    %v2064 = vld [vmem:[#allocation5 + $0x1b50] sm:$0xff]
    %v2065 = vld [vmem:[#allocation5 + $0x1b58] sm:$0xff]
    %v2066 = vld [vmem:[#allocation5 + $0x1b60] sm:$0xff]
    %v2067 = vld [vmem:[#allocation5 + $0x1b68] sm:$0xff]
    %v2068 = vld [vmem:[#allocation5 + $0x1b70] sm:$0xff]
    %v2069 = vld [vmem:[#allocation5 + $0x1b78] sm:$0xff]
    %v2070 = vld [vmem:[#allocation5 + $0x1b80] sm:$0xff]
    %v2071 = vld [vmem:[#allocation5 + $0x1b88] sm:$0xff]
    %v2072 = vld [vmem:[#allocation5 + $0x1b90] sm:$0xff]
    %v2073 = vld [vmem:[#allocation5 + $0x1b98] sm:$0xff]
    %v2074 = vld [vmem:[#allocation5 + $0x1ba0] sm:$0xff]
    %v2075 = vld [vmem:[#allocation5 + $0x1ba8] sm:$0xff]
    %v2076 = vld [vmem:[#allocation5 + $0x1bb0] sm:$0xff]
    %v2077 = vld [vmem:[#allocation5 + $0x1bb8] sm:$0xff]
    %v2078 = vld [vmem:[#allocation5 + $0x1bc0] sm:$0xff]
    %v2079 = vld [vmem:[#allocation5 + $0x1bc8] sm:$0xff]
    %v2080 = vld [vmem:[#allocation5 + $0x1bd0] sm:$0xff]
    %v2081 = vld [vmem:[#allocation5 + $0x1bd8] sm:$0xff]
    %v2082 = vld [vmem:[#allocation5 + $0x1be0] sm:$0xff]
    %v2083 = vld [vmem:[#allocation5 + $0x1be8] sm:$0xff]
    %v2084 = vld [vmem:[#allocation5 + $0x1bf0] sm:$0xff]
    %v2085 = vld [vmem:[#allocation5 + $0x1bf8] sm:$0xff]
    %v2086 = vld [vmem:[#allocation5 + $0x1c00] sm:$0xff]
    %v2087 = vld [vmem:[#allocation5 + $0x1c08] sm:$0xff]
    %v2088 = vld [vmem:[#allocation5 + $0x1c10] sm:$0xff]
    %v2089 = vld [vmem:[#allocation5 + $0x1c18] sm:$0xff]
    %v2090 = vld [vmem:[#allocation5 + $0x1c20] sm:$0xff]
    %v2091 = vld [vmem:[#allocation5 + $0x1c28] sm:$0xff]
    %v2092 = vld [vmem:[#allocation5 + $0x1c30] sm:$0xff]
    %v2093 = vld [vmem:[#allocation5 + $0x1c38] sm:$0xff]
    %v2094 = vld [vmem:[#allocation5 + $0x1c40] sm:$0xff]
    %v2095 = vld [vmem:[#allocation5 + $0x1c48] sm:$0xff]
    %v2096 = vld [vmem:[#allocation5 + $0x1c50] sm:$0xff]
    %v2097 = vld [vmem:[#allocation5 + $0x1c58] sm:$0xff]
    %v2098 = vld [vmem:[#allocation5 + $0x1c60] sm:$0xff]
    %v2099 = vld [vmem:[#allocation5 + $0x1c68] sm:$0xff]
    %v2100 = vld [vmem:[#allocation5 + $0x1c70] sm:$0xff]
    %v2101 = vld [vmem:[#allocation5 + $0x1c78] sm:$0xff]
    %v2102 = vld [vmem:[#allocation5 + $0x1c80] sm:$0xff]
    %v2103 = vld [vmem:[#allocation5 + $0x1c88] sm:$0xff]
    %v2104 = vld [vmem:[#allocation5 + $0x1c90] sm:$0xff]
    %v2105 = vld [vmem:[#allocation5 + $0x1c98] sm:$0xff]
    %v2106 = vld [vmem:[#allocation5 + $0x1ca0] sm:$0xff]
    %v2107 = vld [vmem:[#allocation5 + $0x1ca8] sm:$0xff]
    %v2108 = vld [vmem:[#allocation5 + $0x1cb0] sm:$0xff]
    %v2109 = vld [vmem:[#allocation5 + $0x1cb8] sm:$0xff]
    %v2110 = vld [vmem:[#allocation5 + $0x1cc0] sm:$0xff]
    %v2111 = vld [vmem:[#allocation5 + $0x1cc8] sm:$0xff]
    %v2112 = vld [vmem:[#allocation5 + $0x1cd0] sm:$0xff]
    %v2113 = vld [vmem:[#allocation5 + $0x1cd8] sm:$0xff]
    %v2114 = vld [vmem:[#allocation5 + $0x1ce0] sm:$0xff]
    %v2115 = vld [vmem:[#allocation5 + $0x1ce8] sm:$0xff]
    %v2116 = vld [vmem:[#allocation5 + $0x1cf0] sm:$0xff]
    %v2117 = vld [vmem:[#allocation5 + $0x1cf8] sm:$0xff]
    %v2118 = vld [vmem:[#allocation5 + $0x1d00] sm:$0xff]
    %v2119 = vld [vmem:[#allocation5 + $0x1d08] sm:$0xff]
    %v2120 = vld [vmem:[#allocation5 + $0x1d10] sm:$0xff]
    %v2121 = vld [vmem:[#allocation5 + $0x1d18] sm:$0xff]
    %v2122 = vld [vmem:[#allocation5 + $0x1d20] sm:$0xff]
    %v2123 = vld [vmem:[#allocation5 + $0x1d28] sm:$0xff]
    %v2124 = vld [vmem:[#allocation5 + $0x1d30] sm:$0xff]
    %v2125 = vld [vmem:[#allocation5 + $0x1d38] sm:$0xff]
    %v2126 = vld [vmem:[#allocation5 + $0x1d40] sm:$0xff]
    %v2127 = vld [vmem:[#allocation5 + $0x1d48] sm:$0xff]
    %v2128 = vld [vmem:[#allocation5 + $0x1d50] sm:$0xff]
    %v2129 = vld [vmem:[#allocation5 + $0x1d58] sm:$0xff]
    %v2130 = vld [vmem:[#allocation5 + $0x1d60] sm:$0xff]
    %v2131 = vld [vmem:[#allocation5 + $0x1d68] sm:$0xff]
    %v2132 = vld [vmem:[#allocation5 + $0x1d70] sm:$0xff]
    %v2133 = vld [vmem:[#allocation5 + $0x1d78] sm:$0xff]
    %v2134 = vld [vmem:[#allocation5 + $0x1d80] sm:$0xff]
    %v2135 = vld [vmem:[#allocation5 + $0x1d88] sm:$0xff]
    %v2136 = vld [vmem:[#allocation5 + $0x1d90] sm:$0xff]
    %v2137 = vld [vmem:[#allocation5 + $0x1d98] sm:$0xff]
    %v2138 = vld [vmem:[#allocation5 + $0x1da0] sm:$0xff]
    %v2139 = vld [vmem:[#allocation5 + $0x1da8] sm:$0xff]
    %v2140 = vld [vmem:[#allocation5 + $0x1db0] sm:$0xff]
    %v2141 = vld [vmem:[#allocation5 + $0x1db8] sm:$0xff]
    %v2142 = vld [vmem:[#allocation5 + $0x1dc0] sm:$0xff]
    %v2143 = vld [vmem:[#allocation5 + $0x1dc8] sm:$0xff]
    %v2144 = vld [vmem:[#allocation5 + $0x1dd0] sm:$0xff]
    %v2145 = vld [vmem:[#allocation5 + $0x1dd8] sm:$0xff]
    %v2146 = vld [vmem:[#allocation5 + $0x1de0] sm:$0xff]
    %v2147 = vld [vmem:[#allocation5 + $0x1de8] sm:$0xff]
    %v2148 = vld [vmem:[#allocation5 + $0x1df0] sm:$0xff]
    %v2149 = vld [vmem:[#allocation5 + $0x1df8] sm:$0xff]
    %v2150 = vld [vmem:[#allocation5 + $0x1e00] sm:$0xff]
    %v2151 = vld [vmem:[#allocation5 + $0x1e08] sm:$0xff]
    %v2152 = vld [vmem:[#allocation5 + $0x1e10] sm:$0xff]
    %v2153 = vld [vmem:[#allocation5 + $0x1e18] sm:$0xff]
    %v2154 = vld [vmem:[#allocation5 + $0x1e20] sm:$0xff]
    %v2155 = vld [vmem:[#allocation5 + $0x1e28] sm:$0xff]
    %v2156 = vld [vmem:[#allocation5 + $0x1e30] sm:$0xff]
    %v2157 = vld [vmem:[#allocation5 + $0x1e38] sm:$0xff]
    %v2158 = vld [vmem:[#allocation5 + $0x1e40] sm:$0xff]
    %v2159 = vld [vmem:[#allocation5 + $0x1e48] sm:$0xff]
    %v2160 = vld [vmem:[#allocation5 + $0x1e50] sm:$0xff]
    %v2161 = vld [vmem:[#allocation5 + $0x1e58] sm:$0xff]
    %v2162 = vld [vmem:[#allocation5 + $0x1e60] sm:$0xff]
    %v2163 = vld [vmem:[#allocation5 + $0x1e68] sm:$0xff]
    %v2164 = vld [vmem:[#allocation5 + $0x1e70] sm:$0xff]
    %v2165 = vld [vmem:[#allocation5 + $0x1e78] sm:$0xff]
    %v2166 = vld [vmem:[#allocation5 + $0x1e80] sm:$0xff]
    %v2167 = vld [vmem:[#allocation5 + $0x1e88] sm:$0xff]
    %v2168 = vld [vmem:[#allocation5 + $0x1e90] sm:$0xff]
    %v2169 = vld [vmem:[#allocation5 + $0x1e98] sm:$0xff]
    %v2170 = vld [vmem:[#allocation5 + $0x1ea0] sm:$0xff]
    %v2171 = vld [vmem:[#allocation5 + $0x1ea8] sm:$0xff]
    %v2172 = vld [vmem:[#allocation5 + $0x1eb0] sm:$0xff]
    %v2173 = vld [vmem:[#allocation5 + $0x1eb8] sm:$0xff]
    %v2174 = vld [vmem:[#allocation5 + $0x1ec0] sm:$0xff]
    %v2175 = vld [vmem:[#allocation5 + $0x1ec8] sm:$0xff]
    %v2176 = vld [vmem:[#allocation5 + $0x1ed0] sm:$0xff]
    %v2177 = vld [vmem:[#allocation5 + $0x1ed8] sm:$0xff]
    %v2178 = vld [vmem:[#allocation5 + $0x1ee0] sm:$0xff]
    %v2179 = vld [vmem:[#allocation5 + $0x1ee8] sm:$0xff]
    %v2180 = vld [vmem:[#allocation5 + $0x1ef0] sm:$0xff]
    %v2181 = vld [vmem:[#allocation5 + $0x1ef8] sm:$0xff]
    %v2182 = vld [vmem:[#allocation5 + $0x1f00] sm:$0xff]
    %v2183 = vld [vmem:[#allocation5 + $0x1f08] sm:$0xff]
    %v2184 = vld [vmem:[#allocation5 + $0x1f10] sm:$0xff]
    %v2185 = vld [vmem:[#allocation5 + $0x1f18] sm:$0xff]
    %v2186 = vld [vmem:[#allocation5 + $0x1f20] sm:$0xff]
    %v2187 = vld [vmem:[#allocation5 + $0x1f28] sm:$0xff]
    %v2188 = vld [vmem:[#allocation5 + $0x1f30] sm:$0xff]
    %v2189 = vld [vmem:[#allocation5 + $0x1f38] sm:$0xff]
    %v2190 = vld [vmem:[#allocation5 + $0x1f40] sm:$0xff]
    %v2191 = vld [vmem:[#allocation5 + $0x1f48] sm:$0xff]
    %v2192 = vld [vmem:[#allocation5 + $0x1f50] sm:$0xff]
    %v2193 = vld [vmem:[#allocation5 + $0x1f58] sm:$0xff]
    %v2194 = vld [vmem:[#allocation5 + $0x1f60] sm:$0xff]
    %v2195 = vld [vmem:[#allocation5 + $0x1f68] sm:$0xff]
    %v2196 = vld [vmem:[#allocation5 + $0x1f70] sm:$0xff]
    %v2197 = vld [vmem:[#allocation5 + $0x1f78] sm:$0xff]
    %v2198 = vld [vmem:[#allocation5 + $0x1f80] sm:$0xff]
    %v2199 = vld [vmem:[#allocation5 + $0x1f88] sm:$0xff]
    %v2200 = vld [vmem:[#allocation5 + $0x1f90] sm:$0xff]
    %v2201 = vld [vmem:[#allocation5 + $0x1f98] sm:$0xff]
    %v2202 = vld [vmem:[#allocation5 + $0x1fa0] sm:$0xff]
    %v2203 = vld [vmem:[#allocation5 + $0x1fa8] sm:$0xff]
    %v2204 = vld [vmem:[#allocation5 + $0x1fb0] sm:$0xff]
    %v2205 = vld [vmem:[#allocation5 + $0x1fb8] sm:$0xff]
    %v2206 = vld [vmem:[#allocation5 + $0x1fc0] sm:$0xff]
    %v2207 = vld [vmem:[#allocation5 + $0x1fc8] sm:$0xff]
    %v2208 = vld [vmem:[#allocation5 + $0x1fd0] sm:$0xff]
    %v2209 = vld [vmem:[#allocation5 + $0x1fd8] sm:$0xff]
    %v2210 = vld [vmem:[#allocation5 + $0x1fe0] sm:$0xff]
    %v2211 = vld [vmem:[#allocation5 + $0x1fe8] sm:$0xff]
    %v2212 = vld [vmem:[#allocation5 + $0x1ff0] sm:$0xff]
    %v2213 = vld [vmem:[#allocation5 + $0x1ff8] sm:$0xff]
    %v2214 = vld [vmem:[#allocation5 + $0x2000] sm:$0xff]
    %v2215 = vld [vmem:[#allocation5 + $0x2008] sm:$0xff]
    %v2216 = vld [vmem:[#allocation5 + $0x2010] sm:$0xff]
    %v2217 = vld [vmem:[#allocation5 + $0x2018] sm:$0xff]
    %v2218 = vld [vmem:[#allocation5 + $0x2020] sm:$0xff]
    %v2219 = vld [vmem:[#allocation5 + $0x2028] sm:$0xff]
    %v2220 = vld [vmem:[#allocation5 + $0x2030] sm:$0xff]
    %v2221 = vld [vmem:[#allocation5 + $0x2038] sm:$0xff]
    %v2222 = vld [vmem:[#allocation5 + $0x2040] sm:$0xff]
    %v2223 = vld [vmem:[#allocation5 + $0x2048] sm:$0xff]
    %v2224 = vld [vmem:[#allocation5 + $0x2050] sm:$0xff]
    %v2225 = vld [vmem:[#allocation5 + $0x2058] sm:$0xff]
    %v2226 = vld [vmem:[#allocation5 + $0x2060] sm:$0xff]
    %v2227 = vld [vmem:[#allocation5 + $0x2068] sm:$0xff]
    %v2228 = vld [vmem:[#allocation5 + $0x2070] sm:$0xff]
    %v2229 = vld [vmem:[#allocation5 + $0x2078] sm:$0xff]
    %v2230 = vld [vmem:[#allocation5 + $0x2080] sm:$0xff]
    %v2231 = vld [vmem:[#allocation5 + $0x2088] sm:$0xff]
    %v2232 = vld [vmem:[#allocation5 + $0x2090] sm:$0xff]
    %v2233 = vld [vmem:[#allocation5 + $0x2098] sm:$0xff]
    %v2234 = vld [vmem:[#allocation5 + $0x20a0] sm:$0xff]
    %v2235 = vld [vmem:[#allocation5 + $0x20a8] sm:$0xff]
    %v2236 = vld [vmem:[#allocation5 + $0x20b0] sm:$0xff]
    %v2237 = vld [vmem:[#allocation5 + $0x20b8] sm:$0xff]
    %v2238 = vld [vmem:[#allocation5 + $0x20c0] sm:$0xff]
    %v2239 = vld [vmem:[#allocation5 + $0x20c8] sm:$0xff]
    %v2240 = vld [vmem:[#allocation5 + $0x20d0] sm:$0xff]
    %v2241 = vld [vmem:[#allocation5 + $0x20d8] sm:$0xff]
    %v2242 = vld [vmem:[#allocation5 + $0x20e0] sm:$0xff]
    %v2243 = vld [vmem:[#allocation5 + $0x20e8] sm:$0xff]
    %v2244 = vld [vmem:[#allocation5 + $0x20f0] sm:$0xff]
    %v2245 = vld [vmem:[#allocation5 + $0x20f8] sm:$0xff]
    %v2246 = vld [vmem:[#allocation5 + $0x2100] sm:$0xff]
    %v2247 = vld [vmem:[#allocation5 + $0x2108] sm:$0xff]
    %v2248 = vld [vmem:[#allocation5 + $0x2110] sm:$0xff]
    %v2249 = vld [vmem:[#allocation5 + $0x2118] sm:$0xff]
    %v2250 = vld [vmem:[#allocation5 + $0x2120] sm:$0xff]
    %v2251 = vld [vmem:[#allocation5 + $0x2128] sm:$0xff]
    %v2252 = vld [vmem:[#allocation5 + $0x2130] sm:$0xff]
    %v2253 = vld [vmem:[#allocation5 + $0x2138] sm:$0xff]
    %v2254 = vld [vmem:[#allocation5 + $0x2140] sm:$0xff]
    %v2255 = vld [vmem:[#allocation5 + $0x2148] sm:$0xff]
    %v2256 = vld [vmem:[#allocation5 + $0x2150] sm:$0xff]
    %v2257 = vld [vmem:[#allocation5 + $0x2158] sm:$0xff]
    %v2258 = vld [vmem:[#allocation5 + $0x2160] sm:$0xff]
    %v2259 = vld [vmem:[#allocation5 + $0x2168] sm:$0xff]
    %v2260 = vld [vmem:[#allocation5 + $0x2170] sm:$0xff]
    %v2261 = vld [vmem:[#allocation5 + $0x2178] sm:$0xff]
    %v2262 = vld [vmem:[#allocation5 + $0x2180] sm:$0xff]
    %v2263 = vld [vmem:[#allocation5 + $0x2188] sm:$0xff]
    %v2264 = vld [vmem:[#allocation5 + $0x2190] sm:$0xff]
    %v2265 = vld [vmem:[#allocation5 + $0x2198] sm:$0xff]
    %v2266 = vld [vmem:[#allocation5 + $0x21a0] sm:$0xff]
    %v2267 = vld [vmem:[#allocation5 + $0x21a8] sm:$0xff]
    %v2268 = vld [vmem:[#allocation5 + $0x21b0] sm:$0xff]
    %v2269 = vld [vmem:[#allocation5 + $0x21b8] sm:$0xff]
    %v2270 = vld [vmem:[#allocation5 + $0x21c0] sm:$0xff]
    %v2271 = vld [vmem:[#allocation5 + $0x21c8] sm:$0xff]
    %v2272 = vld [vmem:[#allocation5 + $0x21d0] sm:$0xff]
    %v2273 = vld [vmem:[#allocation5 + $0x21d8] sm:$0xff]
    %v2274 = vld [vmem:[#allocation5 + $0x21e0] sm:$0xff]
    %v2275 = vld [vmem:[#allocation5 + $0x21e8] sm:$0xff]
    %v2276 = vld [vmem:[#allocation5 + $0x21f0] sm:$0xff]
    %v2277 = vld [vmem:[#allocation5 + $0x21f8] sm:$0xff]
    %v2278 = vld [vmem:[#allocation5 + $0x2200] sm:$0xff]
    %v2279 = vld [vmem:[#allocation5 + $0x2208] sm:$0xff]
    %v2280 = vld [vmem:[#allocation5 + $0x2210] sm:$0xff]
    %v2281 = vld [vmem:[#allocation5 + $0x2218] sm:$0xff]
    %v2282 = vld [vmem:[#allocation5 + $0x2220] sm:$0xff]
    %v2283 = vld [vmem:[#allocation5 + $0x2228] sm:$0xff]
    %v2284 = vld [vmem:[#allocation5 + $0x2230] sm:$0xff]
    %v2285 = vld [vmem:[#allocation5 + $0x2238] sm:$0xff]
    %v2286 = vld [vmem:[#allocation5 + $0x2240] sm:$0xff]
    %v2287 = vld [vmem:[#allocation5 + $0x2248] sm:$0xff]
    %v2288 = vld [vmem:[#allocation5 + $0x2250] sm:$0xff]
    %v2289 = vld [vmem:[#allocation5 + $0x2258] sm:$0xff]
    %v2290 = vld [vmem:[#allocation5 + $0x2260] sm:$0xff]
    %v2291 = vld [vmem:[#allocation5 + $0x2268] sm:$0xff]
    %v2292 = vld [vmem:[#allocation5 + $0x2270] sm:$0xff]
    %v2293 = vld [vmem:[#allocation5 + $0x2278] sm:$0xff]
    %v2294 = vld [vmem:[#allocation5 + $0x2280] sm:$0xff]
    %v2295 = vld [vmem:[#allocation5 + $0x2288] sm:$0xff]
    %v2296 = vld [vmem:[#allocation5 + $0x2290] sm:$0xff]
    %v2297 = vld [vmem:[#allocation5 + $0x2298] sm:$0xff]
    %v2298 = vld [vmem:[#allocation5 + $0x22a0] sm:$0xff]
    %v2299 = vld [vmem:[#allocation5 + $0x22a8] sm:$0xff]
    %v2300 = vld [vmem:[#allocation5 + $0x22b0] sm:$0xff]
    %v2301 = vld [vmem:[#allocation5 + $0x22b8] sm:$0xff]
    %v2302 = vld [vmem:[#allocation5 + $0x22c0] sm:$0xff]
    %v2303 = vld [vmem:[#allocation5 + $0x22c8] sm:$0xff]
    %v2304 = vld [vmem:[#allocation5 + $0x22d0] sm:$0xff]
    %v2305 = vld [vmem:[#allocation5 + $0x22d8] sm:$0xff]
    %v2306 = vld [vmem:[#allocation5 + $0x22e0] sm:$0xff]
    %v2307 = vld [vmem:[#allocation5 + $0x22e8] sm:$0xff]
    %v2308 = vld [vmem:[#allocation5 + $0x22f0] sm:$0xff]
    %v2309 = vld [vmem:[#allocation5 + $0x22f8] sm:$0xff]
    %v2310 = vld [vmem:[#allocation5 + $0x2300] sm:$0xff]
    %v2311 = vld [vmem:[#allocation5 + $0x2308] sm:$0xff]
    %v2312 = vld [vmem:[#allocation5 + $0x2310] sm:$0xff]
    %v2313 = vld [vmem:[#allocation5 + $0x2318] sm:$0xff]
    %v2314 = vld [vmem:[#allocation5 + $0x2320] sm:$0xff]
    %v2315 = vld [vmem:[#allocation5 + $0x2328] sm:$0xff]
    %v2316 = vld [vmem:[#allocation5 + $0x2330] sm:$0xff]
    %v2317 = vld [vmem:[#allocation5 + $0x2338] sm:$0xff]
    %v2318 = vld [vmem:[#allocation5 + $0x2340] sm:$0xff]
    %v2319 = vld [vmem:[#allocation5 + $0x2348] sm:$0xff]
    %v2320 = vld [vmem:[#allocation5 + $0x2350] sm:$0xff]
    %v2321 = vld [vmem:[#allocation5 + $0x2358] sm:$0xff]
    %v2322 = vld [vmem:[#allocation5 + $0x2360] sm:$0xff]
    %v2323 = vld [vmem:[#allocation5 + $0x2368] sm:$0xff]
    %v2324 = vld [vmem:[#allocation5 + $0x2370] sm:$0xff]
    %v2325 = vld [vmem:[#allocation5 + $0x2378] sm:$0xff]
    %v2326 = vld [vmem:[#allocation5 + $0x2380] sm:$0xff]
    %v2327 = vld [vmem:[#allocation5 + $0x2388] sm:$0xff]
    %v2328 = vld [vmem:[#allocation5 + $0x2390] sm:$0xff]
    %v2329 = vld [vmem:[#allocation5 + $0x2398] sm:$0xff]
    %v2330 = vld [vmem:[#allocation5 + $0x23a0] sm:$0xff]
    %v2331 = vld [vmem:[#allocation5 + $0x23a8] sm:$0xff]
    %v2332 = vld [vmem:[#allocation5 + $0x23b0] sm:$0xff]
    %v2333 = vld [vmem:[#allocation5 + $0x23b8] sm:$0xff]
    %v2334 = vld [vmem:[#allocation5 + $0x23c0] sm:$0xff]
    %v2335 = vld [vmem:[#allocation5 + $0x23c8] sm:$0xff]
    %v2336 = vld [vmem:[#allocation5 + $0x23d0] sm:$0xff]
    %v2337 = vld [vmem:[#allocation5 + $0x23d8] sm:$0xff]
    %v2338 = vld [vmem:[#allocation5 + $0x23e0] sm:$0xff]
    %v2339 = vld [vmem:[#allocation5 + $0x23e8] sm:$0xff]
    %v2340 = vld [vmem:[#allocation5 + $0x23f0] sm:$0xff]
    %v2341 = vld [vmem:[#allocation5 + $0x23f8] sm:$0xff]
    %v2342 = vld [vmem:[#allocation5 + $0x2400] sm:$0xff]
    %v2343 = vld [vmem:[#allocation5 + $0x2408] sm:$0xff]
    %v2344 = vld [vmem:[#allocation5 + $0x2410] sm:$0xff]
    %v2345 = vld [vmem:[#allocation5 + $0x2418] sm:$0xff]
    %v2346 = vld [vmem:[#allocation5 + $0x2420] sm:$0xff]
    %v2347 = vld [vmem:[#allocation5 + $0x2428] sm:$0xff]
    %v2348 = vld [vmem:[#allocation5 + $0x2430] sm:$0xff]
    %v2349 = vld [vmem:[#allocation5 + $0x2438] sm:$0xff]
    %v2350 = vld [vmem:[#allocation5 + $0x2440] sm:$0xff]
    %v2351 = vld [vmem:[#allocation5 + $0x2448] sm:$0xff]
    %v2352 = vld [vmem:[#allocation5 + $0x2450] sm:$0xff]
    %v2353 = vld [vmem:[#allocation5 + $0x2458] sm:$0xff]
    %v2354 = vld [vmem:[#allocation5 + $0x2460] sm:$0xff]
    %v2355 = vld [vmem:[#allocation5 + $0x2468] sm:$0xff]
    %v2356 = vld [vmem:[#allocation5 + $0x2470] sm:$0xff]
    %v2357 = vld [vmem:[#allocation5 + $0x2478] sm:$0xff]
    %v2358 = vld [vmem:[#allocation5 + $0x2480] sm:$0xff]
    %v2359 = vld [vmem:[#allocation5 + $0x2488] sm:$0xff]
    %v2360 = vld [vmem:[#allocation5 + $0x2490] sm:$0xff]
    %v2361 = vld [vmem:[#allocation5 + $0x2498] sm:$0xff]
    %v2362 = vld [vmem:[#allocation5 + $0x24a0] sm:$0xff]
    %v2363 = vld [vmem:[#allocation5 + $0x24a8] sm:$0xff]
    %v2364 = vld [vmem:[#allocation5 + $0x24b0] sm:$0xff]
    %v2365 = vld [vmem:[#allocation5 + $0x24b8] sm:$0xff]
    %v2366 = vld [vmem:[#allocation5 + $0x24c0] sm:$0xff]
    %v2367 = vld [vmem:[#allocation5 + $0x24c8] sm:$0xff]
    %v2368 = vld [vmem:[#allocation5 + $0x24d0] sm:$0xff]
    %v2369 = vld [vmem:[#allocation5 + $0x24d8] sm:$0xff]
    %v2370 = vld [vmem:[#allocation5 + $0x24e0] sm:$0xff]
    %v2371 = vld [vmem:[#allocation5 + $0x24e8] sm:$0xff]
    %v2372 = vld [vmem:[#allocation5 + $0x24f0] sm:$0xff]
    %v2373 = vld [vmem:[#allocation5 + $0x24f8] sm:$0xff]
    %v2374 = vld [vmem:[#allocation5 + $0x2500] sm:$0xff]
    %v2375 = vld [vmem:[#allocation5 + $0x2508] sm:$0xff]
    %v2376 = vld [vmem:[#allocation5 + $0x2510] sm:$0xff]
    %v2377 = vld [vmem:[#allocation5 + $0x2518] sm:$0xff]
    %v2378 = vld [vmem:[#allocation5 + $0x2520] sm:$0xff]
    %v2379 = vld [vmem:[#allocation5 + $0x2528] sm:$0xff]
    %v2380 = vld [vmem:[#allocation5 + $0x2530] sm:$0xff]
    %v2381 = vld [vmem:[#allocation5 + $0x2538] sm:$0xff]
    %v2382 = vld [vmem:[#allocation5 + $0x2540] sm:$0xff]
    %v2383 = vld [vmem:[#allocation5 + $0x2548] sm:$0xff]
    %v2384 = vld [vmem:[#allocation5 + $0x2550] sm:$0xff]
    %v2385 = vld [vmem:[#allocation5 + $0x2558] sm:$0xff]
    %v2386 = vld [vmem:[#allocation5 + $0x2560] sm:$0xff]
    %v2387 = vld [vmem:[#allocation5 + $0x2568] sm:$0xff]
    %v2388 = vld [vmem:[#allocation5 + $0x2570] sm:$0xff]
    %v2389 = vld [vmem:[#allocation5 + $0x2578] sm:$0xff]
    %v2390 = vld [vmem:[#allocation5 + $0x2580] sm:$0xff]
    %v2391 = vld [vmem:[#allocation5 + $0x2588] sm:$0xff]
    %v2392 = vld [vmem:[#allocation5 + $0x2590] sm:$0xff]
    %v2393 = vld [vmem:[#allocation5 + $0x2598] sm:$0xff]
    %v2394 = vld [vmem:[#allocation5 + $0x25a0] sm:$0xff]
    %v2395 = vld [vmem:[#allocation5 + $0x25a8] sm:$0xff]
    %v2396 = vld [vmem:[#allocation5 + $0x25b0] sm:$0xff]
    %v2397 = vld [vmem:[#allocation5 + $0x25b8] sm:$0xff]
    %v2398 = vld [vmem:[#allocation5 + $0x25c0] sm:$0xff]
    %v2399 = vld [vmem:[#allocation5 + $0x25c8] sm:$0xff]
    %v2400 = vld [vmem:[#allocation5 + $0x25d0] sm:$0xff]
    %v2401 = vld [vmem:[#allocation5 + $0x25d8] sm:$0xff]
    %v2402 = vld [vmem:[#allocation5 + $0x25e0] sm:$0xff]
    %v2403 = vld [vmem:[#allocation5 + $0x25e8] sm:$0xff]
    %v2404 = vld [vmem:[#allocation5 + $0x25f0] sm:$0xff]
    %v2405 = vld [vmem:[#allocation5 + $0x25f8] sm:$0xff]
    %v2406 = vld [vmem:[#allocation5 + $0x2600] sm:$0xff]
    %v2407 = vld [vmem:[#allocation5 + $0x2608] sm:$0xff]
    %v2408 = vld [vmem:[#allocation5 + $0x2610] sm:$0xff]
    %v2409 = vld [vmem:[#allocation5 + $0x2618] sm:$0xff]
    %v2410 = vld [vmem:[#allocation5 + $0x2620] sm:$0xff]
    %v2411 = vld [vmem:[#allocation5 + $0x2628] sm:$0xff]
    %v2412 = vld [vmem:[#allocation5 + $0x2630] sm:$0xff]
    %v2413 = vld [vmem:[#allocation5 + $0x2638] sm:$0xff]
    %v2414 = vld [vmem:[#allocation5 + $0x2640] sm:$0xff]
    %v2415 = vld [vmem:[#allocation5 + $0x2648] sm:$0xff]
    %v2416 = vld [vmem:[#allocation5 + $0x2650] sm:$0xff]
    %v2417 = vld [vmem:[#allocation5 + $0x2658] sm:$0xff]
    %v2418 = vld [vmem:[#allocation5 + $0x2660] sm:$0xff]
    %v2419 = vld [vmem:[#allocation5 + $0x2668] sm:$0xff]
    %v2420 = vld [vmem:[#allocation5 + $0x2670] sm:$0xff]
    %v2421 = vld [vmem:[#allocation5 + $0x2678] sm:$0xff]
    %v2422 = vld [vmem:[#allocation5 + $0x2680] sm:$0xff]
    %v2423 = vld [vmem:[#allocation5 + $0x2688] sm:$0xff]
    %v2424 = vld [vmem:[#allocation5 + $0x2690] sm:$0xff]
    %v2425 = vld [vmem:[#allocation5 + $0x2698] sm:$0xff]
    %v2426 = vld [vmem:[#allocation5 + $0x26a0] sm:$0xff]
    %v2427 = vld [vmem:[#allocation5 + $0x26a8] sm:$0xff]
    %v2428 = vld [vmem:[#allocation5 + $0x26b0] sm:$0xff]
    %v2429 = vld [vmem:[#allocation5 + $0x26b8] sm:$0xff]
    %v2430 = vld [vmem:[#allocation5 + $0x26c0] sm:$0xff]
    %v2431 = vld [vmem:[#allocation5 + $0x26c8] sm:$0xff]
    %v2432 = vld [vmem:[#allocation5 + $0x26d0] sm:$0xff]
    %v2433 = vld [vmem:[#allocation5 + $0x26d8] sm:$0xff]
    %v2434 = vld [vmem:[#allocation5 + $0x26e0] sm:$0xff]
    %v2435 = vld [vmem:[#allocation5 + $0x26e8] sm:$0xff]
    %v2436 = vld [vmem:[#allocation5 + $0x26f0] sm:$0xff]
    %v2437 = vld [vmem:[#allocation5 + $0x26f8] sm:$0xff]
    %v2438 = vld [vmem:[#allocation5 + $0x2700] sm:$0xff]
    %v2439 = vld [vmem:[#allocation5 + $0x2708] sm:$0xff]
    %v2440 = vld [vmem:[#allocation5 + $0x2710] sm:$0xff]
    %v2441 = vld [vmem:[#allocation5 + $0x2718] sm:$0xff]
    %v2442 = vld [vmem:[#allocation5 + $0x2720] sm:$0xff]
    %v2443 = vld [vmem:[#allocation5 + $0x2728] sm:$0xff]
    %v2444 = vld [vmem:[#allocation5 + $0x2730] sm:$0xff]
    %v2445 = vld [vmem:[#allocation5 + $0x2738] sm:$0xff]
    %v2446 = vld [vmem:[#allocation5 + $0x2740] sm:$0xff]
    %v2447 = vld [vmem:[#allocation5 + $0x2748] sm:$0xff]
    %v2448 = vld [vmem:[#allocation5 + $0x2750] sm:$0xff]
    %v2449 = vld [vmem:[#allocation5 + $0x2758] sm:$0xff]
    %v2450 = vld [vmem:[#allocation5 + $0x2760] sm:$0xff]
    %v2451 = vld [vmem:[#allocation5 + $0x2768] sm:$0xff]
    %v2452 = vld [vmem:[#allocation5 + $0x2770] sm:$0xff]
    %v2453 = vld [vmem:[#allocation5 + $0x2778] sm:$0xff]
    %v2454 = vld [vmem:[#allocation5 + $0x2780] sm:$0xff]
    %v2455 = vld [vmem:[#allocation5 + $0x2788] sm:$0xff]
    %v2456 = vld [vmem:[#allocation5 + $0x2790] sm:$0xff]
    %v2457 = vld [vmem:[#allocation5 + $0x2798] sm:$0xff]
    %v2458 = vld [vmem:[#allocation5 + $0x27a0] sm:$0xff]
    %v2459 = vld [vmem:[#allocation5 + $0x27a8] sm:$0xff]
    %v2460 = vld [vmem:[#allocation5 + $0x27b0] sm:$0xff]
    %v2461 = vld [vmem:[#allocation5 + $0x27b8] sm:$0xff]
    %v2462 = vld [vmem:[#allocation5 + $0x27c0] sm:$0xff]
    %v2463 = vld [vmem:[#allocation5 + $0x27c8] sm:$0xff]
    %v2464 = vld [vmem:[#allocation5 + $0x27d0] sm:$0xff]
    %v2465 = vld [vmem:[#allocation5 + $0x27d8] sm:$0xff]
    %v2466 = vld [vmem:[#allocation5 + $0x27e0] sm:$0xff]
    %v2467 = vld [vmem:[#allocation5 + $0x27e8] sm:$0xff]
    %v2468 = vld [vmem:[#allocation5 + $0x27f0] sm:$0xff]
    %v2469 = vld [vmem:[#allocation5 + $0x27f8] sm:$0xff]
    %v2470 = vld [vmem:[#allocation5 + $0x2800] sm:$0xff]
    %v2471 = vld [vmem:[#allocation5 + $0x2808] sm:$0xff]
    %v2472 = vld [vmem:[#allocation5 + $0x2810] sm:$0xff]
    %v2473 = vld [vmem:[#allocation5 + $0x2818] sm:$0xff]
    %v2474 = vld [vmem:[#allocation5 + $0x2820] sm:$0xff]
    %v2475 = vld [vmem:[#allocation5 + $0x2828] sm:$0xff]
    %v2476 = vld [vmem:[#allocation5 + $0x2830] sm:$0xff]
    %v2477 = vld [vmem:[#allocation5 + $0x2838] sm:$0xff]
    %v2478 = vld [vmem:[#allocation5 + $0x2840] sm:$0xff]
    %v2479 = vld [vmem:[#allocation5 + $0x2848] sm:$0xff]
    %v2480 = vld [vmem:[#allocation5 + $0x2850] sm:$0xff]
    %v2481 = vld [vmem:[#allocation5 + $0x2858] sm:$0xff]
    %v2482 = vld [vmem:[#allocation5 + $0x2860] sm:$0xff]
    %v2483 = vld [vmem:[#allocation5 + $0x2868] sm:$0xff]
    %v2484 = vld [vmem:[#allocation5 + $0x2870] sm:$0xff]
    %v2485 = vld [vmem:[#allocation5 + $0x2878] sm:$0xff]
    %v2486 = vld [vmem:[#allocation5 + $0x2880] sm:$0xff]
    %v2487 = vld [vmem:[#allocation5 + $0x2888] sm:$0xff]
    %v2488 = vld [vmem:[#allocation5 + $0x2890] sm:$0xff]
    %v2489 = vld [vmem:[#allocation5 + $0x2898] sm:$0xff]
    %v2490 = vld [vmem:[#allocation5 + $0x28a0] sm:$0xff]
    %v2491 = vld [vmem:[#allocation5 + $0x28a8] sm:$0xff]
    %v2492 = vld [vmem:[#allocation5 + $0x28b0] sm:$0xff]
    %v2493 = vld [vmem:[#allocation5 + $0x28b8] sm:$0xff]
    %v2494 = vld [vmem:[#allocation5 + $0x28c0] sm:$0xff]
    %v2495 = vld [vmem:[#allocation5 + $0x28c8] sm:$0xff]
    %v2496 = vld [vmem:[#allocation5 + $0x28d0] sm:$0xff]
    %v2497 = vld [vmem:[#allocation5 + $0x28d8] sm:$0xff]
    %v2498 = vld [vmem:[#allocation5 + $0x28e0] sm:$0xff]
    %v2499 = vld [vmem:[#allocation5 + $0x28e8] sm:$0xff]
    %v2500 = vld [vmem:[#allocation5 + $0x28f0] sm:$0xff]
    %v2501 = vld [vmem:[#allocation5 + $0x28f8] sm:$0xff]
    %v2502 = vld [vmem:[#allocation7] sm:$0x3]
    %v2504 = vlaneseq
    %v2505 = vshrl.u32 %v2504, 7
    %v2506 = vsub.s32 0, %v2505
    %v2507 = vrot.slane %v2502, %v2506
    %v2508 = vlaneseq
    %v2509 = vshrl.u32 %v2508, 7
    %v2510 = vsub.s32 1, %v2509
    %v2511 = vrot.slane %v2502, %v2510
    %2514 = vmatprep.subr.mxu0 %v1191
    %2515 = vmatpush1.msra.mxu0 %v1190
    %2516 = vmatprep.subr.mxu0 %v1193
    %2517 = vmatpush1.msra.mxu0 %v1192
    %2518 = vmatprep.subr.mxu0 %v1195
    %2519 = vmatpush1.msra.mxu0 %v1194
    %2520 = vmatprep.subr.mxu0 %v1197
    %2521 = vmatpush1.msra.mxu0 %v1196
    %2522 = vmatprep.subr.mxu0 %v1199
    %2523 = vmatpush1.msra.mxu0 %v1198
    %2524 = vmatprep.subr.mxu0 %v1201
    %2525 = vmatpush1.msra.mxu0 %v1200
    %2526 = vmatprep.subr.mxu0 %v1203
    %2527 = vmatpush1.msra.mxu0 %v1202
    %2528 = vmatprep.subr.mxu0 %v1205
    %2529 = vmatpush1.msra.mxu0 %v1204
    %2530 = vmatprep.subr.mxu0 %v1207
    %2531 = vmatpush1.msra.mxu0 %v1206
    %2532 = vmatprep.subr.mxu0 %v1209
    %2533 = vmatpush1.msra.mxu0 %v1208
    %2534 = vmatprep.subr.mxu0 %v1211
    %2535 = vmatpush1.msra.mxu0 %v1210
    %2536 = vmatprep.subr.mxu0 %v1213
    %2537 = vmatpush1.msra.mxu0 %v1212
    %2538 = vmatprep.subr.mxu0 %v1215
    %2539 = vmatpush1.msra.mxu0 %v1214
    %2540 = vmatprep.subr.mxu0 %v1217
    %2541 = vmatpush1.msra.mxu0 %v1216
    %2542 = vmatprep.subr.mxu0 %v1219
    %2543 = vmatpush1.msra.mxu0 %v1218
    %2544 = vmatprep.subr.mxu0 %v1221
    %2545 = vmatpush1.msra.mxu0 %v1220
    %2546 = vmatprep.subr.mxu0 %v1223
    %2547 = vmatpush1.msra.mxu0 %v1222
    %2548 = vmatprep.subr.mxu0 %v1225
    %2549 = vmatpush1.msra.mxu0 %v1224
    %2550 = vmatprep.subr.mxu0 %v1227
    %2551 = vmatpush1.msra.mxu0 %v1226
    %2552 = vmatprep.subr.mxu0 %v1229
    %2553 = vmatpush1.msra.mxu0 %v1228
    %2554 = vmatprep.subr.mxu0 %v1231
    %2555 = vmatpush1.msra.mxu0 %v1230
    %2556 = vmatprep.subr.mxu0 %v1233
    %2557 = vmatpush1.msra.mxu0 %v1232
    %2558 = vmatprep.subr.mxu0 %v1235
    %2559 = vmatpush1.msra.mxu0 %v1234
    %2560 = vmatprep.subr.mxu0 %v1237
    %2561 = vmatpush1.msra.mxu0 %v1236
    %2562 = vmatprep.subr.mxu0 %v1239
    %2563 = vmatpush1.msra.mxu0 %v1238
    %2564 = vmatprep.subr.mxu0 %v1241
    %2565 = vmatpush1.msra.mxu0 %v1240
    %2566 = vmatprep.subr.mxu0 %v1243
    %2567 = vmatpush1.msra.mxu0 %v1242
    %2568 = vmatprep.subr.mxu0 %v1245
    %2569 = vmatpush1.msra.mxu0 %v1244
    %2570 = vmatprep.subr.mxu0 %v1247
    %2571 = vmatpush1.msra.mxu0 %v1246
    %2572 = vmatprep.subr.mxu0 %v1249
    %2573 = vmatpush1.msra.mxu0 %v1248
    %2574 = vmatprep.subr.mxu0 %v1251
    %2575 = vmatpush1.msra.mxu0 %v1250
    %2576 = vmatprep.subr.mxu0 %v1253
    %2577 = vmatpush1.msra.mxu0 %v1252
    %2578 = vmatprep.mubr.f32.mxu0 %v1150
    %2579 = vmatmul.mubr.f32.gmra.mrb[0].mxu0 %v1149
    %v2580 = vpop.f32.mrb[0].mxu0
    %v2581 = vadd.f32 %v2507, %v2580
    %v2582 = vpop.f32.mrb[0].mxu0
    %v2583 = vadd.f32 %v2511, %v2582
    %2584 = vdwg.mxu0
    %2585 = vmatprep.subr.mxu0 %v1255
    %2586 = vmatpush1.msra.mxu0 %v1254
    %2587 = vmatprep.subr.mxu0 %v1257
    %2588 = vmatpush1.msra.mxu0 %v1256
    %2589 = vmatprep.subr.mxu0 %v1259
    %2590 = vmatpush1.msra.mxu0 %v1258
    %2591 = vmatprep.subr.mxu0 %v1261
    %2592 = vmatpush1.msra.mxu0 %v1260
    %2593 = vmatprep.subr.mxu0 %v1263
    %2594 = vmatpush1.msra.mxu0 %v1262
    %2595 = vmatprep.subr.mxu0 %v1265
    %2596 = vmatpush1.msra.mxu0 %v1264
    %2597 = vmatprep.subr.mxu0 %v1267
    %2598 = vmatpush1.msra.mxu0 %v1266
    %2599 = vmatprep.subr.mxu0 %v1269
    %2600 = vmatpush1.msra.mxu0 %v1268
    %2601 = vmatprep.subr.mxu0 %v1271
    %2602 = vmatpush1.msra.mxu0 %v1270
    %2603 = vmatprep.subr.mxu0 %v1273
    %2604 = vmatpush1.msra.mxu0 %v1272
    %2605 = vmatprep.subr.mxu0 %v1275
    %2606 = vmatpush1.msra.mxu0 %v1274
    %2607 = vmatprep.subr.mxu0 %v1277
    %2608 = vmatpush1.msra.mxu0 %v1276
    %2609 = vmatprep.subr.mxu0 %v1279
    %2610 = vmatpush1.msra.mxu0 %v1278
    %2611 = vmatprep.subr.mxu0 %v1281
    %2612 = vmatpush1.msra.mxu0 %v1280
    %2613 = vmatprep.subr.mxu0 %v1283
    %2614 = vmatpush1.msra.mxu0 %v1282
    %2615 = vmatprep.subr.mxu0 %v1285
    %2616 = vmatpush1.msra.mxu0 %v1284
    %2617 = vmatprep.subr.mxu0 %v1287
    %2618 = vmatpush1.msra.mxu0 %v1286
    %2619 = vmatprep.subr.mxu0 %v1289
    %2620 = vmatpush1.msra.mxu0 %v1288
    %2621 = vmatprep.subr.mxu0 %v1291
    %2622 = vmatpush1.msra.mxu0 %v1290
    %2623 = vmatprep.subr.mxu0 %v1293
    %2624 = vmatpush1.msra.mxu0 %v1292
    %2625 = vmatprep.subr.mxu0 %v1295
    %2626 = vmatpush1.msra.mxu0 %v1294
    %2627 = vmatprep.subr.mxu0 %v1297
    %2628 = vmatpush1.msra.mxu0 %v1296
    %2629 = vmatprep.subr.mxu0 %v1299
    %2630 = vmatpush1.msra.mxu0 %v1298
    %2631 = vmatprep.subr.mxu0 %v1301
    %2632 = vmatpush1.msra.mxu0 %v1300
    %2633 = vmatprep.subr.mxu0 %v1303
    %2634 = vmatpush1.msra.mxu0 %v1302
    %2635 = vmatprep.subr.mxu0 %v1305
    %2636 = vmatpush1.msra.mxu0 %v1304
    %2637 = vmatprep.subr.mxu0 %v1307
    %2638 = vmatpush1.msra.mxu0 %v1306
    %2639 = vmatprep.subr.mxu0 %v1309
    %2640 = vmatpush1.msra.mxu0 %v1308
    %2641 = vmatprep.subr.mxu0 %v1311
    %2642 = vmatpush1.msra.mxu0 %v1310
    %2643 = vmatprep.subr.mxu0 %v1313
    %2644 = vmatpush1.msra.mxu0 %v1312
    %2645 = vmatprep.subr.mxu0 %v1315
    %2646 = vmatpush1.msra.mxu0 %v1314
    %2647 = vmatprep.subr.mxu0 %v1317
    %2648 = vmatpush1.msra.mxu0 %v1316
    %2649 = vmatprep.mubr.f32.mxu0 %v1152
    %2650 = vmatmul.mubr.f32.gmra.mrb[0].mxu0 %v1151
    %v2651 = vpop.f32.mrb[0].mxu0
    %v2652 = vadd.f32 %v2581, %v2651
    %v2653 = vpop.f32.mrb[0].mxu0
    %v2654 = vadd.f32 %v2583, %v2653
    %2655 = vdwg.mxu0
    %2656 = vmatprep.subr.mxu0 %v1319
    %2657 = vmatpush1.msra.mxu0 %v1318
    %2658 = vmatprep.subr.mxu0 %v1321
    %2659 = vmatpush1.msra.mxu0 %v1320
    %2660 = vmatprep.subr.mxu0 %v1323
    %2661 = vmatpush1.msra.mxu0 %v1322
    %2662 = vmatprep.subr.mxu0 %v1325
    %2663 = vmatpush1.msra.mxu0 %v1324
    %2664 = vmatprep.subr.mxu0 %v1327
    %2665 = vmatpush1.msra.mxu0 %v1326
    %2666 = vmatprep.subr.mxu0 %v1329
    %2667 = vmatpush1.msra.mxu0 %v1328
    %2668 = vmatprep.subr.mxu0 %v1331
    %2669 = vmatpush1.msra.mxu0 %v1330
    %2670 = vmatprep.subr.mxu0 %v1333
    %2671 = vmatpush1.msra.mxu0 %v1332
    %2672 = vmatprep.subr.mxu0 %v1335
    %2673 = vmatpush1.msra.mxu0 %v1334
    %2674 = vmatprep.subr.mxu0 %v1337
    %2675 = vmatpush1.msra.mxu0 %v1336
    %2676 = vmatprep.subr.mxu0 %v1339
    %2677 = vmatpush1.msra.mxu0 %v1338
    %2678 = vmatprep.subr.mxu0 %v1341
    %2679 = vmatpush1.msra.mxu0 %v1340
    %2680 = vmatprep.subr.mxu0 %v1343
    %2681 = vmatpush1.msra.mxu0 %v1342
    %2682 = vmatprep.subr.mxu0 %v1345
    %2683 = vmatpush1.msra.mxu0 %v1344
    %2684 = vmatprep.subr.mxu0 %v1347
    %2685 = vmatpush1.msra.mxu0 %v1346
    %2686 = vmatprep.subr.mxu0 %v1349
    %2687 = vmatpush1.msra.mxu0 %v1348
    %2688 = vmatprep.subr.mxu0 %v1351
    %2689 = vmatpush1.msra.mxu0 %v1350
    %2690 = vmatprep.subr.mxu0 %v1353
    %2691 = vmatpush1.msra.mxu0 %v1352
    %2692 = vmatprep.subr.mxu0 %v1355
    %2693 = vmatpush1.msra.mxu0 %v1354
    %2694 = vmatprep.subr.mxu0 %v1357
    %2695 = vmatpush1.msra.mxu0 %v1356
    %2696 = vmatprep.subr.mxu0 %v1359
    %2697 = vmatpush1.msra.mxu0 %v1358
    %2698 = vmatprep.subr.mxu0 %v1361
    %2699 = vmatpush1.msra.mxu0 %v1360
    %2700 = vmatprep.subr.mxu0 %v1363
    %2701 = vmatpush1.msra.mxu0 %v1362
    %2702 = vmatprep.subr.mxu0 %v1365
    %2703 = vmatpush1.msra.mxu0 %v1364
    %2704 = vmatprep.subr.mxu0 %v1367
    %2705 = vmatpush1.msra.mxu0 %v1366
    %2706 = vmatprep.subr.mxu0 %v1369
    %2707 = vmatpush1.msra.mxu0 %v1368
    %2708 = vmatprep.subr.mxu0 %v1371
    %2709 = vmatpush1.msra.mxu0 %v1370
    %2710 = vmatprep.subr.mxu0 %v1373
    %2711 = vmatpush1.msra.mxu0 %v1372
    %2712 = vmatprep.subr.mxu0 %v1375
    %2713 = vmatpush1.msra.mxu0 %v1374
    %2714 = vmatprep.subr.mxu0 %v1377
    %2715 = vmatpush1.msra.mxu0 %v1376
    %2716 = vmatprep.subr.mxu0 %v1379
    %2717 = vmatpush1.msra.mxu0 %v1378
    %2718 = vmatprep.subr.mxu0 %v1381
    %2719 = vmatpush1.msra.mxu0 %v1380
    %2720 = vmatprep.mubr.f32.mxu0 %v1154
    %2721 = vmatmul.mubr.f32.gmra.mrb[0].mxu0 %v1153
    %v2722 = vpop.f32.mrb[0].mxu0
    %v2723 = vadd.f32 %v2652, %v2722
    %v2724 = vpop.f32.mrb[0].mxu0
    %v2725 = vadd.f32 %v2654, %v2724
    %2726 = vdwg.mxu0
    %2727 = vmatprep.subr.mxu0 %v1383
    %2728 = vmatpush1.msra.mxu0 %v1382
    %2729 = vmatprep.subr.mxu0 %v1385
    %2730 = vmatpush1.msra.mxu0 %v1384
    %2731 = vmatprep.subr.mxu0 %v1387
    %2732 = vmatpush1.msra.mxu0 %v1386
    %2733 = vmatprep.subr.mxu0 %v1389
    %2734 = vmatpush1.msra.mxu0 %v1388
    %2735 = vmatprep.subr.mxu0 %v1391
    %2736 = vmatpush1.msra.mxu0 %v1390
    %2737 = vmatprep.subr.mxu0 %v1393
    %2738 = vmatpush1.msra.mxu0 %v1392
    %2739 = vmatprep.subr.mxu0 %v1395
    %2740 = vmatpush1.msra.mxu0 %v1394
    %2741 = vmatprep.subr.mxu0 %v1397
    %2742 = vmatpush1.msra.mxu0 %v1396
    %2743 = vmatprep.subr.mxu0 %v1399
    %2744 = vmatpush1.msra.mxu0 %v1398
    %2745 = vmatprep.subr.mxu0 %v1401
    %2746 = vmatpush1.msra.mxu0 %v1400
    %2747 = vmatprep.subr.mxu0 %v1403
    %2748 = vmatpush1.msra.mxu0 %v1402
    %2749 = vmatprep.subr.mxu0 %v1405
    %2750 = vmatpush1.msra.mxu0 %v1404
    %2751 = vmatprep.subr.mxu0 %v1407
    %2752 = vmatpush1.msra.mxu0 %v1406
    %2753 = vmatprep.subr.mxu0 %v1409
    %2754 = vmatpush1.msra.mxu0 %v1408
    %2755 = vmatprep.subr.mxu0 %v1411
    %2756 = vmatpush1.msra.mxu0 %v1410
    %2757 = vmatprep.subr.mxu0 %v1413
    %2758 = vmatpush1.msra.mxu0 %v1412
    %2759 = vmatprep.subr.mxu0 %v1415
    %2760 = vmatpush1.msra.mxu0 %v1414
    %2761 = vmatprep.subr.mxu0 %v1417
    %2762 = vmatpush1.msra.mxu0 %v1416
    %2763 = vmatprep.subr.mxu0 %v1419
    %2764 = vmatpush1.msra.mxu0 %v1418
    %2765 = vmatprep.subr.mxu0 %v1421
    %2766 = vmatpush1.msra.mxu0 %v1420
    %2767 = vmatprep.subr.mxu0 %v1423
    %2768 = vmatpush1.msra.mxu0 %v1422
    %2769 = vmatprep.subr.mxu0 %v1425
    %2770 = vmatpush1.msra.mxu0 %v1424
    %2771 = vmatprep.subr.mxu0 %v1427
    %2772 = vmatpush1.msra.mxu0 %v1426
    %2773 = vmatprep.subr.mxu0 %v1429
    %2774 = vmatpush1.msra.mxu0 %v1428
    %2775 = vmatprep.subr.mxu0 %v1431
    %2776 = vmatpush1.msra.mxu0 %v1430
    %2777 = vmatprep.subr.mxu0 %v1433
    %2778 = vmatpush1.msra.mxu0 %v1432
    %2779 = vmatprep.subr.mxu0 %v1435
    %2780 = vmatpush1.msra.mxu0 %v1434
    %2781 = vmatprep.subr.mxu0 %v1437
    %2782 = vmatpush1.msra.mxu0 %v1436
    %2783 = vmatprep.subr.mxu0 %v1439
    %2784 = vmatpush1.msra.mxu0 %v1438
    %2785 = vmatprep.subr.mxu0 %v1441
    %2786 = vmatpush1.msra.mxu0 %v1440
    %2787 = vmatprep.subr.mxu0 %v1443
    %2788 = vmatpush1.msra.mxu0 %v1442
    %2789 = vmatprep.subr.mxu0 %v1445
    %2790 = vmatpush1.msra.mxu0 %v1444
    %2791 = vmatprep.mubr.f32.mxu0 %v1156
    %2792 = vmatmul.mubr.f32.gmra.mrb[0].mxu0 %v1155
    %v2793 = vpop.f32.mrb[0].mxu0
    %v2794 = vadd.f32 %v2723, %v2793
    %v2795 = vpop.f32.mrb[0].mxu0
    %v2796 = vadd.f32 %v2725, %v2795
    %2797 = vdwg.mxu0
    %2798 = vmatprep.subr.mxu0 %v1447
    %2799 = vmatpush1.msra.mxu0 %v1446
    %2800 = vmatprep.subr.mxu0 %v1449
    %2801 = vmatpush1.msra.mxu0 %v1448
    %2802 = vmatprep.subr.mxu0 %v1451
    %2803 = vmatpush1.msra.mxu0 %v1450
    %2804 = vmatprep.subr.mxu0 %v1453
    %2805 = vmatpush1.msra.mxu0 %v1452
    %2806 = vmatprep.subr.mxu0 %v1455
    %2807 = vmatpush1.msra.mxu0 %v1454
    %2808 = vmatprep.subr.mxu0 %v1457
    %2809 = vmatpush1.msra.mxu0 %v1456
    %2810 = vmatprep.subr.mxu0 %v1459
    %2811 = vmatpush1.msra.mxu0 %v1458
    %2812 = vmatprep.subr.mxu0 %v1461
    %2813 = vmatpush1.msra.mxu0 %v1460
    %2814 = vmatprep.subr.mxu0 %v1463
    %2815 = vmatpush1.msra.mxu0 %v1462
    %2816 = vmatprep.subr.mxu0 %v1465
    %2817 = vmatpush1.msra.mxu0 %v1464
    %2818 = vmatprep.subr.mxu0 %v1467
    %2819 = vmatpush1.msra.mxu0 %v1466
    %2820 = vmatprep.subr.mxu0 %v1469
    %2821 = vmatpush1.msra.mxu0 %v1468
    %2822 = vmatprep.subr.mxu0 %v1471
    %2823 = vmatpush1.msra.mxu0 %v1470
    %2824 = vmatprep.subr.mxu0 %v1473
    %2825 = vmatpush1.msra.mxu0 %v1472
    %2826 = vmatprep.subr.mxu0 %v1475
    %2827 = vmatpush1.msra.mxu0 %v1474
    %2828 = vmatprep.subr.mxu0 %v1477
    %2829 = vmatpush1.msra.mxu0 %v1476
    %2830 = vmatprep.subr.mxu0 %v1479
    %2831 = vmatpush1.msra.mxu0 %v1478
    %2832 = vmatprep.subr.mxu0 %v1481
    %2833 = vmatpush1.msra.mxu0 %v1480
    %2834 = vmatprep.subr.mxu0 %v1483
    %2835 = vmatpush1.msra.mxu0 %v1482
    %2836 = vmatprep.subr.mxu0 %v1485
    %2837 = vmatpush1.msra.mxu0 %v1484
    %2838 = vmatprep.subr.mxu0 %v1487
    %2839 = vmatpush1.msra.mxu0 %v1486
    %2840 = vmatprep.subr.mxu0 %v1489
    %2841 = vmatpush1.msra.mxu0 %v1488
    %2842 = vmatprep.subr.mxu0 %v1491
    %2843 = vmatpush1.msra.mxu0 %v1490
    %2844 = vmatprep.subr.mxu0 %v1493
    %2845 = vmatpush1.msra.mxu0 %v1492
    %2846 = vmatprep.subr.mxu0 %v1495
    %2847 = vmatpush1.msra.mxu0 %v1494
    %2848 = vmatprep.subr.mxu0 %v1497
    %2849 = vmatpush1.msra.mxu0 %v1496
    %2850 = vmatprep.subr.mxu0 %v1499
    %2851 = vmatpush1.msra.mxu0 %v1498
    %2852 = vmatprep.subr.mxu0 %v1501
    %2853 = vmatpush1.msra.mxu0 %v1500
    %2854 = vmatprep.subr.mxu0 %v1503
    %2855 = vmatpush1.msra.mxu0 %v1502
    %2856 = vmatprep.subr.mxu0 %v1505
    %2857 = vmatpush1.msra.mxu0 %v1504
    %2858 = vmatprep.subr.mxu0 %v1507
    %2859 = vmatpush1.msra.mxu0 %v1506
    %2860 = vmatprep.subr.mxu0 %v1509
    %2861 = vmatpush1.msra.mxu0 %v1508
    %2862 = vmatprep.mubr.f32.mxu0 %v1158
    %2863 = vmatmul.mubr.f32.gmra.mrb[0].mxu0 %v1157
    %v2864 = vpop.f32.mrb[0].mxu0
    %v2865 = vadd.f32 %v2794, %v2864
    %v2866 = vpop.f32.mrb[0].mxu0
    %v2867 = vadd.f32 %v2796, %v2866
    %2868 = vdwg.mxu0
    %2869 = vmatprep.subr.mxu0 %v1511
    %2870 = vmatpush1.msra.mxu0 %v1510
    %2871 = vmatprep.subr.mxu0 %v1513
    %2872 = vmatpush1.msra.mxu0 %v1512
    %2873 = vmatprep.subr.mxu0 %v1515
    %2874 = vmatpush1.msra.mxu0 %v1514
    %2875 = vmatprep.subr.mxu0 %v1517
    %2876 = vmatpush1.msra.mxu0 %v1516
    %2877 = vmatprep.subr.mxu0 %v1519
    %2878 = vmatpush1.msra.mxu0 %v1518
    %2879 = vmatprep.subr.mxu0 %v1521
    %2880 = vmatpush1.msra.mxu0 %v1520
    %2881 = vmatprep.subr.mxu0 %v1523
    %2882 = vmatpush1.msra.mxu0 %v1522
    %2883 = vmatprep.subr.mxu0 %v1525
    %2884 = vmatpush1.msra.mxu0 %v1524
    %2885 = vmatprep.subr.mxu0 %v1527
    %2886 = vmatpush1.msra.mxu0 %v1526
    %2887 = vmatprep.subr.mxu0 %v1529
    %2888 = vmatpush1.msra.mxu0 %v1528
    %2889 = vmatprep.subr.mxu0 %v1531
    %2890 = vmatpush1.msra.mxu0 %v1530
    %2891 = vmatprep.subr.mxu0 %v1533
    %2892 = vmatpush1.msra.mxu0 %v1532
    %2893 = vmatprep.subr.mxu0 %v1535
    %2894 = vmatpush1.msra.mxu0 %v1534
    %2895 = vmatprep.subr.mxu0 %v1537
    %2896 = vmatpush1.msra.mxu0 %v1536
    %2897 = vmatprep.subr.mxu0 %v1539
    %2898 = vmatpush1.msra.mxu0 %v1538
    %2899 = vmatprep.subr.mxu0 %v1541
    %2900 = vmatpush1.msra.mxu0 %v1540
    %2901 = vmatprep.subr.mxu0 %v1543
    %2902 = vmatpush1.msra.mxu0 %v1542
    %2903 = vmatprep.subr.mxu0 %v1545
    %2904 = vmatpush1.msra.mxu0 %v1544
    %2905 = vmatprep.subr.mxu0 %v1547
    %2906 = vmatpush1.msra.mxu0 %v1546
    %2907 = vmatprep.subr.mxu0 %v1549
    %2908 = vmatpush1.msra.mxu0 %v1548
    %2909 = vmatprep.subr.mxu0 %v1551
    %2910 = vmatpush1.msra.mxu0 %v1550
    %2911 = vmatprep.subr.mxu0 %v1553
    %2912 = vmatpush1.msra.mxu0 %v1552
    %2913 = vmatprep.subr.mxu0 %v1555
    %2914 = vmatpush1.msra.mxu0 %v1554
    %2915 = vmatprep.subr.mxu0 %v1557
    %2916 = vmatpush1.msra.mxu0 %v1556
    %2917 = vmatprep.subr.mxu0 %v1559
    %2918 = vmatpush1.msra.mxu0 %v1558
    %2919 = vmatprep.subr.mxu0 %v1561
    %2920 = vmatpush1.msra.mxu0 %v1560
    %2921 = vmatprep.subr.mxu0 %v1563
    %2922 = vmatpush1.msra.mxu0 %v1562
    %2923 = vmatprep.subr.mxu0 %v1565
    %2924 = vmatpush1.msra.mxu0 %v1564
    %2925 = vmatprep.subr.mxu0 %v1567
    %2926 = vmatpush1.msra.mxu0 %v1566
    %2927 = vmatprep.subr.mxu0 %v1569
    %2928 = vmatpush1.msra.mxu0 %v1568
    %2929 = vmatprep.subr.mxu0 %v1571
    %2930 = vmatpush1.msra.mxu0 %v1570
    %2931 = vmatprep.subr.mxu0 %v1573
    %2932 = vmatpush1.msra.mxu0 %v1572
    %2933 = vmatprep.mubr.f32.mxu0 %v1160
    %2934 = vmatmul.mubr.f32.gmra.mrb[0].mxu0 %v1159
    %v2935 = vpop.f32.mrb[0].mxu0
    %v2936 = vadd.f32 %v2865, %v2935
    %v2937 = vpop.f32.mrb[0].mxu0
    %v2938 = vadd.f32 %v2867, %v2937
    %2939 = vdwg.mxu0
    %2940 = vmatprep.subr.mxu0 %v1575
    %2941 = vmatpush1.msra.mxu0 %v1574
    %2942 = vmatprep.subr.mxu0 %v1577
    %2943 = vmatpush1.msra.mxu0 %v1576
    %2944 = vmatprep.subr.mxu0 %v1579
    %2945 = vmatpush1.msra.mxu0 %v1578
    %2946 = vmatprep.subr.mxu0 %v1581
    %2947 = vmatpush1.msra.mxu0 %v1580
    %2948 = vmatprep.subr.mxu0 %v1583
    %2949 = vmatpush1.msra.mxu0 %v1582
    %2950 = vmatprep.subr.mxu0 %v1585
    %2951 = vmatpush1.msra.mxu0 %v1584
    %2952 = vmatprep.subr.mxu0 %v1587
    %2953 = vmatpush1.msra.mxu0 %v1586
    %2954 = vmatprep.subr.mxu0 %v1589
    %2955 = vmatpush1.msra.mxu0 %v1588
    %2956 = vmatprep.subr.mxu0 %v1591
    %2957 = vmatpush1.msra.mxu0 %v1590
    %2958 = vmatprep.subr.mxu0 %v1593
    %2959 = vmatpush1.msra.mxu0 %v1592
    %2960 = vmatprep.subr.mxu0 %v1595
    %2961 = vmatpush1.msra.mxu0 %v1594
    %2962 = vmatprep.subr.mxu0 %v1597
    %2963 = vmatpush1.msra.mxu0 %v1596
    %2964 = vmatprep.subr.mxu0 %v1599
    %2965 = vmatpush1.msra.mxu0 %v1598
    %2966 = vmatprep.subr.mxu0 %v1601
    %2967 = vmatpush1.msra.mxu0 %v1600
    %2968 = vmatprep.subr.mxu0 %v1603
    %2969 = vmatpush1.msra.mxu0 %v1602
    %2970 = vmatprep.subr.mxu0 %v1605
    %2971 = vmatpush1.msra.mxu0 %v1604
    %2972 = vmatprep.subr.mxu0 %v1607
    %2973 = vmatpush1.msra.mxu0 %v1606
    %2974 = vmatprep.subr.mxu0 %v1609
    %2975 = vmatpush1.msra.mxu0 %v1608
    %2976 = vmatprep.subr.mxu0 %v1611
    %2977 = vmatpush1.msra.mxu0 %v1610
    %2978 = vmatprep.subr.mxu0 %v1613
    %2979 = vmatpush1.msra.mxu0 %v1612
    %2980 = vmatprep.subr.mxu0 %v1615
    %2981 = vmatpush1.msra.mxu0 %v1614
    %2982 = vmatprep.subr.mxu0 %v1617
    %2983 = vmatpush1.msra.mxu0 %v1616
    %2984 = vmatprep.subr.mxu0 %v1619
    %2985 = vmatpush1.msra.mxu0 %v1618
    %2986 = vmatprep.subr.mxu0 %v1621
    %2987 = vmatpush1.msra.mxu0 %v1620
    %2988 = vmatprep.subr.mxu0 %v1623
    %2989 = vmatpush1.msra.mxu0 %v1622
    %2990 = vmatprep.subr.mxu0 %v1625
    %2991 = vmatpush1.msra.mxu0 %v1624
    %2992 = vmatprep.subr.mxu0 %v1627
    %2993 = vmatpush1.msra.mxu0 %v1626
    %2994 = vmatprep.subr.mxu0 %v1629
    %2995 = vmatpush1.msra.mxu0 %v1628
    %2996 = vmatprep.subr.mxu0 %v1631
    %2997 = vmatpush1.msra.mxu0 %v1630
    %2998 = vmatprep.subr.mxu0 %v1633
    %2999 = vmatpush1.msra.mxu0 %v1632
    %3000 = vmatprep.subr.mxu0 %v1635
    %3001 = vmatpush1.msra.mxu0 %v1634
    %3002 = vmatprep.subr.mxu0 %v1637
    %3003 = vmatpush1.msra.mxu0 %v1636
    %3004 = vmatprep.mubr.f32.mxu0 %v1162
    %3005 = vmatmul.mubr.f32.gmra.mrb[0].mxu0 %v1161
    %v3006 = vpop.f32.mrb[0].mxu0
    %v3007 = vadd.f32 %v2936, %v3006
    %v3008 = vpop.f32.mrb[0].mxu0
    %v3009 = vadd.f32 %v2938, %v3008
    %3010 = vdwg.mxu0
    %3011 = vmatprep.subr.mxu0 %v1639
    %3012 = vmatpush1.msra.mxu0 %v1638
    %3013 = vmatprep.subr.mxu0 %v1641
    %3014 = vmatpush1.msra.mxu0 %v1640
    %3015 = vmatprep.subr.mxu0 %v1643
    %3016 = vmatpush1.msra.mxu0 %v1642
    %3017 = vmatprep.subr.mxu0 %v1645
    %3018 = vmatpush1.msra.mxu0 %v1644
    %3019 = vmatprep.subr.mxu0 %v1647
    %3020 = vmatpush1.msra.mxu0 %v1646
    %3021 = vmatprep.subr.mxu0 %v1649
    %3022 = vmatpush1.msra.mxu0 %v1648
    %3023 = vmatprep.subr.mxu0 %v1651
    %3024 = vmatpush1.msra.mxu0 %v1650
    %3025 = vmatprep.subr.mxu0 %v1653
    %3026 = vmatpush1.msra.mxu0 %v1652
    %3027 = vmatprep.subr.mxu0 %v1655
    %3028 = vmatpush1.msra.mxu0 %v1654
    %3029 = vmatprep.subr.mxu0 %v1657
    %3030 = vmatpush1.msra.mxu0 %v1656
    %3031 = vmatprep.subr.mxu0 %v1659
    %3032 = vmatpush1.msra.mxu0 %v1658
    %3033 = vmatprep.subr.mxu0 %v1661
    %3034 = vmatpush1.msra.mxu0 %v1660
    %3035 = vmatprep.subr.mxu0 %v1663
    %3036 = vmatpush1.msra.mxu0 %v1662
    %3037 = vmatprep.subr.mxu0 %v1665
    %3038 = vmatpush1.msra.mxu0 %v1664
    %3039 = vmatprep.subr.mxu0 %v1667
    %3040 = vmatpush1.msra.mxu0 %v1666
    %3041 = vmatprep.subr.mxu0 %v1669
    %3042 = vmatpush1.msra.mxu0 %v1668
    %3043 = vmatprep.subr.mxu0 %v1671
    %3044 = vmatpush1.msra.mxu0 %v1670
    %3045 = vmatprep.subr.mxu0 %v1673
    %3046 = vmatpush1.msra.mxu0 %v1672
    %3047 = vmatprep.subr.mxu0 %v1675
    %3048 = vmatpush1.msra.mxu0 %v1674
    %3049 = vmatprep.subr.mxu0 %v1677
    %3050 = vmatpush1.msra.mxu0 %v1676
    %3051 = vmatprep.subr.mxu0 %v1679
    %3052 = vmatpush1.msra.mxu0 %v1678
    %3053 = vmatprep.subr.mxu0 %v1681
    %3054 = vmatpush1.msra.mxu0 %v1680
    %3055 = vmatprep.subr.mxu0 %v1683
    %3056 = vmatpush1.msra.mxu0 %v1682
    %3057 = vmatprep.subr.mxu0 %v1685
    %3058 = vmatpush1.msra.mxu0 %v1684
    %3059 = vmatprep.subr.mxu0 %v1687
    %3060 = vmatpush1.msra.mxu0 %v1686
    %3061 = vmatprep.subr.mxu0 %v1689
    %3062 = vmatpush1.msra.mxu0 %v1688
    %3063 = vmatprep.subr.mxu0 %v1691
    %3064 = vmatpush1.msra.mxu0 %v1690
    %3065 = vmatprep.subr.mxu0 %v1693
    %3066 = vmatpush1.msra.mxu0 %v1692
    %3067 = vmatprep.subr.mxu0 %v1695
    %3068 = vmatpush1.msra.mxu0 %v1694
    %3069 = vmatprep.subr.mxu0 %v1697
    %3070 = vmatpush1.msra.mxu0 %v1696
    %3071 = vmatprep.subr.mxu0 %v1699
    %3072 = vmatpush1.msra.mxu0 %v1698
    %3073 = vmatprep.subr.mxu0 %v1701
    %3074 = vmatpush1.msra.mxu0 %v1700
    %3075 = vmatprep.mubr.f32.mxu0 %v1164
    %3076 = vmatmul.mubr.f32.gmra.mrb[0].mxu0 %v1163
    %v3077 = vpop.f32.mrb[0].mxu0
    %v3078 = vadd.f32 %v3007, %v3077
    %v3079 = vpop.f32.mrb[0].mxu0
    %v3080 = vadd.f32 %v3009, %v3079
    %3081 = vdwg.mxu0
    %3082 = vmatprep.subr.mxu0 %v1703
    %3083 = vmatpush1.msra.mxu0 %v1702
    %3084 = vmatprep.subr.mxu0 %v1705
    %3085 = vmatpush1.msra.mxu0 %v1704
    %3086 = vmatprep.subr.mxu0 %v1707
    %3087 = vmatpush1.msra.mxu0 %v1706
    %3088 = vmatprep.subr.mxu0 %v1709
    %3089 = vmatpush1.msra.mxu0 %v1708
    %3090 = vmatprep.subr.mxu0 %v1711
    %3091 = vmatpush1.msra.mxu0 %v1710
    %3092 = vmatprep.subr.mxu0 %v1713
    %3093 = vmatpush1.msra.mxu0 %v1712
    %3094 = vmatprep.subr.mxu0 %v1715
    %3095 = vmatpush1.msra.mxu0 %v1714
    %3096 = vmatprep.subr.mxu0 %v1717
    %3097 = vmatpush1.msra.mxu0 %v1716
    %3098 = vmatprep.subr.mxu0 %v1719
    %3099 = vmatpush1.msra.mxu0 %v1718
    %3100 = vmatprep.subr.mxu0 %v1721
    %3101 = vmatpush1.msra.mxu0 %v1720
    %3102 = vmatprep.subr.mxu0 %v1723
    %3103 = vmatpush1.msra.mxu0 %v1722
    %3104 = vmatprep.subr.mxu0 %v1725
    %3105 = vmatpush1.msra.mxu0 %v1724
    %3106 = vmatprep.subr.mxu0 %v1727
    %3107 = vmatpush1.msra.mxu0 %v1726
    %3108 = vmatprep.subr.mxu0 %v1729
    %3109 = vmatpush1.msra.mxu0 %v1728
    %3110 = vmatprep.subr.mxu0 %v1731
    %3111 = vmatpush1.msra.mxu0 %v1730
    %3112 = vmatprep.subr.mxu0 %v1733
    %3113 = vmatpush1.msra.mxu0 %v1732
    %3114 = vmatprep.subr.mxu0 %v1735
    %3115 = vmatpush1.msra.mxu0 %v1734
    %3116 = vmatprep.subr.mxu0 %v1737
    %3117 = vmatpush1.msra.mxu0 %v1736
    %3118 = vmatprep.subr.mxu0 %v1739
    %3119 = vmatpush1.msra.mxu0 %v1738
    %3120 = vmatprep.subr.mxu0 %v1741
    %3121 = vmatpush1.msra.mxu0 %v1740
    %3122 = vmatprep.subr.mxu0 %v1743
    %3123 = vmatpush1.msra.mxu0 %v1742
    %3124 = vmatprep.subr.mxu0 %v1745
    %3125 = vmatpush1.msra.mxu0 %v1744
    %3126 = vmatprep.subr.mxu0 %v1747
    %3127 = vmatpush1.msra.mxu0 %v1746
    %3128 = vmatprep.subr.mxu0 %v1749
    %3129 = vmatpush1.msra.mxu0 %v1748
    %3130 = vmatprep.subr.mxu0 %v1751
    %3131 = vmatpush1.msra.mxu0 %v1750
    %3132 = vmatprep.subr.mxu0 %v1753
    %3133 = vmatpush1.msra.mxu0 %v1752
    %3134 = vmatprep.subr.mxu0 %v1755
    %3135 = vmatpush1.msra.mxu0 %v1754
    %3136 = vmatprep.subr.mxu0 %v1757
    %3137 = vmatpush1.msra.mxu0 %v1756
    %3138 = vmatprep.subr.mxu0 %v1759
    %3139 = vmatpush1.msra.mxu0 %v1758
    %3140 = vmatprep.subr.mxu0 %v1761
    %3141 = vmatpush1.msra.mxu0 %v1760
    %3142 = vmatprep.subr.mxu0 %v1763
    %3143 = vmatpush1.msra.mxu0 %v1762
    %3144 = vmatprep.subr.mxu0 %v1765
    %3145 = vmatpush1.msra.mxu0 %v1764
    %3146 = vmatprep.mubr.f32.mxu0 %v1166
    %3147 = vmatmul.mubr.f32.gmra.mrb[0].mxu0 %v1165
    %v3148 = vpop.f32.mrb[0].mxu0
    %v3149 = vadd.f32 %v3078, %v3148
    %v3150 = vpop.f32.mrb[0].mxu0
    %v3151 = vadd.f32 %v3080, %v3150
    %3152 = vdwg.mxu0
    %3153 = vmatprep.subr.mxu0 %v1767
    %3154 = vmatpush1.msra.mxu0 %v1766
    %3155 = vmatprep.subr.mxu0 %v1769
    %3156 = vmatpush1.msra.mxu0 %v1768
    %3157 = vmatprep.subr.mxu0 %v1771
    %3158 = vmatpush1.msra.mxu0 %v1770
    %3159 = vmatprep.subr.mxu0 %v1773
    %3160 = vmatpush1.msra.mxu0 %v1772
    %3161 = vmatprep.subr.mxu0 %v1775
    %3162 = vmatpush1.msra.mxu0 %v1774
    %3163 = vmatprep.subr.mxu0 %v1777
    %3164 = vmatpush1.msra.mxu0 %v1776
    %3165 = vmatprep.subr.mxu0 %v1779
    %3166 = vmatpush1.msra.mxu0 %v1778
    %3167 = vmatprep.subr.mxu0 %v1781
    %3168 = vmatpush1.msra.mxu0 %v1780
    %3169 = vmatprep.subr.mxu0 %v1783
    %3170 = vmatpush1.msra.mxu0 %v1782
    %3171 = vmatprep.subr.mxu0 %v1785
    %3172 = vmatpush1.msra.mxu0 %v1784
    %3173 = vmatprep.subr.mxu0 %v1787
    %3174 = vmatpush1.msra.mxu0 %v1786
    %3175 = vmatprep.subr.mxu0 %v1789
    %3176 = vmatpush1.msra.mxu0 %v1788
    %3177 = vmatprep.subr.mxu0 %v1791
    %3178 = vmatpush1.msra.mxu0 %v1790
    %3179 = vmatprep.subr.mxu0 %v1793
    %3180 = vmatpush1.msra.mxu0 %v1792
    %3181 = vmatprep.subr.mxu0 %v1795
    %3182 = vmatpush1.msra.mxu0 %v1794
    %3183 = vmatprep.subr.mxu0 %v1797
    %3184 = vmatpush1.msra.mxu0 %v1796
    %3185 = vmatprep.subr.mxu0 %v1799
    %3186 = vmatpush1.msra.mxu0 %v1798
    %3187 = vmatprep.subr.mxu0 %v1801
    %3188 = vmatpush1.msra.mxu0 %v1800
    %3189 = vmatprep.subr.mxu0 %v1803
    %3190 = vmatpush1.msra.mxu0 %v1802
    %3191 = vmatprep.subr.mxu0 %v1805
    %3192 = vmatpush1.msra.mxu0 %v1804
    %3193 = vmatprep.subr.mxu0 %v1807
    %3194 = vmatpush1.msra.mxu0 %v1806
    %3195 = vmatprep.subr.mxu0 %v1809
    %3196 = vmatpush1.msra.mxu0 %v1808
    %3197 = vmatprep.subr.mxu0 %v1811
    %3198 = vmatpush1.msra.mxu0 %v1810
    %3199 = vmatprep.subr.mxu0 %v1813
    %3200 = vmatpush1.msra.mxu0 %v1812
    %3201 = vmatprep.subr.mxu0 %v1815
    %3202 = vmatpush1.msra.mxu0 %v1814
    %3203 = vmatprep.subr.mxu0 %v1817
    %3204 = vmatpush1.msra.mxu0 %v1816
    %3205 = vmatprep.subr.mxu0 %v1819
    %3206 = vmatpush1.msra.mxu0 %v1818
    %3207 = vmatprep.subr.mxu0 %v1821
    %3208 = vmatpush1.msra.mxu0 %v1820
    %3209 = vmatprep.subr.mxu0 %v1823
    %3210 = vmatpush1.msra.mxu0 %v1822
    %3211 = vmatprep.subr.mxu0 %v1825
    %3212 = vmatpush1.msra.mxu0 %v1824
    %3213 = vmatprep.subr.mxu0 %v1827
    %3214 = vmatpush1.msra.mxu0 %v1826
    %3215 = vmatprep.subr.mxu0 %v1829
    %3216 = vmatpush1.msra.mxu0 %v1828
    %3217 = vmatprep.mubr.f32.mxu0 %v1168
    %3218 = vmatmul.mubr.f32.gmra.mrb[0].mxu0 %v1167
    %v3219 = vpop.f32.mrb[0].mxu0
    %v3220 = vadd.f32 %v3149, %v3219
    %v3221 = vpop.f32.mrb[0].mxu0
    %v3222 = vadd.f32 %v3151, %v3221
    %3223 = vdwg.mxu0
    %3224 = vmatprep.subr.mxu0 %v1831
    %3225 = vmatpush1.msra.mxu0 %v1830
    %3226 = vmatprep.subr.mxu0 %v1833
    %3227 = vmatpush1.msra.mxu0 %v1832
    %3228 = vmatprep.subr.mxu0 %v1835
    %3229 = vmatpush1.msra.mxu0 %v1834
    %3230 = vmatprep.subr.mxu0 %v1837
    %3231 = vmatpush1.msra.mxu0 %v1836
    %3232 = vmatprep.subr.mxu0 %v1839
    %3233 = vmatpush1.msra.mxu0 %v1838
    %3234 = vmatprep.subr.mxu0 %v1841
    %3235 = vmatpush1.msra.mxu0 %v1840
    %3236 = vmatprep.subr.mxu0 %v1843
    %3237 = vmatpush1.msra.mxu0 %v1842
    %3238 = vmatprep.subr.mxu0 %v1845
    %3239 = vmatpush1.msra.mxu0 %v1844
    %3240 = vmatprep.subr.mxu0 %v1847
    %3241 = vmatpush1.msra.mxu0 %v1846
    %3242 = vmatprep.subr.mxu0 %v1849
    %3243 = vmatpush1.msra.mxu0 %v1848
    %3244 = vmatprep.subr.mxu0 %v1851
    %3245 = vmatpush1.msra.mxu0 %v1850
    %3246 = vmatprep.subr.mxu0 %v1853
    %3247 = vmatpush1.msra.mxu0 %v1852
    %3248 = vmatprep.subr.mxu0 %v1855
    %3249 = vmatpush1.msra.mxu0 %v1854
    %3250 = vmatprep.subr.mxu0 %v1857
    %3251 = vmatpush1.msra.mxu0 %v1856
    %3252 = vmatprep.subr.mxu0 %v1859
    %3253 = vmatpush1.msra.mxu0 %v1858
    %3254 = vmatprep.subr.mxu0 %v1861
    %3255 = vmatpush1.msra.mxu0 %v1860
    %3256 = vmatprep.subr.mxu0 %v1863
    %3257 = vmatpush1.msra.mxu0 %v1862
    %3258 = vmatprep.subr.mxu0 %v1865
    %3259 = vmatpush1.msra.mxu0 %v1864
    %3260 = vmatprep.subr.mxu0 %v1867
    %3261 = vmatpush1.msra.mxu0 %v1866
    %3262 = vmatprep.subr.mxu0 %v1869
    %3263 = vmatpush1.msra.mxu0 %v1868
    %3264 = vmatprep.subr.mxu0 %v1871
    %3265 = vmatpush1.msra.mxu0 %v1870
    %3266 = vmatprep.subr.mxu0 %v1873
    %3267 = vmatpush1.msra.mxu0 %v1872
    %3268 = vmatprep.subr.mxu0 %v1875
    %3269 = vmatpush1.msra.mxu0 %v1874
    %3270 = vmatprep.subr.mxu0 %v1877
    %3271 = vmatpush1.msra.mxu0 %v1876
    %3272 = vmatprep.subr.mxu0 %v1879
    %3273 = vmatpush1.msra.mxu0 %v1878
    %3274 = vmatprep.subr.mxu0 %v1881
    %3275 = vmatpush1.msra.mxu0 %v1880
    %3276 = vmatprep.subr.mxu0 %v1883
    %3277 = vmatpush1.msra.mxu0 %v1882
    %3278 = vmatprep.subr.mxu0 %v1885
    %3279 = vmatpush1.msra.mxu0 %v1884
    %3280 = vmatprep.subr.mxu0 %v1887
    %3281 = vmatpush1.msra.mxu0 %v1886
    %3282 = vmatprep.subr.mxu0 %v1889
    %3283 = vmatpush1.msra.mxu0 %v1888
    %3284 = vmatprep.subr.mxu0 %v1891
    %3285 = vmatpush1.msra.mxu0 %v1890
    %3286 = vmatprep.subr.mxu0 %v1893
    %3287 = vmatpush1.msra.mxu0 %v1892
    %3288 = vmatprep.mubr.f32.mxu0 %v1170
    %3289 = vmatmul.mubr.f32.gmra.mrb[0].mxu0 %v1169
    %v3290 = vpop.f32.mrb[0].mxu0
    %v3291 = vadd.f32 %v3220, %v3290
    %v3292 = vpop.f32.mrb[0].mxu0
    %v3293 = vadd.f32 %v3222, %v3292
    %3294 = vdwg.mxu0
    %3295 = vmatprep.subr.mxu0 %v1895
    %3296 = vmatpush1.msra.mxu0 %v1894
    %3297 = vmatprep.subr.mxu0 %v1897
    %3298 = vmatpush1.msra.mxu0 %v1896
    %3299 = vmatprep.subr.mxu0 %v1899
    %3300 = vmatpush1.msra.mxu0 %v1898
    %3301 = vmatprep.subr.mxu0 %v1901
    %3302 = vmatpush1.msra.mxu0 %v1900
    %3303 = vmatprep.subr.mxu0 %v1903
    %3304 = vmatpush1.msra.mxu0 %v1902
    %3305 = vmatprep.subr.mxu0 %v1905
    %3306 = vmatpush1.msra.mxu0 %v1904
    %3307 = vmatprep.subr.mxu0 %v1907
    %3308 = vmatpush1.msra.mxu0 %v1906
    %3309 = vmatprep.subr.mxu0 %v1909
    %3310 = vmatpush1.msra.mxu0 %v1908
    %3311 = vmatprep.subr.mxu0 %v1911
    %3312 = vmatpush1.msra.mxu0 %v1910
    %3313 = vmatprep.subr.mxu0 %v1913
    %3314 = vmatpush1.msra.mxu0 %v1912
    %3315 = vmatprep.subr.mxu0 %v1915
    %3316 = vmatpush1.msra.mxu0 %v1914
    %3317 = vmatprep.subr.mxu0 %v1917
    %3318 = vmatpush1.msra.mxu0 %v1916
    %3319 = vmatprep.subr.mxu0 %v1919
    %3320 = vmatpush1.msra.mxu0 %v1918
    %3321 = vmatprep.subr.mxu0 %v1921
    %3322 = vmatpush1.msra.mxu0 %v1920
    %3323 = vmatprep.subr.mxu0 %v1923
    %3324 = vmatpush1.msra.mxu0 %v1922
    %3325 = vmatprep.subr.mxu0 %v1925
    %3326 = vmatpush1.msra.mxu0 %v1924
    %3327 = vmatprep.subr.mxu0 %v1927
    %3328 = vmatpush1.msra.mxu0 %v1926
    %3329 = vmatprep.subr.mxu0 %v1929
    %3330 = vmatpush1.msra.mxu0 %v1928
    %3331 = vmatprep.subr.mxu0 %v1931
    %3332 = vmatpush1.msra.mxu0 %v1930
    %3333 = vmatprep.subr.mxu0 %v1933
    %3334 = vmatpush1.msra.mxu0 %v1932
    %3335 = vmatprep.subr.mxu0 %v1935
    %3336 = vmatpush1.msra.mxu0 %v1934
    %3337 = vmatprep.subr.mxu0 %v1937
    %3338 = vmatpush1.msra.mxu0 %v1936
    %3339 = vmatprep.subr.mxu0 %v1939
    %3340 = vmatpush1.msra.mxu0 %v1938
    %3341 = vmatprep.subr.mxu0 %v1941
    %3342 = vmatpush1.msra.mxu0 %v1940
    %3343 = vmatprep.subr.mxu0 %v1943
    %3344 = vmatpush1.msra.mxu0 %v1942
    %3345 = vmatprep.subr.mxu0 %v1945
    %3346 = vmatpush1.msra.mxu0 %v1944
    %3347 = vmatprep.subr.mxu0 %v1947
    %3348 = vmatpush1.msra.mxu0 %v1946
    %3349 = vmatprep.subr.mxu0 %v1949
    %3350 = vmatpush1.msra.mxu0 %v1948
    %3351 = vmatprep.subr.mxu0 %v1951
    %3352 = vmatpush1.msra.mxu0 %v1950
    %3353 = vmatprep.subr.mxu0 %v1953
    %3354 = vmatpush1.msra.mxu0 %v1952
    %3355 = vmatprep.subr.mxu0 %v1955
    %3356 = vmatpush1.msra.mxu0 %v1954
    %3357 = vmatprep.subr.mxu0 %v1957
    %3358 = vmatpush1.msra.mxu0 %v1956
    %3359 = vmatprep.mubr.f32.mxu0 %v1172
    %3360 = vmatmul.mubr.f32.gmra.mrb[0].mxu0 %v1171
    %v3361 = vpop.f32.mrb[0].mxu0
    %v3362 = vadd.f32 %v3291, %v3361
    %v3363 = vpop.f32.mrb[0].mxu0
    %v3364 = vadd.f32 %v3293, %v3363
    %3365 = vdwg.mxu0
    %3366 = vmatprep.subr.mxu0 %v1959
    %3367 = vmatpush1.msra.mxu0 %v1958
    %3368 = vmatprep.subr.mxu0 %v1961
    %3369 = vmatpush1.msra.mxu0 %v1960
    %3370 = vmatprep.subr.mxu0 %v1963
    %3371 = vmatpush1.msra.mxu0 %v1962
    %3372 = vmatprep.subr.mxu0 %v1965
    %3373 = vmatpush1.msra.mxu0 %v1964
    %3374 = vmatprep.subr.mxu0 %v1967
    %3375 = vmatpush1.msra.mxu0 %v1966
    %3376 = vmatprep.subr.mxu0 %v1969
    %3377 = vmatpush1.msra.mxu0 %v1968
    %3378 = vmatprep.subr.mxu0 %v1971
    %3379 = vmatpush1.msra.mxu0 %v1970
    %3380 = vmatprep.subr.mxu0 %v1973
    %3381 = vmatpush1.msra.mxu0 %v1972
    %3382 = vmatprep.subr.mxu0 %v1975
    %3383 = vmatpush1.msra.mxu0 %v1974
    %3384 = vmatprep.subr.mxu0 %v1977
    %3385 = vmatpush1.msra.mxu0 %v1976
    %3386 = vmatprep.subr.mxu0 %v1979
    %3387 = vmatpush1.msra.mxu0 %v1978
    %3388 = vmatprep.subr.mxu0 %v1981
    %3389 = vmatpush1.msra.mxu0 %v1980
    %3390 = vmatprep.subr.mxu0 %v1983
    %3391 = vmatpush1.msra.mxu0 %v1982
    %3392 = vmatprep.subr.mxu0 %v1985
    %3393 = vmatpush1.msra.mxu0 %v1984
    %3394 = vmatprep.subr.mxu0 %v1987
    %3395 = vmatpush1.msra.mxu0 %v1986
    %3396 = vmatprep.subr.mxu0 %v1989
    %3397 = vmatpush1.msra.mxu0 %v1988
    %3398 = vmatprep.subr.mxu0 %v1991
    %3399 = vmatpush1.msra.mxu0 %v1990
    %3400 = vmatprep.subr.mxu0 %v1993
    %3401 = vmatpush1.msra.mxu0 %v1992
    %3402 = vmatprep.subr.mxu0 %v1995
    %3403 = vmatpush1.msra.mxu0 %v1994
    %3404 = vmatprep.subr.mxu0 %v1997
    %3405 = vmatpush1.msra.mxu0 %v1996
    %3406 = vmatprep.subr.mxu0 %v1999
    %3407 = vmatpush1.msra.mxu0 %v1998
    %3408 = vmatprep.subr.mxu0 %v2001
    %3409 = vmatpush1.msra.mxu0 %v2000
    %3410 = vmatprep.subr.mxu0 %v2003
    %3411 = vmatpush1.msra.mxu0 %v2002
    %3412 = vmatprep.subr.mxu0 %v2005
    %3413 = vmatpush1.msra.mxu0 %v2004
    %3414 = vmatprep.subr.mxu0 %v2007
    %3415 = vmatpush1.msra.mxu0 %v2006
    %3416 = vmatprep.subr.mxu0 %v2009
    %3417 = vmatpush1.msra.mxu0 %v2008
    %3418 = vmatprep.subr.mxu0 %v2011
    %3419 = vmatpush1.msra.mxu0 %v2010
    %3420 = vmatprep.subr.mxu0 %v2013
    %3421 = vmatpush1.msra.mxu0 %v2012
    %3422 = vmatprep.subr.mxu0 %v2015
    %3423 = vmatpush1.msra.mxu0 %v2014
    %3424 = vmatprep.subr.mxu0 %v2017
    %3425 = vmatpush1.msra.mxu0 %v2016
    %3426 = vmatprep.subr.mxu0 %v2019
    %3427 = vmatpush1.msra.mxu0 %v2018
    %3428 = vmatprep.subr.mxu0 %v2021
    %3429 = vmatpush1.msra.mxu0 %v2020
    %3430 = vmatprep.mubr.f32.mxu0 %v1174
    %3431 = vmatmul.mubr.f32.gmra.mrb[0].mxu0 %v1173
    %v3432 = vpop.f32.mrb[0].mxu0
    %v3433 = vadd.f32 %v3362, %v3432
    %v3434 = vpop.f32.mrb[0].mxu0
    %v3435 = vadd.f32 %v3364, %v3434
    %3436 = vdwg.mxu0
    %3437 = vmatprep.subr.mxu0 %v2023
    %3438 = vmatpush1.msra.mxu0 %v2022
    %3439 = vmatprep.subr.mxu0 %v2025
    %3440 = vmatpush1.msra.mxu0 %v2024
    %3441 = vmatprep.subr.mxu0 %v2027
    %3442 = vmatpush1.msra.mxu0 %v2026
    %3443 = vmatprep.subr.mxu0 %v2029
    %3444 = vmatpush1.msra.mxu0 %v2028
    %3445 = vmatprep.subr.mxu0 %v2031
    %3446 = vmatpush1.msra.mxu0 %v2030
    %3447 = vmatprep.subr.mxu0 %v2033
    %3448 = vmatpush1.msra.mxu0 %v2032
    %3449 = vmatprep.subr.mxu0 %v2035
    %3450 = vmatpush1.msra.mxu0 %v2034
    %3451 = vmatprep.subr.mxu0 %v2037
    %3452 = vmatpush1.msra.mxu0 %v2036
    %3453 = vmatprep.subr.mxu0 %v2039
    %3454 = vmatpush1.msra.mxu0 %v2038
    %3455 = vmatprep.subr.mxu0 %v2041
    %3456 = vmatpush1.msra.mxu0 %v2040
    %3457 = vmatprep.subr.mxu0 %v2043
    %3458 = vmatpush1.msra.mxu0 %v2042
    %3459 = vmatprep.subr.mxu0 %v2045
    %3460 = vmatpush1.msra.mxu0 %v2044
    %3461 = vmatprep.subr.mxu0 %v2047
    %3462 = vmatpush1.msra.mxu0 %v2046
    %3463 = vmatprep.subr.mxu0 %v2049
    %3464 = vmatpush1.msra.mxu0 %v2048
    %3465 = vmatprep.subr.mxu0 %v2051
    %3466 = vmatpush1.msra.mxu0 %v2050
    %3467 = vmatprep.subr.mxu0 %v2053
    %3468 = vmatpush1.msra.mxu0 %v2052
    %3469 = vmatprep.subr.mxu0 %v2055
    %3470 = vmatpush1.msra.mxu0 %v2054
    %3471 = vmatprep.subr.mxu0 %v2057
    %3472 = vmatpush1.msra.mxu0 %v2056
    %3473 = vmatprep.subr.mxu0 %v2059
    %3474 = vmatpush1.msra.mxu0 %v2058
    %3475 = vmatprep.subr.mxu0 %v2061
    %3476 = vmatpush1.msra.mxu0 %v2060
    %3477 = vmatprep.subr.mxu0 %v2063
    %3478 = vmatpush1.msra.mxu0 %v2062
    %3479 = vmatprep.subr.mxu0 %v2065
    %3480 = vmatpush1.msra.mxu0 %v2064
    %3481 = vmatprep.subr.mxu0 %v2067
    %3482 = vmatpush1.msra.mxu0 %v2066
    %3483 = vmatprep.subr.mxu0 %v2069
    %3484 = vmatpush1.msra.mxu0 %v2068
    %3485 = vmatprep.subr.mxu0 %v2071
    %3486 = vmatpush1.msra.mxu0 %v2070
    %3487 = vmatprep.subr.mxu0 %v2073
    %3488 = vmatpush1.msra.mxu0 %v2072
    %3489 = vmatprep.subr.mxu0 %v2075
    %3490 = vmatpush1.msra.mxu0 %v2074
    %3491 = vmatprep.subr.mxu0 %v2077
    %3492 = vmatpush1.msra.mxu0 %v2076
    %3493 = vmatprep.subr.mxu0 %v2079
    %3494 = vmatpush1.msra.mxu0 %v2078
    %3495 = vmatprep.subr.mxu0 %v2081
    %3496 = vmatpush1.msra.mxu0 %v2080
    %3497 = vmatprep.subr.mxu0 %v2083
    %3498 = vmatpush1.msra.mxu0 %v2082
    %3499 = vmatprep.subr.mxu0 %v2085
    %3500 = vmatpush1.msra.mxu0 %v2084
    %3501 = vmatprep.mubr.f32.mxu0 %v1176
    %3502 = vmatmul.mubr.f32.gmra.mrb[0].mxu0 %v1175
    %v3503 = vpop.f32.mrb[0].mxu0
    %v3504 = vadd.f32 %v3433, %v3503
    %v3505 = vpop.f32.mrb[0].mxu0
    %v3506 = vadd.f32 %v3435, %v3505
    %3507 = vdwg.mxu0
    %3508 = vmatprep.subr.mxu0 %v2087
    %3509 = vmatpush1.msra.mxu0 %v2086
    %3510 = vmatprep.subr.mxu0 %v2089
    %3511 = vmatpush1.msra.mxu0 %v2088
    %3512 = vmatprep.subr.mxu0 %v2091
    %3513 = vmatpush1.msra.mxu0 %v2090
    %3514 = vmatprep.subr.mxu0 %v2093
    %3515 = vmatpush1.msra.mxu0 %v2092
    %3516 = vmatprep.subr.mxu0 %v2095
    %3517 = vmatpush1.msra.mxu0 %v2094
    %3518 = vmatprep.subr.mxu0 %v2097
    %3519 = vmatpush1.msra.mxu0 %v2096
    %3520 = vmatprep.subr.mxu0 %v2099
    %3521 = vmatpush1.msra.mxu0 %v2098
    %3522 = vmatprep.subr.mxu0 %v2101
    %3523 = vmatpush1.msra.mxu0 %v2100
    %3524 = vmatprep.subr.mxu0 %v2103
    %3525 = vmatpush1.msra.mxu0 %v2102
    %3526 = vmatprep.subr.mxu0 %v2105
    %3527 = vmatpush1.msra.mxu0 %v2104
    %3528 = vmatprep.subr.mxu0 %v2107
    %3529 = vmatpush1.msra.mxu0 %v2106
    %3530 = vmatprep.subr.mxu0 %v2109
    %3531 = vmatpush1.msra.mxu0 %v2108
    %3532 = vmatprep.subr.mxu0 %v2111
    %3533 = vmatpush1.msra.mxu0 %v2110
    %3534 = vmatprep.subr.mxu0 %v2113
    %3535 = vmatpush1.msra.mxu0 %v2112
    %3536 = vmatprep.subr.mxu0 %v2115
    %3537 = vmatpush1.msra.mxu0 %v2114
    %3538 = vmatprep.subr.mxu0 %v2117
    %3539 = vmatpush1.msra.mxu0 %v2116
    %3540 = vmatprep.subr.mxu0 %v2119
    %3541 = vmatpush1.msra.mxu0 %v2118
    %3542 = vmatprep.subr.mxu0 %v2121
    %3543 = vmatpush1.msra.mxu0 %v2120
    %3544 = vmatprep.subr.mxu0 %v2123
    %3545 = vmatpush1.msra.mxu0 %v2122
    %3546 = vmatprep.subr.mxu0 %v2125
    %3547 = vmatpush1.msra.mxu0 %v2124
    %3548 = vmatprep.subr.mxu0 %v2127
    %3549 = vmatpush1.msra.mxu0 %v2126
    %3550 = vmatprep.subr.mxu0 %v2129
    %3551 = vmatpush1.msra.mxu0 %v2128
    %3552 = vmatprep.subr.mxu0 %v2131
    %3553 = vmatpush1.msra.mxu0 %v2130
    %3554 = vmatprep.subr.mxu0 %v2133
    %3555 = vmatpush1.msra.mxu0 %v2132
    %3556 = vmatprep.subr.mxu0 %v2135
    %3557 = vmatpush1.msra.mxu0 %v2134
    %3558 = vmatprep.subr.mxu0 %v2137
    %3559 = vmatpush1.msra.mxu0 %v2136
    %3560 = vmatprep.subr.mxu0 %v2139
    %3561 = vmatpush1.msra.mxu0 %v2138
    %3562 = vmatprep.subr.mxu0 %v2141
    %3563 = vmatpush1.msra.mxu0 %v2140
    %3564 = vmatprep.subr.mxu0 %v2143
    %3565 = vmatpush1.msra.mxu0 %v2142
    %3566 = vmatprep.subr.mxu0 %v2145
    %3567 = vmatpush1.msra.mxu0 %v2144
    %3568 = vmatprep.subr.mxu0 %v2147
    %3569 = vmatpush1.msra.mxu0 %v2146
    %3570 = vmatprep.subr.mxu0 %v2149
    %3571 = vmatpush1.msra.mxu0 %v2148
    %3572 = vmatprep.mubr.f32.mxu0 %v1178
    %3573 = vmatmul.mubr.f32.gmra.mrb[0].mxu0 %v1177
    %v3574 = vpop.f32.mrb[0].mxu0
    %v3575 = vadd.f32 %v3504, %v3574
    %v3576 = vpop.f32.mrb[0].mxu0
    %v3577 = vadd.f32 %v3506, %v3576
    %3578 = vdwg.mxu0
    %3579 = vmatprep.subr.mxu0 %v2151
    %3580 = vmatpush1.msra.mxu0 %v2150
    %3581 = vmatprep.subr.mxu0 %v2153
    %3582 = vmatpush1.msra.mxu0 %v2152
    %3583 = vmatprep.subr.mxu0 %v2155
    %3584 = vmatpush1.msra.mxu0 %v2154
    %3585 = vmatprep.subr.mxu0 %v2157
    %3586 = vmatpush1.msra.mxu0 %v2156
    %3587 = vmatprep.subr.mxu0 %v2159
    %3588 = vmatpush1.msra.mxu0 %v2158
    %3589 = vmatprep.subr.mxu0 %v2161
    %3590 = vmatpush1.msra.mxu0 %v2160
    %3591 = vmatprep.subr.mxu0 %v2163
    %3592 = vmatpush1.msra.mxu0 %v2162
    %3593 = vmatprep.subr.mxu0 %v2165
    %3594 = vmatpush1.msra.mxu0 %v2164
    %3595 = vmatprep.subr.mxu0 %v2167
    %3596 = vmatpush1.msra.mxu0 %v2166
    %3597 = vmatprep.subr.mxu0 %v2169
    %3598 = vmatpush1.msra.mxu0 %v2168
    %3599 = vmatprep.subr.mxu0 %v2171
    %3600 = vmatpush1.msra.mxu0 %v2170
    %3601 = vmatprep.subr.mxu0 %v2173
    %3602 = vmatpush1.msra.mxu0 %v2172
    %3603 = vmatprep.subr.mxu0 %v2175
    %3604 = vmatpush1.msra.mxu0 %v2174
    %3605 = vmatprep.subr.mxu0 %v2177
    %3606 = vmatpush1.msra.mxu0 %v2176
    %3607 = vmatprep.subr.mxu0 %v2179
    %3608 = vmatpush1.msra.mxu0 %v2178
    %3609 = vmatprep.subr.mxu0 %v2181
    %3610 = vmatpush1.msra.mxu0 %v2180
    %3611 = vmatprep.subr.mxu0 %v2183
    %3612 = vmatpush1.msra.mxu0 %v2182
    %3613 = vmatprep.subr.mxu0 %v2185
    %3614 = vmatpush1.msra.mxu0 %v2184
    %3615 = vmatprep.subr.mxu0 %v2187
    %3616 = vmatpush1.msra.mxu0 %v2186
    %3617 = vmatprep.subr.mxu0 %v2189
    %3618 = vmatpush1.msra.mxu0 %v2188
    %3619 = vmatprep.subr.mxu0 %v2191
    %3620 = vmatpush1.msra.mxu0 %v2190
    %3621 = vmatprep.subr.mxu0 %v2193
    %3622 = vmatpush1.msra.mxu0 %v2192
    %3623 = vmatprep.subr.mxu0 %v2195
    %3624 = vmatpush1.msra.mxu0 %v2194
    %3625 = vmatprep.subr.mxu0 %v2197
    %3626 = vmatpush1.msra.mxu0 %v2196
    %3627 = vmatprep.subr.mxu0 %v2199
    %3628 = vmatpush1.msra.mxu0 %v2198
    %3629 = vmatprep.subr.mxu0 %v2201
    %3630 = vmatpush1.msra.mxu0 %v2200
    %3631 = vmatprep.subr.mxu0 %v2203
    %3632 = vmatpush1.msra.mxu0 %v2202
    %3633 = vmatprep.subr.mxu0 %v2205
    %3634 = vmatpush1.msra.mxu0 %v2204
    %3635 = vmatprep.subr.mxu0 %v2207
    %3636 = vmatpush1.msra.mxu0 %v2206
    %3637 = vmatprep.subr.mxu0 %v2209
    %3638 = vmatpush1.msra.mxu0 %v2208
    %3639 = vmatprep.subr.mxu0 %v2211
    %3640 = vmatpush1.msra.mxu0 %v2210
    %3641 = vmatprep.subr.mxu0 %v2213
    %3642 = vmatpush1.msra.mxu0 %v2212
    %3643 = vmatprep.mubr.f32.mxu0 %v1180
    %3644 = vmatmul.mubr.f32.gmra.mrb[0].mxu0 %v1179
    %v3645 = vpop.f32.mrb[0].mxu0
    %v3646 = vadd.f32 %v3575, %v3645
    %v3647 = vpop.f32.mrb[0].mxu0
    %v3648 = vadd.f32 %v3577, %v3647
    %3649 = vdwg.mxu0
    %3650 = vmatprep.subr.mxu0 %v2215
    %3651 = vmatpush1.msra.mxu0 %v2214
    %3652 = vmatprep.subr.mxu0 %v2217
    %3653 = vmatpush1.msra.mxu0 %v2216
    %3654 = vmatprep.subr.mxu0 %v2219
    %3655 = vmatpush1.msra.mxu0 %v2218
    %3656 = vmatprep.subr.mxu0 %v2221
    %3657 = vmatpush1.msra.mxu0 %v2220
    %3658 = vmatprep.subr.mxu0 %v2223
    %3659 = vmatpush1.msra.mxu0 %v2222
    %3660 = vmatprep.subr.mxu0 %v2225
    %3661 = vmatpush1.msra.mxu0 %v2224
    %3662 = vmatprep.subr.mxu0 %v2227
    %3663 = vmatpush1.msra.mxu0 %v2226
    %3664 = vmatprep.subr.mxu0 %v2229
    %3665 = vmatpush1.msra.mxu0 %v2228
    %3666 = vmatprep.subr.mxu0 %v2231
    %3667 = vmatpush1.msra.mxu0 %v2230
    %3668 = vmatprep.subr.mxu0 %v2233
    %3669 = vmatpush1.msra.mxu0 %v2232
    %3670 = vmatprep.subr.mxu0 %v2235
    %3671 = vmatpush1.msra.mxu0 %v2234
    %3672 = vmatprep.subr.mxu0 %v2237
    %3673 = vmatpush1.msra.mxu0 %v2236
    %3674 = vmatprep.subr.mxu0 %v2239
    %3675 = vmatpush1.msra.mxu0 %v2238
    %3676 = vmatprep.subr.mxu0 %v2241
    %3677 = vmatpush1.msra.mxu0 %v2240
    %3678 = vmatprep.subr.mxu0 %v2243
    %3679 = vmatpush1.msra.mxu0 %v2242
    %3680 = vmatprep.subr.mxu0 %v2245
    %3681 = vmatpush1.msra.mxu0 %v2244
    %3682 = vmatprep.subr.mxu0 %v2247
    %3683 = vmatpush1.msra.mxu0 %v2246
    %3684 = vmatprep.subr.mxu0 %v2249
    %3685 = vmatpush1.msra.mxu0 %v2248
    %3686 = vmatprep.subr.mxu0 %v2251
    %3687 = vmatpush1.msra.mxu0 %v2250
    %3688 = vmatprep.subr.mxu0 %v2253
    %3689 = vmatpush1.msra.mxu0 %v2252
    %3690 = vmatprep.subr.mxu0 %v2255
    %3691 = vmatpush1.msra.mxu0 %v2254
    %3692 = vmatprep.subr.mxu0 %v2257
    %3693 = vmatpush1.msra.mxu0 %v2256
    %3694 = vmatprep.subr.mxu0 %v2259
    %3695 = vmatpush1.msra.mxu0 %v2258
    %3696 = vmatprep.subr.mxu0 %v2261
    %3697 = vmatpush1.msra.mxu0 %v2260
    %3698 = vmatprep.subr.mxu0 %v2263
    %3699 = vmatpush1.msra.mxu0 %v2262
    %3700 = vmatprep.subr.mxu0 %v2265
    %3701 = vmatpush1.msra.mxu0 %v2264
    %3702 = vmatprep.subr.mxu0 %v2267
    %3703 = vmatpush1.msra.mxu0 %v2266
    %3704 = vmatprep.subr.mxu0 %v2269
    %3705 = vmatpush1.msra.mxu0 %v2268
    %3706 = vmatprep.subr.mxu0 %v2271
    %3707 = vmatpush1.msra.mxu0 %v2270
    %3708 = vmatprep.subr.mxu0 %v2273
    %3709 = vmatpush1.msra.mxu0 %v2272
    %3710 = vmatprep.subr.mxu0 %v2275
    %3711 = vmatpush1.msra.mxu0 %v2274
    %3712 = vmatprep.subr.mxu0 %v2277
    %3713 = vmatpush1.msra.mxu0 %v2276
    %3714 = vmatprep.mubr.f32.mxu0 %v1182
    %3715 = vmatmul.mubr.f32.gmra.mrb[0].mxu0 %v1181
    %v3716 = vpop.f32.mrb[0].mxu0
    %v3717 = vadd.f32 %v3646, %v3716
    %v3718 = vpop.f32.mrb[0].mxu0
    %v3719 = vadd.f32 %v3648, %v3718
    %3720 = vdwg.mxu0
    %3721 = vmatprep.subr.mxu0 %v2279
    %3722 = vmatpush1.msra.mxu0 %v2278
    %3723 = vmatprep.subr.mxu0 %v2281
    %3724 = vmatpush1.msra.mxu0 %v2280
    %3725 = vmatprep.subr.mxu0 %v2283
    %3726 = vmatpush1.msra.mxu0 %v2282
    %3727 = vmatprep.subr.mxu0 %v2285
    %3728 = vmatpush1.msra.mxu0 %v2284
    %3729 = vmatprep.subr.mxu0 %v2287
    %3730 = vmatpush1.msra.mxu0 %v2286
    %3731 = vmatprep.subr.mxu0 %v2289
    %3732 = vmatpush1.msra.mxu0 %v2288
    %3733 = vmatprep.subr.mxu0 %v2291
    %3734 = vmatpush1.msra.mxu0 %v2290
    %3735 = vmatprep.subr.mxu0 %v2293
    %3736 = vmatpush1.msra.mxu0 %v2292
    %3737 = vmatprep.subr.mxu0 %v2295
    %3738 = vmatpush1.msra.mxu0 %v2294
    %3739 = vmatprep.subr.mxu0 %v2297
    %3740 = vmatpush1.msra.mxu0 %v2296
    %3741 = vmatprep.subr.mxu0 %v2299
    %3742 = vmatpush1.msra.mxu0 %v2298
    %3743 = vmatprep.subr.mxu0 %v2301
    %3744 = vmatpush1.msra.mxu0 %v2300
    %3745 = vmatprep.subr.mxu0 %v2303
    %3746 = vmatpush1.msra.mxu0 %v2302
    %3747 = vmatprep.subr.mxu0 %v2305
    %3748 = vmatpush1.msra.mxu0 %v2304
    %3749 = vmatprep.subr.mxu0 %v2307
    %3750 = vmatpush1.msra.mxu0 %v2306
    %3751 = vmatprep.subr.mxu0 %v2309
    %3752 = vmatpush1.msra.mxu0 %v2308
    %3753 = vmatprep.subr.mxu0 %v2311
    %3754 = vmatpush1.msra.mxu0 %v2310
    %3755 = vmatprep.subr.mxu0 %v2313
    %3756 = vmatpush1.msra.mxu0 %v2312
    %3757 = vmatprep.subr.mxu0 %v2315
    %3758 = vmatpush1.msra.mxu0 %v2314
    %3759 = vmatprep.subr.mxu0 %v2317
    %3760 = vmatpush1.msra.mxu0 %v2316
    %3761 = vmatprep.subr.mxu0 %v2319
    %3762 = vmatpush1.msra.mxu0 %v2318
    %3763 = vmatprep.subr.mxu0 %v2321
    %3764 = vmatpush1.msra.mxu0 %v2320
    %3765 = vmatprep.subr.mxu0 %v2323
    %3766 = vmatpush1.msra.mxu0 %v2322
    %3767 = vmatprep.subr.mxu0 %v2325
    %3768 = vmatpush1.msra.mxu0 %v2324
    %3769 = vmatprep.subr.mxu0 %v2327
    %3770 = vmatpush1.msra.mxu0 %v2326
    %3771 = vmatprep.subr.mxu0 %v2329
    %3772 = vmatpush1.msra.mxu0 %v2328
    %3773 = vmatprep.subr.mxu0 %v2331
    %3774 = vmatpush1.msra.mxu0 %v2330
    %3775 = vmatprep.subr.mxu0 %v2333
    %3776 = vmatpush1.msra.mxu0 %v2332
    %3777 = vmatprep.subr.mxu0 %v2335
    %3778 = vmatpush1.msra.mxu0 %v2334
    %3779 = vmatprep.subr.mxu0 %v2337
    %3780 = vmatpush1.msra.mxu0 %v2336
    %3781 = vmatprep.subr.mxu0 %v2339
    %3782 = vmatpush1.msra.mxu0 %v2338
    %3783 = vmatprep.subr.mxu0 %v2341
    %3784 = vmatpush1.msra.mxu0 %v2340
    %3785 = vmatprep.mubr.f32.mxu0 %v1184
    %3786 = vmatmul.mubr.f32.gmra.mrb[0].mxu0 %v1183
    %v3787 = vpop.f32.mrb[0].mxu0
    %v3788 = vadd.f32 %v3717, %v3787
    %v3789 = vpop.f32.mrb[0].mxu0
    %v3790 = vadd.f32 %v3719, %v3789
    %3791 = vdwg.mxu0
    %3792 = vmatprep.subr.mxu0 %v2343
    %3793 = vmatpush1.msra.mxu0 %v2342
    %3794 = vmatprep.subr.mxu0 %v2345
    %3795 = vmatpush1.msra.mxu0 %v2344
    %3796 = vmatprep.subr.mxu0 %v2347
    %3797 = vmatpush1.msra.mxu0 %v2346
    %3798 = vmatprep.subr.mxu0 %v2349
    %3799 = vmatpush1.msra.mxu0 %v2348
    %3800 = vmatprep.subr.mxu0 %v2351
    %3801 = vmatpush1.msra.mxu0 %v2350
    %3802 = vmatprep.subr.mxu0 %v2353
    %3803 = vmatpush1.msra.mxu0 %v2352
    %3804 = vmatprep.subr.mxu0 %v2355
    %3805 = vmatpush1.msra.mxu0 %v2354
    %3806 = vmatprep.subr.mxu0 %v2357
    %3807 = vmatpush1.msra.mxu0 %v2356
    %3808 = vmatprep.subr.mxu0 %v2359
    %3809 = vmatpush1.msra.mxu0 %v2358
    %3810 = vmatprep.subr.mxu0 %v2361
    %3811 = vmatpush1.msra.mxu0 %v2360
    %3812 = vmatprep.subr.mxu0 %v2363
    %3813 = vmatpush1.msra.mxu0 %v2362
    %3814 = vmatprep.subr.mxu0 %v2365
    %3815 = vmatpush1.msra.mxu0 %v2364
    %3816 = vmatprep.subr.mxu0 %v2367
    %3817 = vmatpush1.msra.mxu0 %v2366
    %3818 = vmatprep.subr.mxu0 %v2369
    %3819 = vmatpush1.msra.mxu0 %v2368
    %3820 = vmatprep.subr.mxu0 %v2371
    %3821 = vmatpush1.msra.mxu0 %v2370
    %3822 = vmatprep.subr.mxu0 %v2373
    %3823 = vmatpush1.msra.mxu0 %v2372
    %3824 = vmatprep.subr.mxu0 %v2375
    %3825 = vmatpush1.msra.mxu0 %v2374
    %3826 = vmatprep.subr.mxu0 %v2377
    %3827 = vmatpush1.msra.mxu0 %v2376
    %3828 = vmatprep.subr.mxu0 %v2379
    %3829 = vmatpush1.msra.mxu0 %v2378
    %3830 = vmatprep.subr.mxu0 %v2381
    %3831 = vmatpush1.msra.mxu0 %v2380
    %3832 = vmatprep.subr.mxu0 %v2383
    %3833 = vmatpush1.msra.mxu0 %v2382
    %3834 = vmatprep.subr.mxu0 %v2385
    %3835 = vmatpush1.msra.mxu0 %v2384
    %3836 = vmatprep.subr.mxu0 %v2387
    %3837 = vmatpush1.msra.mxu0 %v2386
    %3838 = vmatprep.subr.mxu0 %v2389
    %3839 = vmatpush1.msra.mxu0 %v2388
    %3840 = vmatprep.subr.mxu0 %v2391
    %3841 = vmatpush1.msra.mxu0 %v2390
    %3842 = vmatprep.subr.mxu0 %v2393
    %3843 = vmatpush1.msra.mxu0 %v2392
    %3844 = vmatprep.subr.mxu0 %v2395
    %3845 = vmatpush1.msra.mxu0 %v2394
    %3846 = vmatprep.subr.mxu0 %v2397
    %3847 = vmatpush1.msra.mxu0 %v2396
    %3848 = vmatprep.subr.mxu0 %v2399
    %3849 = vmatpush1.msra.mxu0 %v2398
    %3850 = vmatprep.subr.mxu0 %v2401
    %3851 = vmatpush1.msra.mxu0 %v2400
    %3852 = vmatprep.subr.mxu0 %v2403
    %3853 = vmatpush1.msra.mxu0 %v2402
    %3854 = vmatprep.subr.mxu0 %v2405
    %3855 = vmatpush1.msra.mxu0 %v2404
    %3856 = vmatprep.mubr.f32.mxu0 %v1186
    %3857 = vmatmul.mubr.f32.gmra.mrb[0].mxu0 %v1185
    %v3858 = vpop.f32.mrb[0].mxu0
    %v3859 = vadd.f32 %v3788, %v3858
    %v3860 = vpop.f32.mrb[0].mxu0
    %v3861 = vadd.f32 %v3790, %v3860
    %3862 = vdwg.mxu0
    %3863 = vmatprep.subr.mxu0 %v2407
    %3864 = vmatpush1.msra.mxu0 %v2406
    %3865 = vmatprep.subr.mxu0 %v2409
    %3866 = vmatpush1.msra.mxu0 %v2408
    %3867 = vmatprep.subr.mxu0 %v2411
    %3868 = vmatpush1.msra.mxu0 %v2410
    %3869 = vmatprep.subr.mxu0 %v2413
    %3870 = vmatpush1.msra.mxu0 %v2412
    %3871 = vmatprep.subr.mxu0 %v2415
    %3872 = vmatpush1.msra.mxu0 %v2414
    %3873 = vmatprep.subr.mxu0 %v2417
    %3874 = vmatpush1.msra.mxu0 %v2416
    %3875 = vmatprep.subr.mxu0 %v2419
    %3876 = vmatpush1.msra.mxu0 %v2418
    %3877 = vmatprep.subr.mxu0 %v2421
    %3878 = vmatpush1.msra.mxu0 %v2420
    %3879 = vmatprep.subr.mxu0 %v2423
    %3880 = vmatpush1.msra.mxu0 %v2422
    %3881 = vmatprep.subr.mxu0 %v2425
    %3882 = vmatpush1.msra.mxu0 %v2424
    %3883 = vmatprep.subr.mxu0 %v2427
    %3884 = vmatpush1.msra.mxu0 %v2426
    %3885 = vmatprep.subr.mxu0 %v2429
    %3886 = vmatpush1.msra.mxu0 %v2428
    %3887 = vmatprep.subr.mxu0 %v2431
    %3888 = vmatpush1.msra.mxu0 %v2430
    %3889 = vmatprep.subr.mxu0 %v2433
    %3890 = vmatpush1.msra.mxu0 %v2432
    %3891 = vmatprep.subr.mxu0 %v2435
    %3892 = vmatpush1.msra.mxu0 %v2434
    %3893 = vmatprep.subr.mxu0 %v2437
    %3894 = vmatpush1.msra.mxu0 %v2436
    %3895 = vmatprep.subr.mxu0 %v2439
    %3896 = vmatpush1.msra.mxu0 %v2438
    %3897 = vmatprep.subr.mxu0 %v2441
    %3898 = vmatpush1.msra.mxu0 %v2440
    %3899 = vmatprep.subr.mxu0 %v2443
    %3900 = vmatpush1.msra.mxu0 %v2442
    %3901 = vmatprep.subr.mxu0 %v2445
    %3902 = vmatpush1.msra.mxu0 %v2444
    %3903 = vmatprep.subr.mxu0 %v2447
    %3904 = vmatpush1.msra.mxu0 %v2446
    %3905 = vmatprep.subr.mxu0 %v2449
    %3906 = vmatpush1.msra.mxu0 %v2448
    %3907 = vmatprep.subr.mxu0 %v2451
    %3908 = vmatpush1.msra.mxu0 %v2450
    %3909 = vmatprep.subr.mxu0 %v2453
    %3910 = vmatpush1.msra.mxu0 %v2452
    %3911 = vmatprep.subr.mxu0 %v2455
    %3912 = vmatpush1.msra.mxu0 %v2454
    %3913 = vmatprep.subr.mxu0 %v2457
    %3914 = vmatpush1.msra.mxu0 %v2456
    %3915 = vmatprep.subr.mxu0 %v2459
    %3916 = vmatpush1.msra.mxu0 %v2458
    %3917 = vmatprep.subr.mxu0 %v2461
    %3918 = vmatpush1.msra.mxu0 %v2460
    %3919 = vmatprep.subr.mxu0 %v2463
    %3920 = vmatpush1.msra.mxu0 %v2462
    %3921 = vmatprep.subr.mxu0 %v2465
    %3922 = vmatpush1.msra.mxu0 %v2464
    %3923 = vmatprep.subr.mxu0 %v2467
    %3924 = vmatpush1.msra.mxu0 %v2466
    %3925 = vmatprep.subr.mxu0 %v2469
    %3926 = vmatpush1.msra.mxu0 %v2468
    %3927 = vmatprep.mubr.f32.mxu0 %v1188
    %3928 = vmatmul.mubr.f32.gmra.mrb[0].mxu0 %v1187
    %v3929 = vpop.f32.mrb[0].mxu0
    %v3930 = vadd.f32 %v3859, %v3929
    %v3931 = vpop.f32.mrb[0].mxu0
    %v3932 = vadd.f32 %v3861, %v3931
    %3933 = vdwg.mxu0
    %3934 = vmatprep.subr.mxu0 %v2471
    %3935 = vmatpush1.msra.mxu0 %v2470
    %3936 = vmatprep.subr.mxu0 %v2473
    %3937 = vmatpush1.msra.mxu0 %v2472
    %3938 = vmatprep.subr.mxu0 %v2475
    %3939 = vmatpush1.msra.mxu0 %v2474
    %3940 = vmatprep.subr.mxu0 %v2477
    %3941 = vmatpush1.msra.mxu0 %v2476
    %3942 = vmatprep.subr.mxu0 %v2479
    %3943 = vmatpush1.msra.mxu0 %v2478
    %3944 = vmatprep.subr.mxu0 %v2481
    %3945 = vmatpush1.msra.mxu0 %v2480
    %3946 = vmatprep.subr.mxu0 %v2483
    %3947 = vmatpush1.msra.mxu0 %v2482
    %3948 = vmatprep.subr.mxu0 %v2485
    %3949 = vmatpush1.msra.mxu0 %v2484
    %3950 = vmatprep.subr.mxu0 %v2487
    %3951 = vmatpush1.msra.mxu0 %v2486
    %3952 = vmatprep.subr.mxu0 %v2489
    %3953 = vmatpush1.msra.mxu0 %v2488
    %3954 = vmatprep.subr.mxu0 %v2491
    %3955 = vmatpush1.msra.mxu0 %v2490
    %3956 = vmatprep.subr.mxu0 %v2493
    %3957 = vmatpush1.msra.mxu0 %v2492
    %3958 = vmatprep.subr.mxu0 %v2495
    %3959 = vmatpush1.msra.mxu0 %v2494
    %3960 = vmatprep.subr.mxu0 %v2497
    %3961 = vmatpush1.msra.mxu0 %v2496
    %3962 = vmatprep.subr.mxu0 %v2499
    %3963 = vmatpush1.msra.mxu0 %v2498
    %3964 = vmatprep.subr.mxu0 %v2501
    %3965 = vmatpush1.msra.mxu0 %v2500
    %3966 = vmatprep.subr.mxu0 0.0
    %3967 = vmatpush1.msra.mxu0 0.0
    %3968 = vmatprep.subr.mxu0 0.0
    %3969 = vmatpush1.msra.mxu0 0.0
    %3970 = vmatprep.subr.mxu0 0.0
    %3971 = vmatpush1.msra.mxu0 0.0
    %3972 = vmatprep.subr.mxu0 0.0
    %3973 = vmatpush1.msra.mxu0 0.0
    %3974 = vmatprep.subr.mxu0 0.0
    %3975 = vmatpush1.msra.mxu0 0.0
    %3976 = vmatprep.subr.mxu0 0.0
    %3977 = vmatpush1.msra.mxu0 0.0
    %3978 = vmatprep.subr.mxu0 0.0
    %3979 = vmatpush1.msra.mxu0 0.0
    %3980 = vmatprep.subr.mxu0 0.0
    %3981 = vmatpush1.msra.mxu0 0.0
    %3982 = vmatprep.subr.mxu0 0.0
    %3983 = vmatpush1.msra.mxu0 0.0
    %3984 = vmatprep.subr.mxu0 0.0
    %3985 = vmatpush1.msra.mxu0 0.0
    %3986 = vmatprep.subr.mxu0 0.0
    %3987 = vmatpush1.msra.mxu0 0.0
    %3988 = vmatprep.subr.mxu0 0.0
    %3989 = vmatpush1.msra.mxu0 0.0
    %3990 = vmatprep.subr.mxu0 0.0
    %3991 = vmatpush1.msra.mxu0 0.0
    %3992 = vmatprep.subr.mxu0 0.0
    %3993 = vmatpush1.msra.mxu0 0.0
    %3994 = vmatprep.subr.mxu0 0.0
    %3995 = vmatpush1.msra.mxu0 0.0
    %3996 = vmatprep.subr.mxu0 0.0
    %3997 = vmatpush1.msra.mxu0 0.0
    %3998 = vmatprep.mubr.f32.mxu0 0.0
    %3999 = vmatmul.mubr.f32.gmra.mrb[0].mxu0 %v1189
    %v4000 = vpop.f32.mrb[0].mxu0
    %v4001 = vadd.f32 %v3930, %v4000
    %v4002 = vpop.f32.mrb[0].mxu0
    %v4003 = vadd.f32 %v3932, %v4002
    %4004 = vdwg.mxu0
    %v4005 = vld [vmem:[#allocation8] sm:$0xff]
    %v4006 = vld [vmem:[#allocation8 + $0x8] sm:$0xff]
    %v4007 = vld [vmem:[#allocation8 + $0x10] sm:$0xff]
    %v4008 = vld [vmem:[#allocation8 + $0x18] sm:$0xff]
    %v4009 = vld [vmem:[#allocation8 + $0x20] sm:$0xff]
    %v4010 = vld [vmem:[#allocation8 + $0x28] sm:$0xff]
    %v4011 = vld [vmem:[#allocation8 + $0x30] sm:$0xff]
    %v4012 = vld [vmem:[#allocation8 + $0x38] sm:$0xff]
    %v4013 = vld [vmem:[#allocation8 + $0x40] sm:$0xff]
    %v4014 = vld [vmem:[#allocation8 + $0x48] sm:$0xff]
    %v4015 = vld [vmem:[#allocation8 + $0x50] sm:$0xff]
    %v4016 = vld [vmem:[#allocation8 + $0x58] sm:$0xff]
    %v4017 = vld [vmem:[#allocation8 + $0x60] sm:$0xff]
    %v4018 = vld [vmem:[#allocation8 + $0x68] sm:$0xff]
    %v4019 = vld [vmem:[#allocation8 + $0x70] sm:$0xff]
    %v4020 = vld [vmem:[#allocation8 + $0x78] sm:$0xff]
    %v4021 = vld [vmem:[#allocation8 + $0x80] sm:$0xff]
    %v4022 = vld [vmem:[#allocation8 + $0x88] sm:$0xff]
    %v4023 = vld [vmem:[#allocation8 + $0x90] sm:$0xff]
    %v4024 = vld [vmem:[#allocation8 + $0x98] sm:$0xff]
    %v4025 = vld [vmem:[#allocation8 + $0xa0] sm:$0xff]
    %v4026 = vld [vmem:[#allocation8 + $0xa8] sm:$0xff]
    %v4027 = vld [vmem:[#allocation8 + $0xb0] sm:$0xff]
    %v4028 = vld [vmem:[#allocation8 + $0xb8] sm:$0xff]
    %v4029 = vld [vmem:[#allocation8 + $0xc0] sm:$0xff]
    %v4030 = vld [vmem:[#allocation8 + $0xc8] sm:$0xff]
    %v4031 = vld [vmem:[#allocation8 + $0xd0] sm:$0xff]
    %v4032 = vld [vmem:[#allocation8 + $0xd8] sm:$0xff]
    %v4033 = vld [vmem:[#allocation8 + $0xe0] sm:$0xff]
    %v4034 = vld [vmem:[#allocation8 + $0xe8] sm:$0xff]
    %v4035 = vld [vmem:[#allocation8 + $0xf0] sm:$0xff]
    %v4036 = vld [vmem:[#allocation8 + $0xf8] sm:$0xff]
    %v4037 = vld [vmem:[#allocation10] sm:$0x1]
    %v4039 = vlaneseq
    %v4040 = vshrl.u32 %v4039, 7
    %v4041 = vsub.s32 0, %v4040
    %v4042 = vrot.slane %v4037, %v4041
    %4044 = vmatprep.subr.mxu0 0.0
    %4045 = vmatpush1.msra.mxu0 %v4005
    %4046 = vmatprep.subr.mxu0 0.0
    %4047 = vmatpush1.msra.mxu0 %v4006
    %4048 = vmatprep.subr.mxu0 0.0
    %4049 = vmatpush1.msra.mxu0 %v4007
    %4050 = vmatprep.subr.mxu0 0.0
    %4051 = vmatpush1.msra.mxu0 %v4008
    %4052 = vmatprep.subr.mxu0 0.0
    %4053 = vmatpush1.msra.mxu0 %v4009
    %4054 = vmatprep.subr.mxu0 0.0
    %4055 = vmatpush1.msra.mxu0 %v4010
    %4056 = vmatprep.subr.mxu0 0.0
    %4057 = vmatpush1.msra.mxu0 %v4011
    %4058 = vmatprep.subr.mxu0 0.0
    %4059 = vmatpush1.msra.mxu0 %v4012
    %4060 = vmatprep.subr.mxu0 0.0
    %4061 = vmatpush1.msra.mxu0 %v4013
    %4062 = vmatprep.subr.mxu0 0.0
    %4063 = vmatpush1.msra.mxu0 %v4014
    %4064 = vmatprep.subr.mxu0 0.0
    %4065 = vmatpush1.msra.mxu0 %v4015
    %4066 = vmatprep.subr.mxu0 0.0
    %4067 = vmatpush1.msra.mxu0 %v4016
    %4068 = vmatprep.subr.mxu0 0.0
    %4069 = vmatpush1.msra.mxu0 %v4017
    %4070 = vmatprep.subr.mxu0 0.0
    %4071 = vmatpush1.msra.mxu0 %v4018
    %4072 = vmatprep.subr.mxu0 0.0
    %4073 = vmatpush1.msra.mxu0 %v4019
    %4074 = vmatprep.subr.mxu0 0.0
    %4075 = vmatpush1.msra.mxu0 %v4020
    %4076 = vmatprep.subr.mxu0 0.0
    %4077 = vmatpush1.msra.mxu0 %v4021
    %4078 = vmatprep.subr.mxu0 0.0
    %4079 = vmatpush1.msra.mxu0 %v4022
    %4080 = vmatprep.subr.mxu0 0.0
    %4081 = vmatpush1.msra.mxu0 %v4023
    %4082 = vmatprep.subr.mxu0 0.0
    %4083 = vmatpush1.msra.mxu0 %v4024
    %4084 = vmatprep.subr.mxu0 0.0
    %4085 = vmatpush1.msra.mxu0 %v4025
    %4086 = vmatprep.subr.mxu0 0.0
    %4087 = vmatpush1.msra.mxu0 %v4026
    %4088 = vmatprep.subr.mxu0 0.0
    %4089 = vmatpush1.msra.mxu0 %v4027
    %4090 = vmatprep.subr.mxu0 0.0
    %4091 = vmatpush1.msra.mxu0 %v4028
    %4092 = vmatprep.subr.mxu0 0.0
    %4093 = vmatpush1.msra.mxu0 %v4029
    %4094 = vmatprep.subr.mxu0 0.0
    %4095 = vmatpush1.msra.mxu0 %v4030
    %4096 = vmatprep.subr.mxu0 0.0
    %4097 = vmatpush1.msra.mxu0 %v4031
    %4098 = vmatprep.subr.mxu0 0.0
    %4099 = vmatpush1.msra.mxu0 %v4032
    %4100 = vmatprep.subr.mxu0 0.0
    %4101 = vmatpush1.msra.mxu0 %v4033
    %4102 = vmatprep.subr.mxu0 0.0
    %4103 = vmatpush1.msra.mxu0 %v4034
    %4104 = vmatprep.subr.mxu0 0.0
    %4105 = vmatpush1.msra.mxu0 %v4035
    %4106 = vmatprep.subr.mxu0 0.0
    %4107 = vmatpush1.msra.mxu0 %v4036
    %4108 = vmatprep.mubr.f32.mxu0 %v4003
    %4109 = vmatmul.mubr.f32.gmra.mrb[0].mxu0 %v4001
    %v4110 = vpop.f32.mrb[0].mxu0
    %v4111 = vadd.f32 %v4042, %v4110
    %v4112 = vpop.f32.mrb[0].mxu0
    %4113 = vdwg.mxu0
    %v4114 = vsub.f32 0.0, %v4111
    %v4115 = vmul.f32 %v4114, 1.442695
    %v4116 = vpow.pop %v4115
    %v4117 = vadd.f32 %v4116, 1.0
    %v4118 = vrcp.pop %v4117
    %v4119 = vmul.f32 1.0, %v4118
    %4120 = vst [vmem:[#allocation11] sm:$0xff] %v4119
    // Predicated region
    $region42: #{tpu_custom_call.1} parent=1 // pred_check
      _
    $region43: #{tpu_custom_call.1} parent=1 // pred_check_branch
      %4122 = sbr.rel (0) target = $region45
    $region44: #{tpu_custom_call.1} parent=1 // pred_region
      %s4124 = ssub.s32 128, 128
      %4125 = vsyncadd [#allocation4], %s4124
      %s4127 = sshll.u32 [#allocation11], 4
      %s4128 = int_to_ptr.vmem [resolvable:$true] %s4127
      %4130 = dma.vmem_to_hbm [thread:$0]  %s4128, 128, %s5, [#allocation4]
    $region45: #{tpu_custom_call.1} parent=1 // pred_fallthru
      _
    // Predicated region
    $region46: #{tpu_custom_call.1} parent=1 // pred_check
      _
    $region47: #{tpu_custom_call.1} parent=1 // pred_check_branch
      %4132 = sbr.rel (0) target = $region49
    $region48: #{tpu_custom_call.1} parent=1 // pred_region
      %4133 = dma.done [#allocation4], 128
    $region49: #{tpu_custom_call.1} parent=1 // pred_fallthru
      _
    %4134 = vsyncpa [#allocation3], 1
    %4135 = vsyncpa [#allocation6], 1
    %4136 = vsyncpa [#allocation9], 1
    %4137 = vsyncpa [#allocation4], 1

</llo_original>
